<compile_context>
chip_gen: v5e
topology: v5e:2x2
jax: 0.10.0
libtpu: 0.0.40
codegen_flags: <defaults>
</compile_context>

<pallas_src>
import jax
import jax.numpy as jnp
from jax.experimental import pallas as pl
from jax.experimental.pallas import tpu as pltpu

LANE = 128  # padded FC width == last conv channel count (keeps stores lane-dense)


# --------------------------------------------------------------------------------------
# in-kernel helpers (traced inline; all indices are static Python ints)
# --------------------------------------------------------------------------------------
def _im2col(pad_ref, patch_ref, H, W, Cin):
    """pad_ref: (H+2, W+2, Cin) zero-padded input.  patch_ref: (H, W, 9*Cin).

    Folds the 3x3 taps into the lane (contraction) dim with column order (kh, kw, cin),
    matching the (9*Cin, Cout) conv-weight layout produced in init_params.
    """
    for kh in range(3):
        for kw in range(3):
            k = kh * 3 + kw
            patch_ref[:, :, k * Cin:(k + 1) * Cin] = pad_ref[kh:kh + H, kw:kw + W, :]


def _conv_relu_pool(pad_ref, patch_ref, conv_ref, rmax_ref, w_ref, b_ref,
                    next_pad_ref, H, W, Cin):
    """3x3 conv (pad 1) as ONE deep-K matmul + ReLU + 2x2 maxpool.

    conv_ref is a flat (H*W, Cout) scratch; the pooled result is written directly into
    the interior of the next stage's padded scratch.  Requires W % 8 == 0 so the
    (H, W, 9*Cin) -> (H*W, 9*Cin) merge is sublane-tile aligned (relayout-free).
    """
    _im2col(pad_ref, patch_ref, H, W, Cin)
    patches = patch_ref[...].reshape(H * W, 9 * Cin).astype(jnp.bfloat16)
    acc = jnp.dot(patches, w_ref[...], preferred_element_type=jnp.float32)
    conv_ref[...] = jnp.maximum(acc + b_ref[...], 0.0)            # (H*W, Cout)

    # 2x2 max pool, two passes of purely static indexing (no strided / relayout ops):
    #   row pass : image rows 2i / 2i+1 are aligned W-row slabs of conv_ref
    #   col pass : static scalar column indices, stored straight into next_pad interior
    for i in range(H // 2):
        rmax_ref[i] = jnp.maximum(conv_ref[(2 * i) * W:(2 * i + 1) * W, :],
                                  conv_ref[(2 * i + 1) * W:(2 * i + 2) * W, :])
    for j in range(W // 2):
        next_pad_ref[1:H // 2 + 1, 1 + j, :] = jnp.maximum(rmax_ref[:, 2 * j, :],
                                                           rmax_ref[:, 2 * j + 1, :])


def _make_kernel(S, C0, C1, C2, C3, num_classes):
    S1, S2, S3 = S, S // 2, S // 4  # spatial size entering each conv stage

    def kernel(x_ref,
               wc1_ref, bc1_ref, wc2_ref, bc2_ref, wc3_ref, bc3_ref,
               wf1_ref, bf1_ref, wf2_ref, bf2_ref, wf3_ref, bf3_ref,
               out_ref,
               pad1, patch1, conv1, rmax1,
               pad2, patch2, conv2, rmax2,
               pad3, patch3):
        # Zero the padded scratches (borders must be 0 for the pad=1 convolutions).
        pad1[...] = jnp.zeros(pad1.shape, pad1.dtype)
        pad2[...] = jnp.zeros(pad2.shape, pad2.dtype)
        pad3[...] = jnp.zeros(pad3.shape, pad3.dtype)
        pad1[1:S1 + 1, 1:S1 + 1, :] = x_ref[0]                     # (S, S, C0) NHWC

        # ---- stage 1: conv(C0->C1) + ReLU + pool  (16x16 -> 8x8) --------------------
        _conv_relu_pool(pad1, patch1, conv1, rmax1, wc1_ref, bc1_ref, pad2, S1, S1, C0)
        # ---- stage 2: conv(C1->C2) + ReLU + pool  (8x8 -> 4x4) ----------------------
        _conv_relu_pool(pad2, patch2, conv2, rmax2, wc2_ref, bc2_ref, pad3, S2, S2, C1)

        # ---- stage 3: conv(C2->C3) + ReLU + pool  (4x4 -> 2x2) ----------------------
        # S3 = 4 is below the 8-sublane tile, so the (H,W,*)->(H*W,*) merge would not
        # be tile-aligned; do one deep-K dot per image row instead (still K = 9*C2).
        _im2col(pad3, patch3, S3, S3, C2)
        wc3 = wc3_ref[...]
        bc3 = bc3_ref[...]
        rows = []
        for r in range(S3):
            pr = patch3[r].astype(jnp.bfloat16)                    # (4, 9*C2)
            rows.append(jnp.maximum(
                jnp.dot(pr, wc3, preferred_element_type=jnp.float32) + bc3, 0.0))

        # 2x2 pool of the 4x4 map -> four (1, C3) pooled tiles, order q = h*2 + w
        pooled = []
        for i in range(2):
            rm = jnp.maximum(rows[2 * i], rows[2 * i + 1])         # (4, C3)
            for j in range(2):
                pooled.append(jnp.maximum(rm[2 * j:2 * j + 1, :],
                                          rm[2 * j + 1:2 * j + 2, :]))

        # ---- MLP (NCHW flatten folded into wf1) + softmax ---------------------------
        acc = bf1_ref[...]                                         # (1, 128) f32
        for q in range(4):
            acc = acc + jnp.dot(pooled[q].astype(jnp.bfloat16), wf1_ref[q],
                                preferred_element_type=jnp.float32)
        h = jnp.maximum(acc, 0.0)
        h = jnp.maximum(
            jnp.dot(h.astype(jnp.bfloat16), wf2_ref[...],
                    preferred_element_type=jnp.float32) + bf2_ref[...], 0.0)
        logits = jnp.dot(h.astype(jnp.bfloat16), wf3_ref[...],
                         preferred_element_type=jnp.float32) + bf3_ref[...]

        lane = jax.lax.broadcasted_iota(jnp.int32, (1, LANE), 1)
        logits = jnp.where(lane < num_classes, logits, -1e30)      # mask padded classes
        m = jnp.max(logits, axis=-1, keepdims=True)
        e = jnp.exp(logits - m)
        s = jnp.sum(e, axis=-1, keepdims=True)
        r = pl.reciprocal(s, approx=True)                          # EUP slot
        r = r * (2.0 - s * r)                                      # Newton step -> f32 accuracy
        out_ref[0] = (e * r).astype(out_ref.dtype)

    return kernel


# --------------------------------------------------------------------------------------
# wrapper
# --------------------------------------------------------------------------------------
def make_forward(*, input_size=16, input_channels=3,
                 conv_channels=(32, 64, 128), hidden=(100, 100), num_classes=4):
    S = input_size
    C0 = input_channels
    C1, C2, C3 = conv_channels
    S1, S2, S3 = S, S // 2, S // 4
    # This fully-fused kernel is specialized to the small test configuration
    # (final feature map 2x2x128; everything fits VMEM on v5e/v6e/v7x).
    # TODO(synk): for the original 128x128 input, tile the spatial dim across the grid
    # (per-stage pallas_calls with a spatial grid axis) and cap vmem_limit_bytes for
    # v7x's 64 MiB VMEM instead of fusing the whole forward.
    assert S1 % 8 == 0 and S2 % 8 == 0 and S3 == 4
    assert C3 == LANE and max(hidden) <= LANE and num_classes <= LANE

    kernel = _make_kernel(S, C0, C1, C2, C3, num_classes)

    def forward(params, x_nchw):
        (wc1, bc1, wc2, bc2, wc3, bc3,
         wf1, bf1, wf2, bf2, wf3, bf3) = params
        x = jnp.transpose(x_nchw, (0, 2, 3, 1)).astype(jnp.float32)  # NCHW -> NHWC
        N = x.shape[0]

        def full(a):  # whole array resident in VMEM, constant across the batch grid
            return pl.BlockSpec(a.shape, lambda n, _nd=a.ndim: (0,) * _nd)

        grid_spec = pltpu.PrefetchScalarGridSpec(
            num_scalar_prefetch=0,
            grid=(N,),
            in_specs=[
                pl.BlockSpec((1, S1, S1, C0), lambda n: (n, 0, 0, 0)),   # x (NHWC)
                full(wc1), full(bc1), full(wc2), full(bc2), full(wc3), full(bc3),
                full(wf1), full(bf1), full(wf2), full(bf2), full(wf3), full(bf3),
            ],
            out_specs=pl.BlockSpec((1, 1, LANE), lambda n: (n, 0, 0)),   # lane-dense
            scratch_shapes=[
                pltpu.VMEM((S1 + 2, S1 + 2, C0), jnp.float32),   # pad1
                pltpu.VMEM((S1, S1, 9 * C0), jnp.float32),       # patch1
                pltpu.VMEM((S1 * S1, C1), jnp.float32),          # conv1 (flat rows)
                pltpu.VMEM((S1 // 2, S1, C1), jnp.float32),      # rmax1
                pltpu.VMEM((S2 + 2, S2 + 2, C1), jnp.float32),   # pad2
                pltpu.VMEM((S2, S2, 9 * C1), jnp.float32),       # patch2
                pltpu.VMEM((S2 * S2, C2), jnp.float32),          # conv2
                pltpu.VMEM((S2 // 2, S2, C2), jnp.float32),      # rmax2
                pltpu.VMEM((S3 + 2, S3 + 2, C2), jnp.float32),   # pad3
                pltpu.VMEM((S3, S3, 9 * C2), jnp.float32),       # patch3
            ],
        )
        out = pl.pallas_call(
            kernel,
            out_shape=jax.ShapeDtypeStruct((N, 1, LANE), jnp.float32),
            grid_spec=grid_spec,
            compiler_params=pltpu.CompilerParams(
                dimension_semantics=("parallel",)),  # batch across v7x's 2 TensorCores
        )(x, wc1, bc1, wc2, bc2, wc3, bc3, wf1, bf1, wf2, bf2, wf3, bf3)
        return out[:, 0, :num_classes]

    return forward


# --------------------------------------------------------------------------------------
# parameters (self-initialized, already in the layouts the fused kernel expects)
# --------------------------------------------------------------------------------------
def init_params(key, *, input_channels=3, input_size=16,
                conv_channels=(32, 64, 128), hidden=(100, 100), num_classes=4):
    """Conv weights: (9*Cin, Cout) bf16, row order (kh, kw, cin).  From a PyTorch
    Conv2d weight (Cout, Cin, 3, 3) this is  w.transpose(2, 3, 1, 0).reshape(9*Cin, Cout).
    FC1: the NCHW flatten permutation is folded in: shape (4, C3, 128), indexed
    [h*2+w, c, :] == W1^T[c*4 + h*2 + w, :], zero-padded to 128 output lanes.
    FC2/FC3: zero-padded to (128, 128).  Biases stay f32, zero-padded to 128 lanes."""
    C3 = conv_channels[-1]
    s_out = input_size // (2 ** len(conv_channels))        # 2
    flat = C3 * s_out * s_out                               # 512
    h1, h2 = hidden

    params = []
    cin = input_channels
    for cout in conv_channels:
        key, k1, k2 = jax.random.split(key, 3)
        w = jax.random.normal(k1, (3, 3, cin, cout), jnp.float32) * (1.0 / (9 * cin)) ** 0.5
        b = jax.random.normal(k2, (1, cout), jnp.float32) * 0.01
        params += [w.reshape(9 * cin, cout).astype(jnp.bfloat16), b]
        cin = cout

    def fc(k, din, dout):
        k1, k2 = jax.random.split(k)
        w = jax.random.normal(k1, (din, dout), jnp.float32) * (1.0 / din) ** 0.5
        b = jax.random.normal(k2, (1, dout), jnp.float32) * 0.01
        return w, b

    key, kf1, kf2, kf3 = jax.random.split(key, 4)
    w1, b1 = fc(kf1, flat, h1)       # rows indexed by PyTorch flat index c*4 + h*2 + w
    w2, b2 = fc(kf2, h1, h2)
    w3, b3 = fc(kf3, h2, num_classes)

    w1f = (w1.reshape(C3, s_out, s_out, h1)      # [c, h, w, :]
             .transpose(1, 2, 0, 3)              # [h, w, c, :]
             .reshape(s_out * s_out, C3, h1))    # [q = h*2 + w, c, :]
    w1f = jnp.pad(w1f, ((0, 0), (0, 0), (0, LANE - h1))).astype(jnp.bfloat16)
    b1f = jnp.pad(b1, ((0, 0), (0, LANE - h1)))
    w2f = jnp.pad(w2, ((0, LANE - h1), (0, LANE - h2))).astype(jnp.bfloat16)
    b2f = jnp.pad(b2, ((0, 0), (0, LANE - h2)))
    w3f = jnp.pad(w3, ((0, LANE - h2), (0, LANE - num_classes))).astype(jnp.bfloat16)
    b3f = jnp.pad(b3, ((0, 0), (0, LANE - num_classes)))
    params += [w1f, b1f, w2f, b2f, w3f, b3f]
    return tuple(params)


if __name__ == "__main__":
    N, C0, S = 2, 3, 16       # small spatial size instead of the original 128
    NUM_CLASSES = 4           # dataset-dependent in the original; fixed here

    key = jax.random.PRNGKey(0)
    kp, kx = jax.random.split(key)
    params = init_params(kp, input_channels=C0, input_size=S, num_classes=NUM_CLASSES)
    x = jax.random.normal(kx, (N, C0, S, S), jnp.float32)

    forward = jax.jit(make_forward(input_size=S, input_channels=C0,
                                   num_classes=NUM_CLASSES))
    out = jax.block_until_ready(forward(params, x))

    assert out.shape == (N, NUM_CLASSES), out.shape
    assert bool(jnp.all(jnp.isfinite(out)))
    assert bool(jnp.allclose(jnp.sum(out, axis=-1), 1.0, atol=1e-4))
    print("KERNEL_OK")
</pallas_src>

<mosaic_0001>
module attributes {stable_mosaic.version = 11 : i64} {
  func.func @kernel(%arg0: i32, %arg1: memref<1x16x16x3xf32, #tpu.memory_space<vmem>>, %arg2: memref<27x32xbf16, #tpu.memory_space<vmem>>, %arg3: memref<1x32xf32, #tpu.memory_space<vmem>>, %arg4: memref<288x64xbf16, #tpu.memory_space<vmem>>, %arg5: memref<1x64xf32, #tpu.memory_space<vmem>>, %arg6: memref<576x128xbf16, #tpu.memory_space<vmem>>, %arg7: memref<1x128xf32, #tpu.memory_space<vmem>>, %arg8: memref<4x128x128xbf16, #tpu.memory_space<vmem>>, %arg9: memref<1x128xf32, #tpu.memory_space<vmem>>, %arg10: memref<128x128xbf16, #tpu.memory_space<vmem>>, %arg11: memref<1x128xf32, #tpu.memory_space<vmem>>, %arg12: memref<128x128xbf16, #tpu.memory_space<vmem>>, %arg13: memref<1x128xf32, #tpu.memory_space<vmem>>, %arg14: memref<1x1x128xf32, #tpu.memory_space<vmem>>, %arg15: memref<18x18x3xf32, #tpu.memory_space<vmem>>, %arg16: memref<16x16x27xf32, #tpu.memory_space<vmem>>, %arg17: memref<256x32xf32, #tpu.memory_space<vmem>>, %arg18: memref<8x16x32xf32, #tpu.memory_space<vmem>>, %arg19: memref<10x10x32xf32, #tpu.memory_space<vmem>>, %arg20: memref<8x8x288xf32, #tpu.memory_space<vmem>>, %arg21: memref<64x64xf32, #tpu.memory_space<vmem>>, %arg22: memref<4x8x64xf32, #tpu.memory_space<vmem>>, %arg23: memref<6x6x64xf32, #tpu.memory_space<vmem>>, %arg24: memref<4x4x576xf32, #tpu.memory_space<vmem>>) attributes {dimension_semantics = [#tpu.dimension_semantics<parallel>], iteration_bounds = array<i64: 2>, scalar_prefetch = 0 : i64, scratch_operands = 10 : i64, tpu.core_type = #tpu.core_type<tc>, window_params = [{transform_indices = @transform_0, window_bounds = array<i64: 1, 16, 16, 3>}, {pipeline_mode = #tpu.pipeline_mode<synchronous>, transform_indices = @transform_1, window_bounds = array<i64: 27, 32>}, {pipeline_mode = #tpu.pipeline_mode<synchronous>, transform_indices = @transform_2, window_bounds = array<i64: 1, 32>}, {pipeline_mode = #tpu.pipeline_mode<synchronous>, transform_indices = @transform_3, window_bounds = array<i64: 288, 64>}, {pipeline_mode = #tpu.pipeline_mode<synchronous>, transform_indices = @transform_4, window_bounds = array<i64: 1, 64>}, {pipeline_mode = #tpu.pipeline_mode<synchronous>, transform_indices = @transform_5, window_bounds = array<i64: 576, 128>}, {pipeline_mode = #tpu.pipeline_mode<synchronous>, transform_indices = @transform_6, window_bounds = array<i64: 1, 128>}, {pipeline_mode = #tpu.pipeline_mode<synchronous>, transform_indices = @transform_7, window_bounds = array<i64: 4, 128, 128>}, {pipeline_mode = #tpu.pipeline_mode<synchronous>, transform_indices = @transform_8, window_bounds = array<i64: 1, 128>}, {pipeline_mode = #tpu.pipeline_mode<synchronous>, transform_indices = @transform_9, window_bounds = array<i64: 128, 128>}, {pipeline_mode = #tpu.pipeline_mode<synchronous>, transform_indices = @transform_10, window_bounds = array<i64: 1, 128>}, {pipeline_mode = #tpu.pipeline_mode<synchronous>, transform_indices = @transform_11, window_bounds = array<i64: 128, 128>}, {pipeline_mode = #tpu.pipeline_mode<synchronous>, transform_indices = @transform_12, window_bounds = array<i64: 1, 128>}, {transform_indices = @transform_13, window_bounds = array<i64: 1, 1, 128>}]} {
    %cst = arith.constant 0.000000e+00 : f32
    %0 = vector.broadcast %cst : f32 to vector<18x18x3xf32>
    %c0 = arith.constant 0 : index
    %c0_0 = arith.constant 0 : index
    %c0_1 = arith.constant 0 : index
    %1 = vector.load %arg15[%c0, %c0_0, %c0_1] : memref<18x18x3xf32, #tpu.memory_space<vmem>>, vector<18x18x3xf32>
    tpu.vector_store %arg15[%c0, %c0_0, %c0_1], %0 {strides = array<i32>} : memref<18x18x3xf32, #tpu.memory_space<vmem>>, vector<18x18x3xf32>,
    %cst_2 = arith.constant 0.000000e+00 : f32
    %2 = vector.broadcast %cst_2 : f32 to vector<10x10x32xf32>
    %c0_3 = arith.constant 0 : index
    %c0_4 = arith.constant 0 : index
    %c0_5 = arith.constant 0 : index
    %3 = vector.load %arg19[%c0_3, %c0_4, %c0_5] : memref<10x10x32xf32, #tpu.memory_space<vmem>>, vector<10x10x32xf32>
    tpu.vector_store %arg19[%c0_3, %c0_4, %c0_5], %2 {strides = array<i32>} : memref<10x10x32xf32, #tpu.memory_space<vmem>>, vector<10x10x32xf32>,
    %cst_6 = arith.constant 0.000000e+00 : f32
    %4 = vector.broadcast %cst_6 : f32 to vector<6x6x64xf32>
    %c0_7 = arith.constant 0 : index
    %c0_8 = arith.constant 0 : index
    %c0_9 = arith.constant 0 : index
    %5 = vector.load %arg23[%c0_7, %c0_8, %c0_9] : memref<6x6x64xf32, #tpu.memory_space<vmem>>, vector<6x6x64xf32>
    tpu.vector_store %arg23[%c0_7, %c0_8, %c0_9], %4 {strides = array<i32>} : memref<6x6x64xf32, #tpu.memory_space<vmem>>, vector<6x6x64xf32>,
    %c0_10 = arith.constant 0 : index
    %c0_11 = arith.constant 0 : index
    %c0_12 = arith.constant 0 : index
    %c0_13 = arith.constant 0 : index
    %6 = vector.load %arg1[%c0_10, %c0_11, %c0_12, %c0_13] : memref<1x16x16x3xf32, #tpu.memory_space<vmem>>, vector<1x16x16x3xf32>
    %7 = vector.shape_cast %6 : vector<1x16x16x3xf32> to vector<16x16x3xf32>
    %c1 = arith.constant 1 : index
    %c1_14 = arith.constant 1 : index
    %c0_15 = arith.constant 0 : index
    %8 = vector.load %arg15[%c1, %c1_14, %c0_15] : memref<18x18x3xf32, #tpu.memory_space<vmem>>, vector<16x16x3xf32>
    tpu.vector_store %arg15[%c1, %c1_14, %c0_15], %7 {strides = array<i32>} : memref<18x18x3xf32, #tpu.memory_space<vmem>>, vector<16x16x3xf32>,
    %c0_16 = arith.constant 0 : index
    %c0_17 = arith.constant 0 : index
    %c0_18 = arith.constant 0 : index
    %9 = vector.load %arg15[%c0_16, %c0_17, %c0_18] : memref<18x18x3xf32, #tpu.memory_space<vmem>>, vector<16x16x3xf32>
    %c0_19 = arith.constant 0 : index
    %c0_20 = arith.constant 0 : index
    %c0_21 = arith.constant 0 : index
    %10 = vector.load %arg16[%c0_19, %c0_20, %c0_21] : memref<16x16x27xf32, #tpu.memory_space<vmem>>, vector<16x16x3xf32>
    tpu.vector_store %arg16[%c0_19, %c0_20, %c0_21], %9 {strides = array<i32>} : memref<16x16x27xf32, #tpu.memory_space<vmem>>, vector<16x16x3xf32>,
    %c0_22 = arith.constant 0 : index
    %c1_23 = arith.constant 1 : index
    %c0_24 = arith.constant 0 : index
    %11 = vector.load %arg15[%c0_22, %c1_23, %c0_24] : memref<18x18x3xf32, #tpu.memory_space<vmem>>, vector<16x16x3xf32>
    %c0_25 = arith.constant 0 : index
    %c0_26 = arith.constant 0 : index
    %c3 = arith.constant 3 : index
    %12 = vector.load %arg16[%c0_25, %c0_26, %c3] : memref<16x16x27xf32, #tpu.memory_space<vmem>>, vector<16x16x3xf32>
    tpu.vector_store %arg16[%c0_25, %c0_26, %c3], %11 {strides = array<i32>} : memref<16x16x27xf32, #tpu.memory_space<vmem>>, vector<16x16x3xf32>,
    %c0_27 = arith.constant 0 : index
    %c2 = arith.constant 2 : index
    %c0_28 = arith.constant 0 : index
    %13 = vector.load %arg15[%c0_27, %c2, %c0_28] : memref<18x18x3xf32, #tpu.memory_space<vmem>>, vector<16x16x3xf32>
    %c0_29 = arith.constant 0 : index
    %c0_30 = arith.constant 0 : index
    %c6 = arith.constant 6 : index
    %14 = vector.load %arg16[%c0_29, %c0_30, %c6] : memref<16x16x27xf32, #tpu.memory_space<vmem>>, vector<16x16x3xf32>
    tpu.vector_store %arg16[%c0_29, %c0_30, %c6], %13 {strides = array<i32>} : memref<16x16x27xf32, #tpu.memory_space<vmem>>, vector<16x16x3xf32>,
    %c1_31 = arith.constant 1 : index
    %c0_32 = arith.constant 0 : index
    %c0_33 = arith.constant 0 : index
    %15 = vector.load %arg15[%c1_31, %c0_32, %c0_33] : memref<18x18x3xf32, #tpu.memory_space<vmem>>, vector<16x16x3xf32>
    %c0_34 = arith.constant 0 : index
    %c0_35 = arith.constant 0 : index
    %c9 = arith.constant 9 : index
    %16 = vector.load %arg16[%c0_34, %c0_35, %c9] : memref<16x16x27xf32, #tpu.memory_space<vmem>>, vector<16x16x3xf32>
    tpu.vector_store %arg16[%c0_34, %c0_35, %c9], %15 {strides = array<i32>} : memref<16x16x27xf32, #tpu.memory_space<vmem>>, vector<16x16x3xf32>,
    %c1_36 = arith.constant 1 : index
    %c1_37 = arith.constant 1 : index
    %c0_38 = arith.constant 0 : index
    %17 = vector.load %arg15[%c1_36, %c1_37, %c0_38] : memref<18x18x3xf32, #tpu.memory_space<vmem>>, vector<16x16x3xf32>
    %c0_39 = arith.constant 0 : index
    %c0_40 = arith.constant 0 : index
    %c12 = arith.constant 12 : index
    %18 = vector.load %arg16[%c0_39, %c0_40, %c12] : memref<16x16x27xf32, #tpu.memory_space<vmem>>, vector<16x16x3xf32>
    tpu.vector_store %arg16[%c0_39, %c0_40, %c12], %17 {strides = array<i32>} : memref<16x16x27xf32, #tpu.memory_space<vmem>>, vector<16x16x3xf32>,
    %c1_41 = arith.constant 1 : index
    %c2_42 = arith.constant 2 : index
    %c0_43 = arith.constant 0 : index
    %19 = vector.load %arg15[%c1_41, %c2_42, %c0_43] : memref<18x18x3xf32, #tpu.memory_space<vmem>>, vector<16x16x3xf32>
    %c0_44 = arith.constant 0 : index
    %c0_45 = arith.constant 0 : index
    %c15 = arith.constant 15 : index
    %20 = vector.load %arg16[%c0_44, %c0_45, %c15] : memref<16x16x27xf32, #tpu.memory_space<vmem>>, vector<16x16x3xf32>
    tpu.vector_store %arg16[%c0_44, %c0_45, %c15], %19 {strides = array<i32>} : memref<16x16x27xf32, #tpu.memory_space<vmem>>, vector<16x16x3xf32>,
    %c2_46 = arith.constant 2 : index
    %c0_47 = arith.constant 0 : index
    %c0_48 = arith.constant 0 : index
    %21 = vector.load %arg15[%c2_46, %c0_47, %c0_48] : memref<18x18x3xf32, #tpu.memory_space<vmem>>, vector<16x16x3xf32>
    %c0_49 = arith.constant 0 : index
    %c0_50 = arith.constant 0 : index
    %c18 = arith.constant 18 : index
    %22 = vector.load %arg16[%c0_49, %c0_50, %c18] : memref<16x16x27xf32, #tpu.memory_space<vmem>>, vector<16x16x3xf32>
    tpu.vector_store %arg16[%c0_49, %c0_50, %c18], %21 {strides = array<i32>} : memref<16x16x27xf32, #tpu.memory_space<vmem>>, vector<16x16x3xf32>,
    %c2_51 = arith.constant 2 : index
    %c1_52 = arith.constant 1 : index
    %c0_53 = arith.constant 0 : index
    %23 = vector.load %arg15[%c2_51, %c1_52, %c0_53] : memref<18x18x3xf32, #tpu.memory_space<vmem>>, vector<16x16x3xf32>
    %c0_54 = arith.constant 0 : index
    %c0_55 = arith.constant 0 : index
    %c21 = arith.constant 21 : index
    %24 = vector.load %arg16[%c0_54, %c0_55, %c21] : memref<16x16x27xf32, #tpu.memory_space<vmem>>, vector<16x16x3xf32>
    tpu.vector_store %arg16[%c0_54, %c0_55, %c21], %23 {strides = array<i32>} : memref<16x16x27xf32, #tpu.memory_space<vmem>>, vector<16x16x3xf32>,
    %c2_56 = arith.constant 2 : index
    %c2_57 = arith.constant 2 : index
    %c0_58 = arith.constant 0 : index
    %25 = vector.load %arg15[%c2_56, %c2_57, %c0_58] : memref<18x18x3xf32, #tpu.memory_space<vmem>>, vector<16x16x3xf32>
    %c0_59 = arith.constant 0 : index
    %c0_60 = arith.constant 0 : index
    %c24 = arith.constant 24 : index
    %26 = vector.load %arg16[%c0_59, %c0_60, %c24] : memref<16x16x27xf32, #tpu.memory_space<vmem>>, vector<16x16x3xf32>
    tpu.vector_store %arg16[%c0_59, %c0_60, %c24], %25 {strides = array<i32>} : memref<16x16x27xf32, #tpu.memory_space<vmem>>, vector<16x16x3xf32>,
    %c0_61 = arith.constant 0 : index
    %c0_62 = arith.constant 0 : index
    %c0_63 = arith.constant 0 : index
    %27 = vector.load %arg16[%c0_61, %c0_62, %c0_63] : memref<16x16x27xf32, #tpu.memory_space<vmem>>, vector<16x16x27xf32>
    %28 = vector.shape_cast %27 : vector<16x16x27xf32> to vector<256x27xf32>
    %29 = arith.truncf %28 : vector<256x27xf32> to vector<256x27xbf16>
    %c0_64 = arith.constant 0 : index
    %c0_65 = arith.constant 0 : index
    %30 = vector.load %arg2[%c0_64, %c0_65] : memref<27x32xbf16, #tpu.memory_space<vmem>>, vector<27x32xbf16>
    %cst_66 = arith.constant dense<0.000000e+00> : vector<256x32xf32>
    %31 = tpu.matmul %29, %30, %cst_66 {dimension_numbers = #tpu.dot_dimension_numbers<[1], [0], [0], [1], [0, 0, 1, 1], [], []>} : vector<256x27xbf16>, vector<27x32xbf16>, vector<256x32xf32> -> vector<256x32xf32>
    %c0_67 = arith.constant 0 : index
    %c0_68 = arith.constant 0 : index
    %32 = vector.load %arg3[%c0_67, %c0_68] : memref<1x32xf32, #tpu.memory_space<vmem>>, vector<1x32xf32>
    %33 = vector.broadcast %32 : vector<1x32xf32> to vector<256x32xf32>
    %34 = arith.addf %31, %33 : vector<256x32xf32>
    %cst_69 = arith.constant 0.000000e+00 : f32
    %35 = vector.broadcast %cst_69 : f32 to vector<256x32xf32>
    %36 = arith.maximumf %34, %35 : vector<256x32xf32>
    %c0_70 = arith.constant 0 : index
    %c0_71 = arith.constant 0 : index
    %37 = vector.load %arg17[%c0_70, %c0_71] : memref<256x32xf32, #tpu.memory_space<vmem>>, vector<256x32xf32>
    tpu.vector_store %arg17[%c0_70, %c0_71], %36 {strides = array<i32>} : memref<256x32xf32, #tpu.memory_space<vmem>>, vector<256x32xf32>,
    %c0_72 = arith.constant 0 : index
    %c0_73 = arith.constant 0 : index
    %38 = vector.load %arg17[%c0_72, %c0_73] : memref<256x32xf32, #tpu.memory_space<vmem>>, vector<16x32xf32>
    %c16 = arith.constant 16 : index
    %c0_74 = arith.constant 0 : index
    %39 = vector.load %arg17[%c16, %c0_74] : memref<256x32xf32, #tpu.memory_space<vmem>>, vector<16x32xf32>
    %40 = arith.maximumf %38, %39 : vector<16x32xf32>
    %c0_75 = arith.constant 0 : index
    %c0_76 = arith.constant 0 : index
    %c0_77 = arith.constant 0 : index
    %41 = vector.load %arg18[%c0_75, %c0_76, %c0_77] : memref<8x16x32xf32, #tpu.memory_space<vmem>>, vector<1x16x32xf32>
    %42 = vector.shape_cast %41 : vector<1x16x32xf32> to vector<16x32xf32>
    %43 = vector.shape_cast %40 : vector<16x32xf32> to vector<1x16x32xf32>
    tpu.vector_store %arg18[%c0_75, %c0_76, %c0_77], %43 {strides = array<i32>} : memref<8x16x32xf32, #tpu.memory_space<vmem>>, vector<1x16x32xf32>,
    %c32 = arith.constant 32 : index
    %c0_78 = arith.constant 0 : index
    %44 = vector.load %arg17[%c32, %c0_78] : memref<256x32xf32, #tpu.memory_space<vmem>>, vector<16x32xf32>
    %c48 = arith.constant 48 : index
    %c0_79 = arith.constant 0 : index
    %45 = vector.load %arg17[%c48, %c0_79] : memref<256x32xf32, #tpu.memory_space<vmem>>, vector<16x32xf32>
    %46 = arith.maximumf %44, %45 : vector<16x32xf32>
    %c1_80 = arith.constant 1 : index
    %c0_81 = arith.constant 0 : index
    %c0_82 = arith.constant 0 : index
    %47 = vector.load %arg18[%c1_80, %c0_81, %c0_82] : memref<8x16x32xf32, #tpu.memory_space<vmem>>, vector<1x16x32xf32>
    %48 = vector.shape_cast %47 : vector<1x16x32xf32> to vector<16x32xf32>
    %49 = vector.shape_cast %46 : vector<16x32xf32> to vector<1x16x32xf32>
    tpu.vector_store %arg18[%c1_80, %c0_81, %c0_82], %49 {strides = array<i32>} : memref<8x16x32xf32, #tpu.memory_space<vmem>>, vector<1x16x32xf32>,
    %c64 = arith.constant 64 : index
    %c0_83 = arith.constant 0 : index
    %50 = vector.load %arg17[%c64, %c0_83] : memref<256x32xf32, #tpu.memory_space<vmem>>, vector<16x32xf32>
    %c80 = arith.constant 80 : index
    %c0_84 = arith.constant 0 : index
    %51 = vector.load %arg17[%c80, %c0_84] : memref<256x32xf32, #tpu.memory_space<vmem>>, vector<16x32xf32>
    %52 = arith.maximumf %50, %51 : vector<16x32xf32>
    %c2_85 = arith.constant 2 : index
    %c0_86 = arith.constant 0 : index
    %c0_87 = arith.constant 0 : index
    %53 = vector.load %arg18[%c2_85, %c0_86, %c0_87] : memref<8x16x32xf32, #tpu.memory_space<vmem>>, vector<1x16x32xf32>
    %54 = vector.shape_cast %53 : vector<1x16x32xf32> to vector<16x32xf32>
    %55 = vector.shape_cast %52 : vector<16x32xf32> to vector<1x16x32xf32>
    tpu.vector_store %arg18[%c2_85, %c0_86, %c0_87], %55 {strides = array<i32>} : memref<8x16x32xf32, #tpu.memory_space<vmem>>, vector<1x16x32xf32>,
    %c96 = arith.constant 96 : index
    %c0_88 = arith.constant 0 : index
    %56 = vector.load %arg17[%c96, %c0_88] : memref<256x32xf32, #tpu.memory_space<vmem>>, vector<16x32xf32>
    %c112 = arith.constant 112 : index
    %c0_89 = arith.constant 0 : index
    %57 = vector.load %arg17[%c112, %c0_89] : memref<256x32xf32, #tpu.memory_space<vmem>>, vector<16x32xf32>
    %58 = arith.maximumf %56, %57 : vector<16x32xf32>
    %c3_90 = arith.constant 3 : index
    %c0_91 = arith.constant 0 : index
    %c0_92 = arith.constant 0 : index
    %59 = vector.load %arg18[%c3_90, %c0_91, %c0_92] : memref<8x16x32xf32, #tpu.memory_space<vmem>>, vector<1x16x32xf32>
    %60 = vector.shape_cast %59 : vector<1x16x32xf32> to vector<16x32xf32>
    %61 = vector.shape_cast %58 : vector<16x32xf32> to vector<1x16x32xf32>
    tpu.vector_store %arg18[%c3_90, %c0_91, %c0_92], %61 {strides = array<i32>} : memref<8x16x32xf32, #tpu.memory_space<vmem>>, vector<1x16x32xf32>,
    %c128 = arith.constant 128 : index
    %c0_93 = arith.constant 0 : index
    %62 = vector.load %arg17[%c128, %c0_93] : memref<256x32xf32, #tpu.memory_space<vmem>>, vector<16x32xf32>
    %c144 = arith.constant 144 : index
    %c0_94 = arith.constant 0 : index
    %63 = vector.load %arg17[%c144, %c0_94] : memref<256x32xf32, #tpu.memory_space<vmem>>, vector<16x32xf32>
    %64 = arith.maximumf %62, %63 : vector<16x32xf32>
    %c4 = arith.constant 4 : index
    %c0_95 = arith.constant 0 : index
    %c0_96 = arith.constant 0 : index
    %65 = vector.load %arg18[%c4, %c0_95, %c0_96] : memref<8x16x32xf32, #tpu.memory_space<vmem>>, vector<1x16x32xf32>
    %66 = vector.shape_cast %65 : vector<1x16x32xf32> to vector<16x32xf32>
    %67 = vector.shape_cast %64 : vector<16x32xf32> to vector<1x16x32xf32>
    tpu.vector_store %arg18[%c4, %c0_95, %c0_96], %67 {strides = array<i32>} : memref<8x16x32xf32, #tpu.memory_space<vmem>>, vector<1x16x32xf32>,
    %c160 = arith.constant 160 : index
    %c0_97 = arith.constant 0 : index
    %68 = vector.load %arg17[%c160, %c0_97] : memref<256x32xf32, #tpu.memory_space<vmem>>, vector<16x32xf32>
    %c176 = arith.constant 176 : index
    %c0_98 = arith.constant 0 : index
    %69 = vector.load %arg17[%c176, %c0_98] : memref<256x32xf32, #tpu.memory_space<vmem>>, vector<16x32xf32>
    %70 = arith.maximumf %68, %69 : vector<16x32xf32>
    %c5 = arith.constant 5 : index
    %c0_99 = arith.constant 0 : index
    %c0_100 = arith.constant 0 : index
    %71 = vector.load %arg18[%c5, %c0_99, %c0_100] : memref<8x16x32xf32, #tpu.memory_space<vmem>>, vector<1x16x32xf32>
    %72 = vector.shape_cast %71 : vector<1x16x32xf32> to vector<16x32xf32>
    %73 = vector.shape_cast %70 : vector<16x32xf32> to vector<1x16x32xf32>
    tpu.vector_store %arg18[%c5, %c0_99, %c0_100], %73 {strides = array<i32>} : memref<8x16x32xf32, #tpu.memory_space<vmem>>, vector<1x16x32xf32>,
    %c192 = arith.constant 192 : index
    %c0_101 = arith.constant 0 : index
    %74 = vector.load %arg17[%c192, %c0_101] : memref<256x32xf32, #tpu.memory_space<vmem>>, vector<16x32xf32>
    %c208 = arith.constant 208 : index
    %c0_102 = arith.constant 0 : index
    %75 = vector.load %arg17[%c208, %c0_102] : memref<256x32xf32, #tpu.memory_space<vmem>>, vector<16x32xf32>
    %76 = arith.maximumf %74, %75 : vector<16x32xf32>
    %c6_103 = arith.constant 6 : index
    %c0_104 = arith.constant 0 : index
    %c0_105 = arith.constant 0 : index
    %77 = vector.load %arg18[%c6_103, %c0_104, %c0_105] : memref<8x16x32xf32, #tpu.memory_space<vmem>>, vector<1x16x32xf32>
    %78 = vector.shape_cast %77 : vector<1x16x32xf32> to vector<16x32xf32>
    %79 = vector.shape_cast %76 : vector<16x32xf32> to vector<1x16x32xf32>
    tpu.vector_store %arg18[%c6_103, %c0_104, %c0_105], %79 {strides = array<i32>} : memref<8x16x32xf32, #tpu.memory_space<vmem>>, vector<1x16x32xf32>,
    %c224 = arith.constant 224 : index
    %c0_106 = arith.constant 0 : index
    %80 = vector.load %arg17[%c224, %c0_106] : memref<256x32xf32, #tpu.memory_space<vmem>>, vector<16x32xf32>
    %c240 = arith.constant 240 : index
    %c0_107 = arith.constant 0 : index
    %81 = vector.load %arg17[%c240, %c0_107] : memref<256x32xf32, #tpu.memory_space<vmem>>, vector<16x32xf32>
    %82 = arith.maximumf %80, %81 : vector<16x32xf32>
    %c7 = arith.constant 7 : index
    %c0_108 = arith.constant 0 : index
    %c0_109 = arith.constant 0 : index
    %83 = vector.load %arg18[%c7, %c0_108, %c0_109] : memref<8x16x32xf32, #tpu.memory_space<vmem>>, vector<1x16x32xf32>
    %84 = vector.shape_cast %83 : vector<1x16x32xf32> to vector<16x32xf32>
    %85 = vector.shape_cast %82 : vector<16x32xf32> to vector<1x16x32xf32>
    tpu.vector_store %arg18[%c7, %c0_108, %c0_109], %85 {strides = array<i32>} : memref<8x16x32xf32, #tpu.memory_space<vmem>>, vector<1x16x32xf32>,
    %c0_110 = arith.constant 0 : index
    %c0_111 = arith.constant 0 : index
    %c0_112 = arith.constant 0 : index
    %86 = vector.load %arg18[%c0_110, %c0_111, %c0_112] : memref<8x16x32xf32, #tpu.memory_space<vmem>>, vector<8x1x32xf32>
    %87 = vector.shape_cast %86 : vector<8x1x32xf32> to vector<8x32xf32>
    %c0_113 = arith.constant 0 : index
    %c1_114 = arith.constant 1 : index
    %c0_115 = arith.constant 0 : index
    %88 = vector.load %arg18[%c0_113, %c1_114, %c0_115] : memref<8x16x32xf32, #tpu.memory_space<vmem>>, vector<8x1x32xf32>
    %89 = vector.shape_cast %88 : vector<8x1x32xf32> to vector<8x32xf32>
    %90 = arith.maximumf %87, %89 : vector<8x32xf32>
    %c1_116 = arith.constant 1 : index
    %c1_117 = arith.constant 1 : index
    %c0_118 = arith.constant 0 : index
    %91 = vector.load %arg19[%c1_116, %c1_117, %c0_118] : memref<10x10x32xf32, #tpu.memory_space<vmem>>, vector<8x1x32xf32>
    %92 = vector.shape_cast %91 : vector<8x1x32xf32> to vector<8x32xf32>
    %93 = vector.shape_cast %90 : vector<8x32xf32> to vector<8x1x32xf32>
    tpu.vector_store %arg19[%c1_116, %c1_117, %c0_118], %93 {strides = array<i32>} : memref<10x10x32xf32, #tpu.memory_space<vmem>>, vector<8x1x32xf32>,
    %c0_119 = arith.constant 0 : index
    %c2_120 = arith.constant 2 : index
    %c0_121 = arith.constant 0 : index
    %94 = vector.load %arg18[%c0_119, %c2_120, %c0_121] : memref<8x16x32xf32, #tpu.memory_space<vmem>>, vector<8x1x32xf32>
    %95 = vector.shape_cast %94 : vector<8x1x32xf32> to vector<8x32xf32>
    %c0_122 = arith.constant 0 : index
    %c3_123 = arith.constant 3 : index
    %c0_124 = arith.constant 0 : index
    %96 = vector.load %arg18[%c0_122, %c3_123, %c0_124] : memref<8x16x32xf32, #tpu.memory_space<vmem>>, vector<8x1x32xf32>
    %97 = vector.shape_cast %96 : vector<8x1x32xf32> to vector<8x32xf32>
    %98 = arith.maximumf %95, %97 : vector<8x32xf32>
    %c1_125 = arith.constant 1 : index
    %c2_126 = arith.constant 2 : index
    %c0_127 = arith.constant 0 : index
    %99 = vector.load %arg19[%c1_125, %c2_126, %c0_127] : memref<10x10x32xf32, #tpu.memory_space<vmem>>, vector<8x1x32xf32>
    %100 = vector.shape_cast %99 : vector<8x1x32xf32> to vector<8x32xf32>
    %101 = vector.shape_cast %98 : vector<8x32xf32> to vector<8x1x32xf32>
    tpu.vector_store %arg19[%c1_125, %c2_126, %c0_127], %101 {strides = array<i32>} : memref<10x10x32xf32, #tpu.memory_space<vmem>>, vector<8x1x32xf32>,
    %c0_128 = arith.constant 0 : index
    %c4_129 = arith.constant 4 : index
    %c0_130 = arith.constant 0 : index
    %102 = vector.load %arg18[%c0_128, %c4_129, %c0_130] : memref<8x16x32xf32, #tpu.memory_space<vmem>>, vector<8x1x32xf32>
    %103 = vector.shape_cast %102 : vector<8x1x32xf32> to vector<8x32xf32>
    %c0_131 = arith.constant 0 : index
    %c5_132 = arith.constant 5 : index
    %c0_133 = arith.constant 0 : index
    %104 = vector.load %arg18[%c0_131, %c5_132, %c0_133] : memref<8x16x32xf32, #tpu.memory_space<vmem>>, vector<8x1x32xf32>
    %105 = vector.shape_cast %104 : vector<8x1x32xf32> to vector<8x32xf32>
    %106 = arith.maximumf %103, %105 : vector<8x32xf32>
    %c1_134 = arith.constant 1 : index
    %c3_135 = arith.constant 3 : index
    %c0_136 = arith.constant 0 : index
    %107 = vector.load %arg19[%c1_134, %c3_135, %c0_136] : memref<10x10x32xf32, #tpu.memory_space<vmem>>, vector<8x1x32xf32>
    %108 = vector.shape_cast %107 : vector<8x1x32xf32> to vector<8x32xf32>
    %109 = vector.shape_cast %106 : vector<8x32xf32> to vector<8x1x32xf32>
    tpu.vector_store %arg19[%c1_134, %c3_135, %c0_136], %109 {strides = array<i32>} : memref<10x10x32xf32, #tpu.memory_space<vmem>>, vector<8x1x32xf32>,
    %c0_137 = arith.constant 0 : index
    %c6_138 = arith.constant 6 : index
    %c0_139 = arith.constant 0 : index
    %110 = vector.load %arg18[%c0_137, %c6_138, %c0_139] : memref<8x16x32xf32, #tpu.memory_space<vmem>>, vector<8x1x32xf32>
    %111 = vector.shape_cast %110 : vector<8x1x32xf32> to vector<8x32xf32>
    %c0_140 = arith.constant 0 : index
    %c7_141 = arith.constant 7 : index
    %c0_142 = arith.constant 0 : index
    %112 = vector.load %arg18[%c0_140, %c7_141, %c0_142] : memref<8x16x32xf32, #tpu.memory_space<vmem>>, vector<8x1x32xf32>
    %113 = vector.shape_cast %112 : vector<8x1x32xf32> to vector<8x32xf32>
    %114 = arith.maximumf %111, %113 : vector<8x32xf32>
    %c1_143 = arith.constant 1 : index
    %c4_144 = arith.constant 4 : index
    %c0_145 = arith.constant 0 : index
    %115 = vector.load %arg19[%c1_143, %c4_144, %c0_145] : memref<10x10x32xf32, #tpu.memory_space<vmem>>, vector<8x1x32xf32>
    %116 = vector.shape_cast %115 : vector<8x1x32xf32> to vector<8x32xf32>
    %117 = vector.shape_cast %114 : vector<8x32xf32> to vector<8x1x32xf32>
    tpu.vector_store %arg19[%c1_143, %c4_144, %c0_145], %117 {strides = array<i32>} : memref<10x10x32xf32, #tpu.memory_space<vmem>>, vector<8x1x32xf32>,
    %c0_146 = arith.constant 0 : index
    %c8 = arith.constant 8 : index
    %c0_147 = arith.constant 0 : index
    %118 = vector.load %arg18[%c0_146, %c8, %c0_147] : memref<8x16x32xf32, #tpu.memory_space<vmem>>, vector<8x1x32xf32>
    %119 = vector.shape_cast %118 : vector<8x1x32xf32> to vector<8x32xf32>
    %c0_148 = arith.constant 0 : index
    %c9_149 = arith.constant 9 : index
    %c0_150 = arith.constant 0 : index
    %120 = vector.load %arg18[%c0_148, %c9_149, %c0_150] : memref<8x16x32xf32, #tpu.memory_space<vmem>>, vector<8x1x32xf32>
    %121 = vector.shape_cast %120 : vector<8x1x32xf32> to vector<8x32xf32>
    %122 = arith.maximumf %119, %121 : vector<8x32xf32>
    %c1_151 = arith.constant 1 : index
    %c5_152 = arith.constant 5 : index
    %c0_153 = arith.constant 0 : index
    %123 = vector.load %arg19[%c1_151, %c5_152, %c0_153] : memref<10x10x32xf32, #tpu.memory_space<vmem>>, vector<8x1x32xf32>
    %124 = vector.shape_cast %123 : vector<8x1x32xf32> to vector<8x32xf32>
    %125 = vector.shape_cast %122 : vector<8x32xf32> to vector<8x1x32xf32>
    tpu.vector_store %arg19[%c1_151, %c5_152, %c0_153], %125 {strides = array<i32>} : memref<10x10x32xf32, #tpu.memory_space<vmem>>, vector<8x1x32xf32>,
    %c0_154 = arith.constant 0 : index
    %c10 = arith.constant 10 : index
    %c0_155 = arith.constant 0 : index
    %126 = vector.load %arg18[%c0_154, %c10, %c0_155] : memref<8x16x32xf32, #tpu.memory_space<vmem>>, vector<8x1x32xf32>
    %127 = vector.shape_cast %126 : vector<8x1x32xf32> to vector<8x32xf32>
    %c0_156 = arith.constant 0 : index
    %c11 = arith.constant 11 : index
    %c0_157 = arith.constant 0 : index
    %128 = vector.load %arg18[%c0_156, %c11, %c0_157] : memref<8x16x32xf32, #tpu.memory_space<vmem>>, vector<8x1x32xf32>
    %129 = vector.shape_cast %128 : vector<8x1x32xf32> to vector<8x32xf32>
    %130 = arith.maximumf %127, %129 : vector<8x32xf32>
    %c1_158 = arith.constant 1 : index
    %c6_159 = arith.constant 6 : index
    %c0_160 = arith.constant 0 : index
    %131 = vector.load %arg19[%c1_158, %c6_159, %c0_160] : memref<10x10x32xf32, #tpu.memory_space<vmem>>, vector<8x1x32xf32>
    %132 = vector.shape_cast %131 : vector<8x1x32xf32> to vector<8x32xf32>
    %133 = vector.shape_cast %130 : vector<8x32xf32> to vector<8x1x32xf32>
    tpu.vector_store %arg19[%c1_158, %c6_159, %c0_160], %133 {strides = array<i32>} : memref<10x10x32xf32, #tpu.memory_space<vmem>>, vector<8x1x32xf32>,
    %c0_161 = arith.constant 0 : index
    %c12_162 = arith.constant 12 : index
    %c0_163 = arith.constant 0 : index
    %134 = vector.load %arg18[%c0_161, %c12_162, %c0_163] : memref<8x16x32xf32, #tpu.memory_space<vmem>>, vector<8x1x32xf32>
    %135 = vector.shape_cast %134 : vector<8x1x32xf32> to vector<8x32xf32>
    %c0_164 = arith.constant 0 : index
    %c13 = arith.constant 13 : index
    %c0_165 = arith.constant 0 : index
    %136 = vector.load %arg18[%c0_164, %c13, %c0_165] : memref<8x16x32xf32, #tpu.memory_space<vmem>>, vector<8x1x32xf32>
    %137 = vector.shape_cast %136 : vector<8x1x32xf32> to vector<8x32xf32>
    %138 = arith.maximumf %135, %137 : vector<8x32xf32>
    %c1_166 = arith.constant 1 : index
    %c7_167 = arith.constant 7 : index
    %c0_168 = arith.constant 0 : index
    %139 = vector.load %arg19[%c1_166, %c7_167, %c0_168] : memref<10x10x32xf32, #tpu.memory_space<vmem>>, vector<8x1x32xf32>
    %140 = vector.shape_cast %139 : vector<8x1x32xf32> to vector<8x32xf32>
    %141 = vector.shape_cast %138 : vector<8x32xf32> to vector<8x1x32xf32>
    tpu.vector_store %arg19[%c1_166, %c7_167, %c0_168], %141 {strides = array<i32>} : memref<10x10x32xf32, #tpu.memory_space<vmem>>, vector<8x1x32xf32>,
    %c0_169 = arith.constant 0 : index
    %c14 = arith.constant 14 : index
    %c0_170 = arith.constant 0 : index
    %142 = vector.load %arg18[%c0_169, %c14, %c0_170] : memref<8x16x32xf32, #tpu.memory_space<vmem>>, vector<8x1x32xf32>
    %143 = vector.shape_cast %142 : vector<8x1x32xf32> to vector<8x32xf32>
    %c0_171 = arith.constant 0 : index
    %c15_172 = arith.constant 15 : index
    %c0_173 = arith.constant 0 : index
    %144 = vector.load %arg18[%c0_171, %c15_172, %c0_173] : memref<8x16x32xf32, #tpu.memory_space<vmem>>, vector<8x1x32xf32>
    %145 = vector.shape_cast %144 : vector<8x1x32xf32> to vector<8x32xf32>
    %146 = arith.maximumf %143, %145 : vector<8x32xf32>
    %c1_174 = arith.constant 1 : index
    %c8_175 = arith.constant 8 : index
    %c0_176 = arith.constant 0 : index
    %147 = vector.load %arg19[%c1_174, %c8_175, %c0_176] : memref<10x10x32xf32, #tpu.memory_space<vmem>>, vector<8x1x32xf32>
    %148 = vector.shape_cast %147 : vector<8x1x32xf32> to vector<8x32xf32>
    %149 = vector.shape_cast %146 : vector<8x32xf32> to vector<8x1x32xf32>
    tpu.vector_store %arg19[%c1_174, %c8_175, %c0_176], %149 {strides = array<i32>} : memref<10x10x32xf32, #tpu.memory_space<vmem>>, vector<8x1x32xf32>,
    %c0_177 = arith.constant 0 : index
    %c0_178 = arith.constant 0 : index
    %c0_179 = arith.constant 0 : index
    %150 = vector.load %arg19[%c0_177, %c0_178, %c0_179] : memref<10x10x32xf32, #tpu.memory_space<vmem>>, vector<8x8x32xf32>
    %c0_180 = arith.constant 0 : index
    %c0_181 = arith.constant 0 : index
    %c0_182 = arith.constant 0 : index
    %151 = vector.load %arg20[%c0_180, %c0_181, %c0_182] : memref<8x8x288xf32, #tpu.memory_space<vmem>>, vector<8x8x32xf32>
    tpu.vector_store %arg20[%c0_180, %c0_181, %c0_182], %150 {strides = array<i32>} : memref<8x8x288xf32, #tpu.memory_space<vmem>>, vector<8x8x32xf32>,
    %c0_183 = arith.constant 0 : index
    %c1_184 = arith.constant 1 : index
    %c0_185 = arith.constant 0 : index
    %152 = vector.load %arg19[%c0_183, %c1_184, %c0_185] : memref<10x10x32xf32, #tpu.memory_space<vmem>>, vector<8x8x32xf32>
    %c0_186 = arith.constant 0 : index
    %c0_187 = arith.constant 0 : index
    %c32_188 = arith.constant 32 : index
    %153 = vector.load %arg20[%c0_186, %c0_187, %c32_188] : memref<8x8x288xf32, #tpu.memory_space<vmem>>, vector<8x8x32xf32>
    tpu.vector_store %arg20[%c0_186, %c0_187, %c32_188], %152 {strides = array<i32>} : memref<8x8x288xf32, #tpu.memory_space<vmem>>, vector<8x8x32xf32>,
    %c0_189 = arith.constant 0 : index
    %c2_190 = arith.constant 2 : index
    %c0_191 = arith.constant 0 : index
    %154 = vector.load %arg19[%c0_189, %c2_190, %c0_191] : memref<10x10x32xf32, #tpu.memory_space<vmem>>, vector<8x8x32xf32>
    %c0_192 = arith.constant 0 : index
    %c0_193 = arith.constant 0 : index
    %c64_194 = arith.constant 64 : index
    %155 = vector.load %arg20[%c0_192, %c0_193, %c64_194] : memref<8x8x288xf32, #tpu.memory_space<vmem>>, vector<8x8x32xf32>
    tpu.vector_store %arg20[%c0_192, %c0_193, %c64_194], %154 {strides = array<i32>} : memref<8x8x288xf32, #tpu.memory_space<vmem>>, vector<8x8x32xf32>,
    %c1_195 = arith.constant 1 : index
    %c0_196 = arith.constant 0 : index
    %c0_197 = arith.constant 0 : index
    %156 = vector.load %arg19[%c1_195, %c0_196, %c0_197] : memref<10x10x32xf32, #tpu.memory_space<vmem>>, vector<8x8x32xf32>
    %c0_198 = arith.constant 0 : index
    %c0_199 = arith.constant 0 : index
    %c96_200 = arith.constant 96 : index
    %157 = vector.load %arg20[%c0_198, %c0_199, %c96_200] : memref<8x8x288xf32, #tpu.memory_space<vmem>>, vector<8x8x32xf32>
    tpu.vector_store %arg20[%c0_198, %c0_199, %c96_200], %156 {strides = array<i32>} : memref<8x8x288xf32, #tpu.memory_space<vmem>>, vector<8x8x32xf32>,
    %c1_201 = arith.constant 1 : index
    %c1_202 = arith.constant 1 : index
    %c0_203 = arith.constant 0 : index
    %158 = vector.load %arg19[%c1_201, %c1_202, %c0_203] : memref<10x10x32xf32, #tpu.memory_space<vmem>>, vector<8x8x32xf32>
    %c0_204 = arith.constant 0 : index
    %c0_205 = arith.constant 0 : index
    %c128_206 = arith.constant 128 : index
    %159 = vector.load %arg20[%c0_204, %c0_205, %c128_206] : memref<8x8x288xf32, #tpu.memory_space<vmem>>, vector<8x8x32xf32>
    tpu.vector_store %arg20[%c0_204, %c0_205, %c128_206], %158 {strides = array<i32>} : memref<8x8x288xf32, #tpu.memory_space<vmem>>, vector<8x8x32xf32>,
    %c1_207 = arith.constant 1 : index
    %c2_208 = arith.constant 2 : index
    %c0_209 = arith.constant 0 : index
    %160 = vector.load %arg19[%c1_207, %c2_208, %c0_209] : memref<10x10x32xf32, #tpu.memory_space<vmem>>, vector<8x8x32xf32>
    %c0_210 = arith.constant 0 : index
    %c0_211 = arith.constant 0 : index
    %c160_212 = arith.constant 160 : index
    %161 = vector.load %arg20[%c0_210, %c0_211, %c160_212] : memref<8x8x288xf32, #tpu.memory_space<vmem>>, vector<8x8x32xf32>
    tpu.vector_store %arg20[%c0_210, %c0_211, %c160_212], %160 {strides = array<i32>} : memref<8x8x288xf32, #tpu.memory_space<vmem>>, vector<8x8x32xf32>,
    %c2_213 = arith.constant 2 : index
    %c0_214 = arith.constant 0 : index
    %c0_215 = arith.constant 0 : index
    %162 = vector.load %arg19[%c2_213, %c0_214, %c0_215] : memref<10x10x32xf32, #tpu.memory_space<vmem>>, vector<8x8x32xf32>
    %c0_216 = arith.constant 0 : index
    %c0_217 = arith.constant 0 : index
    %c192_218 = arith.constant 192 : index
    %163 = vector.load %arg20[%c0_216, %c0_217, %c192_218] : memref<8x8x288xf32, #tpu.memory_space<vmem>>, vector<8x8x32xf32>
    tpu.vector_store %arg20[%c0_216, %c0_217, %c192_218], %162 {strides = array<i32>} : memref<8x8x288xf32, #tpu.memory_space<vmem>>, vector<8x8x32xf32>,
    %c2_219 = arith.constant 2 : index
    %c1_220 = arith.constant 1 : index
    %c0_221 = arith.constant 0 : index
    %164 = vector.load %arg19[%c2_219, %c1_220, %c0_221] : memref<10x10x32xf32, #tpu.memory_space<vmem>>, vector<8x8x32xf32>
    %c0_222 = arith.constant 0 : index
    %c0_223 = arith.constant 0 : index
    %c224_224 = arith.constant 224 : index
    %165 = vector.load %arg20[%c0_222, %c0_223, %c224_224] : memref<8x8x288xf32, #tpu.memory_space<vmem>>, vector<8x8x32xf32>
    tpu.vector_store %arg20[%c0_222, %c0_223, %c224_224], %164 {strides = array<i32>} : memref<8x8x288xf32, #tpu.memory_space<vmem>>, vector<8x8x32xf32>,
    %c2_225 = arith.constant 2 : index
    %c2_226 = arith.constant 2 : index
    %c0_227 = arith.constant 0 : index
    %166 = vector.load %arg19[%c2_225, %c2_226, %c0_227] : memref<10x10x32xf32, #tpu.memory_space<vmem>>, vector<8x8x32xf32>
    %c0_228 = arith.constant 0 : index
    %c0_229 = arith.constant 0 : index
    %c256 = arith.constant 256 : index
    %167 = vector.load %arg20[%c0_228, %c0_229, %c256] : memref<8x8x288xf32, #tpu.memory_space<vmem>>, vector<8x8x32xf32>
    tpu.vector_store %arg20[%c0_228, %c0_229, %c256], %166 {strides = array<i32>} : memref<8x8x288xf32, #tpu.memory_space<vmem>>, vector<8x8x32xf32>,
    %c0_230 = arith.constant 0 : index
    %c0_231 = arith.constant 0 : index
    %c0_232 = arith.constant 0 : index
    %168 = vector.load %arg20[%c0_230, %c0_231, %c0_232] : memref<8x8x288xf32, #tpu.memory_space<vmem>>, vector<8x8x288xf32>
    %169 = vector.shape_cast %168 : vector<8x8x288xf32> to vector<64x288xf32>
    %170 = arith.truncf %169 : vector<64x288xf32> to vector<64x288xbf16>
    %c0_233 = arith.constant 0 : index
    %c0_234 = arith.constant 0 : index
    %171 = vector.load %arg4[%c0_233, %c0_234] : memref<288x64xbf16, #tpu.memory_space<vmem>>, vector<288x64xbf16>
    %cst_235 = arith.constant dense<0.000000e+00> : vector<64x64xf32>
    %172 = tpu.matmul %170, %171, %cst_235 {dimension_numbers = #tpu.dot_dimension_numbers<[1], [0], [0], [1], [0, 0, 1, 1], [], []>} : vector<64x288xbf16>, vector<288x64xbf16>, vector<64x64xf32> -> vector<64x64xf32>
    %c0_236 = arith.constant 0 : index
    %c0_237 = arith.constant 0 : index
    %173 = vector.load %arg5[%c0_236, %c0_237] : memref<1x64xf32, #tpu.memory_space<vmem>>, vector<1x64xf32>
    %174 = vector.broadcast %173 : vector<1x64xf32> to vector<64x64xf32>
    %175 = arith.addf %172, %174 : vector<64x64xf32>
    %cst_238 = arith.constant 0.000000e+00 : f32
    %176 = vector.broadcast %cst_238 : f32 to vector<64x64xf32>
    %177 = arith.maximumf %175, %176 : vector<64x64xf32>
    %c0_239 = arith.constant 0 : index
    %c0_240 = arith.constant 0 : index
    %178 = vector.load %arg21[%c0_239, %c0_240] : memref<64x64xf32, #tpu.memory_space<vmem>>, vector<64x64xf32>
    tpu.vector_store %arg21[%c0_239, %c0_240], %177 {strides = array<i32>} : memref<64x64xf32, #tpu.memory_space<vmem>>, vector<64x64xf32>,
    %c0_241 = arith.constant 0 : index
    %c0_242 = arith.constant 0 : index
    %179 = vector.load %arg21[%c0_241, %c0_242] : memref<64x64xf32, #tpu.memory_space<vmem>>, vector<8x64xf32>
    %c8_243 = arith.constant 8 : index
    %c0_244 = arith.constant 0 : index
    %180 = vector.load %arg21[%c8_243, %c0_244] : memref<64x64xf32, #tpu.memory_space<vmem>>, vector<8x64xf32>
    %181 = arith.maximumf %179, %180 : vector<8x64xf32>
    %c0_245 = arith.constant 0 : index
    %c0_246 = arith.constant 0 : index
    %c0_247 = arith.constant 0 : index
    %182 = vector.load %arg22[%c0_245, %c0_246, %c0_247] : memref<4x8x64xf32, #tpu.memory_space<vmem>>, vector<1x8x64xf32>
    %183 = vector.shape_cast %182 : vector<1x8x64xf32> to vector<8x64xf32>
    %184 = vector.shape_cast %181 : vector<8x64xf32> to vector<1x8x64xf32>
    tpu.vector_store %arg22[%c0_245, %c0_246, %c0_247], %184 {strides = array<i32>} : memref<4x8x64xf32, #tpu.memory_space<vmem>>, vector<1x8x64xf32>,
    %c16_248 = arith.constant 16 : index
    %c0_249 = arith.constant 0 : index
    %185 = vector.load %arg21[%c16_248, %c0_249] : memref<64x64xf32, #tpu.memory_space<vmem>>, vector<8x64xf32>
    %c24_250 = arith.constant 24 : index
    %c0_251 = arith.constant 0 : index
    %186 = vector.load %arg21[%c24_250, %c0_251] : memref<64x64xf32, #tpu.memory_space<vmem>>, vector<8x64xf32>
    %187 = arith.maximumf %185, %186 : vector<8x64xf32>
    %c1_252 = arith.constant 1 : index
    %c0_253 = arith.constant 0 : index
    %c0_254 = arith.constant 0 : index
    %188 = vector.load %arg22[%c1_252, %c0_253, %c0_254] : memref<4x8x64xf32, #tpu.memory_space<vmem>>, vector<1x8x64xf32>
    %189 = vector.shape_cast %188 : vector<1x8x64xf32> to vector<8x64xf32>
    %190 = vector.shape_cast %187 : vector<8x64xf32> to vector<1x8x64xf32>
    tpu.vector_store %arg22[%c1_252, %c0_253, %c0_254], %190 {strides = array<i32>} : memref<4x8x64xf32, #tpu.memory_space<vmem>>, vector<1x8x64xf32>,
    %c32_255 = arith.constant 32 : index
    %c0_256 = arith.constant 0 : index
    %191 = vector.load %arg21[%c32_255, %c0_256] : memref<64x64xf32, #tpu.memory_space<vmem>>, vector<8x64xf32>
    %c40 = arith.constant 40 : index
    %c0_257 = arith.constant 0 : index
    %192 = vector.load %arg21[%c40, %c0_257] : memref<64x64xf32, #tpu.memory_space<vmem>>, vector<8x64xf32>
    %193 = arith.maximumf %191, %192 : vector<8x64xf32>
    %c2_258 = arith.constant 2 : index
    %c0_259 = arith.constant 0 : index
    %c0_260 = arith.constant 0 : index
    %194 = vector.load %arg22[%c2_258, %c0_259, %c0_260] : memref<4x8x64xf32, #tpu.memory_space<vmem>>, vector<1x8x64xf32>
    %195 = vector.shape_cast %194 : vector<1x8x64xf32> to vector<8x64xf32>
    %196 = vector.shape_cast %193 : vector<8x64xf32> to vector<1x8x64xf32>
    tpu.vector_store %arg22[%c2_258, %c0_259, %c0_260], %196 {strides = array<i32>} : memref<4x8x64xf32, #tpu.memory_space<vmem>>, vector<1x8x64xf32>,
    %c48_261 = arith.constant 48 : index
    %c0_262 = arith.constant 0 : index
    %197 = vector.load %arg21[%c48_261, %c0_262] : memref<64x64xf32, #tpu.memory_space<vmem>>, vector<8x64xf32>
    %c56 = arith.constant 56 : index
    %c0_263 = arith.constant 0 : index
    %198 = vector.load %arg21[%c56, %c0_263] : memref<64x64xf32, #tpu.memory_space<vmem>>, vector<8x64xf32>
    %199 = arith.maximumf %197, %198 : vector<8x64xf32>
    %c3_264 = arith.constant 3 : index
    %c0_265 = arith.constant 0 : index
    %c0_266 = arith.constant 0 : index
    %200 = vector.load %arg22[%c3_264, %c0_265, %c0_266] : memref<4x8x64xf32, #tpu.memory_space<vmem>>, vector<1x8x64xf32>
    %201 = vector.shape_cast %200 : vector<1x8x64xf32> to vector<8x64xf32>
    %202 = vector.shape_cast %199 : vector<8x64xf32> to vector<1x8x64xf32>
    tpu.vector_store %arg22[%c3_264, %c0_265, %c0_266], %202 {strides = array<i32>} : memref<4x8x64xf32, #tpu.memory_space<vmem>>, vector<1x8x64xf32>,
    %c0_267 = arith.constant 0 : index
    %c0_268 = arith.constant 0 : index
    %c0_269 = arith.constant 0 : index
    %203 = vector.load %arg22[%c0_267, %c0_268, %c0_269] : memref<4x8x64xf32, #tpu.memory_space<vmem>>, vector<4x1x64xf32>
    %204 = vector.shape_cast %203 : vector<4x1x64xf32> to vector<4x64xf32>
    %c0_270 = arith.constant 0 : index
    %c1_271 = arith.constant 1 : index
    %c0_272 = arith.constant 0 : index
    %205 = vector.load %arg22[%c0_270, %c1_271, %c0_272] : memref<4x8x64xf32, #tpu.memory_space<vmem>>, vector<4x1x64xf32>
    %206 = vector.shape_cast %205 : vector<4x1x64xf32> to vector<4x64xf32>
    %207 = arith.maximumf %204, %206 : vector<4x64xf32>
    %c1_273 = arith.constant 1 : index
    %c1_274 = arith.constant 1 : index
    %c0_275 = arith.constant 0 : index
    %208 = vector.load %arg23[%c1_273, %c1_274, %c0_275] : memref<6x6x64xf32, #tpu.memory_space<vmem>>, vector<4x1x64xf32>
    %209 = vector.shape_cast %208 : vector<4x1x64xf32> to vector<4x64xf32>
    %210 = vector.shape_cast %207 : vector<4x64xf32> to vector<4x1x64xf32>
    tpu.vector_store %arg23[%c1_273, %c1_274, %c0_275], %210 {strides = array<i32>} : memref<6x6x64xf32, #tpu.memory_space<vmem>>, vector<4x1x64xf32>,
    %c0_276 = arith.constant 0 : index
    %c2_277 = arith.constant 2 : index
    %c0_278 = arith.constant 0 : index
    %211 = vector.load %arg22[%c0_276, %c2_277, %c0_278] : memref<4x8x64xf32, #tpu.memory_space<vmem>>, vector<4x1x64xf32>
    %212 = vector.shape_cast %211 : vector<4x1x64xf32> to vector<4x64xf32>
    %c0_279 = arith.constant 0 : index
    %c3_280 = arith.constant 3 : index
    %c0_281 = arith.constant 0 : index
    %213 = vector.load %arg22[%c0_279, %c3_280, %c0_281] : memref<4x8x64xf32, #tpu.memory_space<vmem>>, vector<4x1x64xf32>
    %214 = vector.shape_cast %213 : vector<4x1x64xf32> to vector<4x64xf32>
    %215 = arith.maximumf %212, %214 : vector<4x64xf32>
    %c1_282 = arith.constant 1 : index
    %c2_283 = arith.constant 2 : index
    %c0_284 = arith.constant 0 : index
    %216 = vector.load %arg23[%c1_282, %c2_283, %c0_284] : memref<6x6x64xf32, #tpu.memory_space<vmem>>, vector<4x1x64xf32>
    %217 = vector.shape_cast %216 : vector<4x1x64xf32> to vector<4x64xf32>
    %218 = vector.shape_cast %215 : vector<4x64xf32> to vector<4x1x64xf32>
    tpu.vector_store %arg23[%c1_282, %c2_283, %c0_284], %218 {strides = array<i32>} : memref<6x6x64xf32, #tpu.memory_space<vmem>>, vector<4x1x64xf32>,
    %c0_285 = arith.constant 0 : index
    %c4_286 = arith.constant 4 : index
    %c0_287 = arith.constant 0 : index
    %219 = vector.load %arg22[%c0_285, %c4_286, %c0_287] : memref<4x8x64xf32, #tpu.memory_space<vmem>>, vector<4x1x64xf32>
    %220 = vector.shape_cast %219 : vector<4x1x64xf32> to vector<4x64xf32>
    %c0_288 = arith.constant 0 : index
    %c5_289 = arith.constant 5 : index
    %c0_290 = arith.constant 0 : index
    %221 = vector.load %arg22[%c0_288, %c5_289, %c0_290] : memref<4x8x64xf32, #tpu.memory_space<vmem>>, vector<4x1x64xf32>
    %222 = vector.shape_cast %221 : vector<4x1x64xf32> to vector<4x64xf32>
    %223 = arith.maximumf %220, %222 : vector<4x64xf32>
    %c1_291 = arith.constant 1 : index
    %c3_292 = arith.constant 3 : index
    %c0_293 = arith.constant 0 : index
    %224 = vector.load %arg23[%c1_291, %c3_292, %c0_293] : memref<6x6x64xf32, #tpu.memory_space<vmem>>, vector<4x1x64xf32>
    %225 = vector.shape_cast %224 : vector<4x1x64xf32> to vector<4x64xf32>
    %226 = vector.shape_cast %223 : vector<4x64xf32> to vector<4x1x64xf32>
    tpu.vector_store %arg23[%c1_291, %c3_292, %c0_293], %226 {strides = array<i32>} : memref<6x6x64xf32, #tpu.memory_space<vmem>>, vector<4x1x64xf32>,
    %c0_294 = arith.constant 0 : index
    %c6_295 = arith.constant 6 : index
    %c0_296 = arith.constant 0 : index
    %227 = vector.load %arg22[%c0_294, %c6_295, %c0_296] : memref<4x8x64xf32, #tpu.memory_space<vmem>>, vector<4x1x64xf32>
    %228 = vector.shape_cast %227 : vector<4x1x64xf32> to vector<4x64xf32>
    %c0_297 = arith.constant 0 : index
    %c7_298 = arith.constant 7 : index
    %c0_299 = arith.constant 0 : index
    %229 = vector.load %arg22[%c0_297, %c7_298, %c0_299] : memref<4x8x64xf32, #tpu.memory_space<vmem>>, vector<4x1x64xf32>
    %230 = vector.shape_cast %229 : vector<4x1x64xf32> to vector<4x64xf32>
    %231 = arith.maximumf %228, %230 : vector<4x64xf32>
    %c1_300 = arith.constant 1 : index
    %c4_301 = arith.constant 4 : index
    %c0_302 = arith.constant 0 : index
    %232 = vector.load %arg23[%c1_300, %c4_301, %c0_302] : memref<6x6x64xf32, #tpu.memory_space<vmem>>, vector<4x1x64xf32>
    %233 = vector.shape_cast %232 : vector<4x1x64xf32> to vector<4x64xf32>
    %234 = vector.shape_cast %231 : vector<4x64xf32> to vector<4x1x64xf32>
    tpu.vector_store %arg23[%c1_300, %c4_301, %c0_302], %234 {strides = array<i32>} : memref<6x6x64xf32, #tpu.memory_space<vmem>>, vector<4x1x64xf32>,
    %c0_303 = arith.constant 0 : index
    %c0_304 = arith.constant 0 : index
    %c0_305 = arith.constant 0 : index
    %235 = vector.load %arg23[%c0_303, %c0_304, %c0_305] : memref<6x6x64xf32, #tpu.memory_space<vmem>>, vector<4x4x64xf32>
    %c0_306 = arith.constant 0 : index
    %c0_307 = arith.constant 0 : index
    %c0_308 = arith.constant 0 : index
    %236 = vector.load %arg24[%c0_306, %c0_307, %c0_308] : memref<4x4x576xf32, #tpu.memory_space<vmem>>, vector<4x4x64xf32>
    tpu.vector_store %arg24[%c0_306, %c0_307, %c0_308], %235 {strides = array<i32>} : memref<4x4x576xf32, #tpu.memory_space<vmem>>, vector<4x4x64xf32>,
    %c0_309 = arith.constant 0 : index
    %c1_310 = arith.constant 1 : index
    %c0_311 = arith.constant 0 : index
    %237 = vector.load %arg23[%c0_309, %c1_310, %c0_311] : memref<6x6x64xf32, #tpu.memory_space<vmem>>, vector<4x4x64xf32>
    %c0_312 = arith.constant 0 : index
    %c0_313 = arith.constant 0 : index
    %c64_314 = arith.constant 64 : index
    %238 = vector.load %arg24[%c0_312, %c0_313, %c64_314] : memref<4x4x576xf32, #tpu.memory_space<vmem>>, vector<4x4x64xf32>
    tpu.vector_store %arg24[%c0_312, %c0_313, %c64_314], %237 {strides = array<i32>} : memref<4x4x576xf32, #tpu.memory_space<vmem>>, vector<4x4x64xf32>,
    %c0_315 = arith.constant 0 : index
    %c2_316 = arith.constant 2 : index
    %c0_317 = arith.constant 0 : index
    %239 = vector.load %arg23[%c0_315, %c2_316, %c0_317] : memref<6x6x64xf32, #tpu.memory_space<vmem>>, vector<4x4x64xf32>
    %c0_318 = arith.constant 0 : index
    %c0_319 = arith.constant 0 : index
    %c128_320 = arith.constant 128 : index
    %240 = vector.load %arg24[%c0_318, %c0_319, %c128_320] : memref<4x4x576xf32, #tpu.memory_space<vmem>>, vector<4x4x64xf32>
    tpu.vector_store %arg24[%c0_318, %c0_319, %c128_320], %239 {strides = array<i32>} : memref<4x4x576xf32, #tpu.memory_space<vmem>>, vector<4x4x64xf32>,
    %c1_321 = arith.constant 1 : index
    %c0_322 = arith.constant 0 : index
    %c0_323 = arith.constant 0 : index
    %241 = vector.load %arg23[%c1_321, %c0_322, %c0_323] : memref<6x6x64xf32, #tpu.memory_space<vmem>>, vector<4x4x64xf32>
    %c0_324 = arith.constant 0 : index
    %c0_325 = arith.constant 0 : index
    %c192_326 = arith.constant 192 : index
    %242 = vector.load %arg24[%c0_324, %c0_325, %c192_326] : memref<4x4x576xf32, #tpu.memory_space<vmem>>, vector<4x4x64xf32>
    tpu.vector_store %arg24[%c0_324, %c0_325, %c192_326], %241 {strides = array<i32>} : memref<4x4x576xf32, #tpu.memory_space<vmem>>, vector<4x4x64xf32>,
    %c1_327 = arith.constant 1 : index
    %c1_328 = arith.constant 1 : index
    %c0_329 = arith.constant 0 : index
    %243 = vector.load %arg23[%c1_327, %c1_328, %c0_329] : memref<6x6x64xf32, #tpu.memory_space<vmem>>, vector<4x4x64xf32>
    %c0_330 = arith.constant 0 : index
    %c0_331 = arith.constant 0 : index
    %c256_332 = arith.constant 256 : index
    %244 = vector.load %arg24[%c0_330, %c0_331, %c256_332] : memref<4x4x576xf32, #tpu.memory_space<vmem>>, vector<4x4x64xf32>
    tpu.vector_store %arg24[%c0_330, %c0_331, %c256_332], %243 {strides = array<i32>} : memref<4x4x576xf32, #tpu.memory_space<vmem>>, vector<4x4x64xf32>,
    %c1_333 = arith.constant 1 : index
    %c2_334 = arith.constant 2 : index
    %c0_335 = arith.constant 0 : index
    %245 = vector.load %arg23[%c1_333, %c2_334, %c0_335] : memref<6x6x64xf32, #tpu.memory_space<vmem>>, vector<4x4x64xf32>
    %c0_336 = arith.constant 0 : index
    %c0_337 = arith.constant 0 : index
    %c320 = arith.constant 320 : index
    %246 = vector.load %arg24[%c0_336, %c0_337, %c320] : memref<4x4x576xf32, #tpu.memory_space<vmem>>, vector<4x4x64xf32>
    tpu.vector_store %arg24[%c0_336, %c0_337, %c320], %245 {strides = array<i32>} : memref<4x4x576xf32, #tpu.memory_space<vmem>>, vector<4x4x64xf32>,
    %c2_338 = arith.constant 2 : index
    %c0_339 = arith.constant 0 : index
    %c0_340 = arith.constant 0 : index
    %247 = vector.load %arg23[%c2_338, %c0_339, %c0_340] : memref<6x6x64xf32, #tpu.memory_space<vmem>>, vector<4x4x64xf32>
    %c0_341 = arith.constant 0 : index
    %c0_342 = arith.constant 0 : index
    %c384 = arith.constant 384 : index
    %248 = vector.load %arg24[%c0_341, %c0_342, %c384] : memref<4x4x576xf32, #tpu.memory_space<vmem>>, vector<4x4x64xf32>
    tpu.vector_store %arg24[%c0_341, %c0_342, %c384], %247 {strides = array<i32>} : memref<4x4x576xf32, #tpu.memory_space<vmem>>, vector<4x4x64xf32>,
    %c2_343 = arith.constant 2 : index
    %c1_344 = arith.constant 1 : index
    %c0_345 = arith.constant 0 : index
    %249 = vector.load %arg23[%c2_343, %c1_344, %c0_345] : memref<6x6x64xf32, #tpu.memory_space<vmem>>, vector<4x4x64xf32>
    %c0_346 = arith.constant 0 : index
    %c0_347 = arith.constant 0 : index
    %c448 = arith.constant 448 : index
    %250 = vector.load %arg24[%c0_346, %c0_347, %c448] : memref<4x4x576xf32, #tpu.memory_space<vmem>>, vector<4x4x64xf32>
    tpu.vector_store %arg24[%c0_346, %c0_347, %c448], %249 {strides = array<i32>} : memref<4x4x576xf32, #tpu.memory_space<vmem>>, vector<4x4x64xf32>,
    %c2_348 = arith.constant 2 : index
    %c2_349 = arith.constant 2 : index
    %c0_350 = arith.constant 0 : index
    %251 = vector.load %arg23[%c2_348, %c2_349, %c0_350] : memref<6x6x64xf32, #tpu.memory_space<vmem>>, vector<4x4x64xf32>
    %c0_351 = arith.constant 0 : index
    %c0_352 = arith.constant 0 : index
    %c512 = arith.constant 512 : index
    %252 = vector.load %arg24[%c0_351, %c0_352, %c512] : memref<4x4x576xf32, #tpu.memory_space<vmem>>, vector<4x4x64xf32>
    tpu.vector_store %arg24[%c0_351, %c0_352, %c512], %251 {strides = array<i32>} : memref<4x4x576xf32, #tpu.memory_space<vmem>>, vector<4x4x64xf32>,
    %c0_353 = arith.constant 0 : index
    %c0_354 = arith.constant 0 : index
    %253 = vector.load %arg6[%c0_353, %c0_354] : memref<576x128xbf16, #tpu.memory_space<vmem>>, vector<576x128xbf16>
    %c0_355 = arith.constant 0 : index
    %c0_356 = arith.constant 0 : index
    %254 = vector.load %arg7[%c0_355, %c0_356] : memref<1x128xf32, #tpu.memory_space<vmem>>, vector<1x128xf32>
    %c0_357 = arith.constant 0 : index
    %c0_358 = arith.constant 0 : index
    %c0_359 = arith.constant 0 : index
    %255 = vector.load %arg24[%c0_357, %c0_358, %c0_359] : memref<4x4x576xf32, #tpu.memory_space<vmem>>, vector<1x4x576xf32>
    %256 = vector.shape_cast %255 : vector<1x4x576xf32> to vector<4x576xf32>
    %257 = arith.truncf %256 : vector<4x576xf32> to vector<4x576xbf16>
    %cst_360 = arith.constant dense<0.000000e+00> : vector<4x128xf32>
    %258 = tpu.matmul %257, %253, %cst_360 {dimension_numbers = #tpu.dot_dimension_numbers<[1], [0], [0], [1], [0, 0, 1, 1], [], []>} : vector<4x576xbf16>, vector<576x128xbf16>, vector<4x128xf32> -> vector<4x128xf32>
    %259 = vector.broadcast %254 : vector<1x128xf32> to vector<4x128xf32>
    %260 = arith.addf %258, %259 : vector<4x128xf32>
    %cst_361 = arith.constant 0.000000e+00 : f32
    %261 = vector.broadcast %cst_361 : f32 to vector<4x128xf32>
    %262 = arith.maximumf %260, %261 : vector<4x128xf32>
    %c1_362 = arith.constant 1 : index
    %c0_363 = arith.constant 0 : index
    %c0_364 = arith.constant 0 : index
    %263 = vector.load %arg24[%c1_362, %c0_363, %c0_364] : memref<4x4x576xf32, #tpu.memory_space<vmem>>, vector<1x4x576xf32>
    %264 = vector.shape_cast %263 : vector<1x4x576xf32> to vector<4x576xf32>
    %265 = arith.truncf %264 : vector<4x576xf32> to vector<4x576xbf16>
    %cst_365 = arith.constant dense<0.000000e+00> : vector<4x128xf32>
    %266 = tpu.matmul %265, %253, %cst_365 {dimension_numbers = #tpu.dot_dimension_numbers<[1], [0], [0], [1], [0, 0, 1, 1], [], []>} : vector<4x576xbf16>, vector<576x128xbf16>, vector<4x128xf32> -> vector<4x128xf32>
    %267 = vector.broadcast %254 : vector<1x128xf32> to vector<4x128xf32>
    %268 = arith.addf %266, %267 : vector<4x128xf32>
    %cst_366 = arith.constant 0.000000e+00 : f32
    %269 = vector.broadcast %cst_366 : f32 to vector<4x128xf32>
    %270 = arith.maximumf %268, %269 : vector<4x128xf32>
    %c2_367 = arith.constant 2 : index
    %c0_368 = arith.constant 0 : index
    %c0_369 = arith.constant 0 : index
    %271 = vector.load %arg24[%c2_367, %c0_368, %c0_369] : memref<4x4x576xf32, #tpu.memory_space<vmem>>, vector<1x4x576xf32>
    %272 = vector.shape_cast %271 : vector<1x4x576xf32> to vector<4x576xf32>
    %273 = arith.truncf %272 : vector<4x576xf32> to vector<4x576xbf16>
    %cst_370 = arith.constant dense<0.000000e+00> : vector<4x128xf32>
    %274 = tpu.matmul %273, %253, %cst_370 {dimension_numbers = #tpu.dot_dimension_numbers<[1], [0], [0], [1], [0, 0, 1, 1], [], []>} : vector<4x576xbf16>, vector<576x128xbf16>, vector<4x128xf32> -> vector<4x128xf32>
    %275 = vector.broadcast %254 : vector<1x128xf32> to vector<4x128xf32>
    %276 = arith.addf %274, %275 : vector<4x128xf32>
    %cst_371 = arith.constant 0.000000e+00 : f32
    %277 = vector.broadcast %cst_371 : f32 to vector<4x128xf32>
    %278 = arith.maximumf %276, %277 : vector<4x128xf32>
    %c3_372 = arith.constant 3 : index
    %c0_373 = arith.constant 0 : index
    %c0_374 = arith.constant 0 : index
    %279 = vector.load %arg24[%c3_372, %c0_373, %c0_374] : memref<4x4x576xf32, #tpu.memory_space<vmem>>, vector<1x4x576xf32>
    %280 = vector.shape_cast %279 : vector<1x4x576xf32> to vector<4x576xf32>
    %281 = arith.truncf %280 : vector<4x576xf32> to vector<4x576xbf16>
    %cst_375 = arith.constant dense<0.000000e+00> : vector<4x128xf32>
    %282 = tpu.matmul %281, %253, %cst_375 {dimension_numbers = #tpu.dot_dimension_numbers<[1], [0], [0], [1], [0, 0, 1, 1], [], []>} : vector<4x576xbf16>, vector<576x128xbf16>, vector<4x128xf32> -> vector<4x128xf32>
    %283 = vector.broadcast %254 : vector<1x128xf32> to vector<4x128xf32>
    %284 = arith.addf %282, %283 : vector<4x128xf32>
    %cst_376 = arith.constant 0.000000e+00 : f32
    %285 = vector.broadcast %cst_376 : f32 to vector<4x128xf32>
    %286 = arith.maximumf %284, %285 : vector<4x128xf32>
    %287 = arith.maximumf %262, %270 : vector<4x128xf32>
    %288 = vector.extract_strided_slice %287 {offsets = [0, 0], sizes = [1, 128], strides = [1, 1]} : vector<4x128xf32> to vector<1x128xf32>
    %289 = vector.extract_strided_slice %287 {offsets = [1, 0], sizes = [1, 128], strides = [1, 1]} : vector<4x128xf32> to vector<1x128xf32>
    %290 = arith.maximumf %288, %289 : vector<1x128xf32>
    %291 = vector.extract_strided_slice %287 {offsets = [2, 0], sizes = [1, 128], strides = [1, 1]} : vector<4x128xf32> to vector<1x128xf32>
    %292 = vector.extract_strided_slice %287 {offsets = [3, 0], sizes = [1, 128], strides = [1, 1]} : vector<4x128xf32> to vector<1x128xf32>
    %293 = arith.maximumf %291, %292 : vector<1x128xf32>
    %294 = arith.maximumf %278, %286 : vector<4x128xf32>
    %295 = vector.extract_strided_slice %294 {offsets = [0, 0], sizes = [1, 128], strides = [1, 1]} : vector<4x128xf32> to vector<1x128xf32>
    %296 = vector.extract_strided_slice %294 {offsets = [1, 0], sizes = [1, 128], strides = [1, 1]} : vector<4x128xf32> to vector<1x128xf32>
    %297 = arith.maximumf %295, %296 : vector<1x128xf32>
    %298 = vector.extract_strided_slice %294 {offsets = [2, 0], sizes = [1, 128], strides = [1, 1]} : vector<4x128xf32> to vector<1x128xf32>
    %299 = vector.extract_strided_slice %294 {offsets = [3, 0], sizes = [1, 128], strides = [1, 1]} : vector<4x128xf32> to vector<1x128xf32>
    %300 = arith.maximumf %298, %299 : vector<1x128xf32>
    %c0_377 = arith.constant 0 : index
    %c0_378 = arith.constant 0 : index
    %301 = vector.load %arg9[%c0_377, %c0_378] : memref<1x128xf32, #tpu.memory_space<vmem>>, vector<1x128xf32>
    %302 = arith.truncf %290 : vector<1x128xf32> to vector<1x128xbf16>
    %c0_379 = arith.constant 0 : index
    %c0_380 = arith.constant 0 : index
    %c0_381 = arith.constant 0 : index
    %303 = vector.load %arg8[%c0_379, %c0_380, %c0_381] : memref<4x128x128xbf16, #tpu.memory_space<vmem>>, vector<1x128x128xbf16>
    %304 = vector.shape_cast %303 : vector<1x128x128xbf16> to vector<128x128xbf16>
    %cst_382 = arith.constant dense<0.000000e+00> : vector<1x128xf32>
    %305 = tpu.matmul %302, %304, %cst_382 {dimension_numbers = #tpu.dot_dimension_numbers<[1], [0], [0], [1], [0, 0, 1, 1], [], []>} : vector<1x128xbf16>, vector<128x128xbf16>, vector<1x128xf32> -> vector<1x128xf32>
    %306 = arith.addf %301, %305 : vector<1x128xf32>
    %307 = arith.truncf %293 : vector<1x128xf32> to vector<1x128xbf16>
    %c1_383 = arith.constant 1 : index
    %c0_384 = arith.constant 0 : index
    %c0_385 = arith.constant 0 : index
    %308 = vector.load %arg8[%c1_383, %c0_384, %c0_385] : memref<4x128x128xbf16, #tpu.memory_space<vmem>>, vector<1x128x128xbf16>
    %309 = vector.shape_cast %308 : vector<1x128x128xbf16> to vector<128x128xbf16>
    %cst_386 = arith.constant dense<0.000000e+00> : vector<1x128xf32>
    %310 = tpu.matmul %307, %309, %cst_386 {dimension_numbers = #tpu.dot_dimension_numbers<[1], [0], [0], [1], [0, 0, 1, 1], [], []>} : vector<1x128xbf16>, vector<128x128xbf16>, vector<1x128xf32> -> vector<1x128xf32>
    %311 = arith.addf %306, %310 : vector<1x128xf32>
    %312 = arith.truncf %297 : vector<1x128xf32> to vector<1x128xbf16>
    %c2_387 = arith.constant 2 : index
    %c0_388 = arith.constant 0 : index
    %c0_389 = arith.constant 0 : index
    %313 = vector.load %arg8[%c2_387, %c0_388, %c0_389] : memref<4x128x128xbf16, #tpu.memory_space<vmem>>, vector<1x128x128xbf16>
    %314 = vector.shape_cast %313 : vector<1x128x128xbf16> to vector<128x128xbf16>
    %cst_390 = arith.constant dense<0.000000e+00> : vector<1x128xf32>
    %315 = tpu.matmul %312, %314, %cst_390 {dimension_numbers = #tpu.dot_dimension_numbers<[1], [0], [0], [1], [0, 0, 1, 1], [], []>} : vector<1x128xbf16>, vector<128x128xbf16>, vector<1x128xf32> -> vector<1x128xf32>
    %316 = arith.addf %311, %315 : vector<1x128xf32>
    %317 = arith.truncf %300 : vector<1x128xf32> to vector<1x128xbf16>
    %c3_391 = arith.constant 3 : index
    %c0_392 = arith.constant 0 : index
    %c0_393 = arith.constant 0 : index
    %318 = vector.load %arg8[%c3_391, %c0_392, %c0_393] : memref<4x128x128xbf16, #tpu.memory_space<vmem>>, vector<1x128x128xbf16>
    %319 = vector.shape_cast %318 : vector<1x128x128xbf16> to vector<128x128xbf16>
    %cst_394 = arith.constant dense<0.000000e+00> : vector<1x128xf32>
    %320 = tpu.matmul %317, %319, %cst_394 {dimension_numbers = #tpu.dot_dimension_numbers<[1], [0], [0], [1], [0, 0, 1, 1], [], []>} : vector<1x128xbf16>, vector<128x128xbf16>, vector<1x128xf32> -> vector<1x128xf32>
    %321 = arith.addf %316, %320 : vector<1x128xf32>
    %cst_395 = arith.constant 0.000000e+00 : f32
    %322 = vector.broadcast %cst_395 : f32 to vector<1x128xf32>
    %323 = arith.maximumf %321, %322 : vector<1x128xf32>
    %324 = arith.truncf %323 : vector<1x128xf32> to vector<1x128xbf16>
    %c0_396 = arith.constant 0 : index
    %c0_397 = arith.constant 0 : index
    %325 = vector.load %arg10[%c0_396, %c0_397] : memref<128x128xbf16, #tpu.memory_space<vmem>>, vector<128x128xbf16>
    %cst_398 = arith.constant dense<0.000000e+00> : vector<1x128xf32>
    %326 = tpu.matmul %324, %325, %cst_398 {dimension_numbers = #tpu.dot_dimension_numbers<[1], [0], [0], [1], [0, 0, 1, 1], [], []>} : vector<1x128xbf16>, vector<128x128xbf16>, vector<1x128xf32> -> vector<1x128xf32>
    %c0_399 = arith.constant 0 : index
    %c0_400 = arith.constant 0 : index
    %327 = vector.load %arg11[%c0_399, %c0_400] : memref<1x128xf32, #tpu.memory_space<vmem>>, vector<1x128xf32>
    %328 = arith.addf %326, %327 : vector<1x128xf32>
    %cst_401 = arith.constant 0.000000e+00 : f32
    %329 = vector.broadcast %cst_401 : f32 to vector<1x128xf32>
    %330 = arith.maximumf %328, %329 : vector<1x128xf32>
    %331 = arith.truncf %330 : vector<1x128xf32> to vector<1x128xbf16>
    %c0_402 = arith.constant 0 : index
    %c0_403 = arith.constant 0 : index
    %332 = vector.load %arg12[%c0_402, %c0_403] : memref<128x128xbf16, #tpu.memory_space<vmem>>, vector<128x128xbf16>
    %cst_404 = arith.constant dense<0.000000e+00> : vector<1x128xf32>
    %333 = tpu.matmul %331, %332, %cst_404 {dimension_numbers = #tpu.dot_dimension_numbers<[1], [0], [0], [1], [0, 0, 1, 1], [], []>} : vector<1x128xbf16>, vector<128x128xbf16>, vector<1x128xf32> -> vector<1x128xf32>
    %c0_405 = arith.constant 0 : index
    %c0_406 = arith.constant 0 : index
    %334 = vector.load %arg13[%c0_405, %c0_406] : memref<1x128xf32, #tpu.memory_space<vmem>>, vector<1x128xf32>
    %335 = arith.addf %333, %334 : vector<1x128xf32>
    %336 = tpu.iota {dimensions = array<i32: 1>} : vector<1x128xi32>
    %c4_i32 = arith.constant 4 : i32
    %337 = vector.broadcast %c4_i32 : i32 to vector<1x128xi32>
    %338 = arith.cmpi slt, %336, %337 : vector<1x128xi32>
    %cst_407 = arith.constant -1.000000e+30 : f32
    %339 = vector.broadcast %cst_407 : f32 to vector<1x128xf32>
    %340 = arith.select %338, %335, %339 : vector<1x128xi1>, vector<1x128xf32>
    %cst_408 = arith.constant dense<0xFF800000> : vector<1xf32>
    %341 = vector.multi_reduction <maximumf>, %340, %cst_408 [1] : vector<1x128xf32> to vector<1xf32>
    %342 = vector.shape_cast %341 : vector<1xf32> to vector<1x1xf32>
    %343 = vector.broadcast %342 : vector<1x1xf32> to vector<1x128xf32>
    %344 = arith.subf %340, %343 : vector<1x128xf32>
    %345 = math.exp %344 : vector<1x128xf32>
    %cst_409 = arith.constant dense<0.000000e+00> : vector<1xf32>
    %346 = vector.multi_reduction <add>, %345, %cst_409 [1] : vector<1x128xf32> to vector<1xf32>
    %347 = vector.shape_cast %346 : vector<1xf32> to vector<1x1xf32>
    %348 = tpu.reciprocal %347 {approx = true} : vector<1x1xf32> -> vector<1x1xf32>
    %349 = arith.mulf %347, %348 : vector<1x1xf32>
    %cst_410 = arith.constant 2.000000e+00 : f32
    %350 = vector.broadcast %cst_410 : f32 to vector<1x1xf32>
    %351 = arith.subf %350, %349 : vector<1x1xf32>
    %352 = arith.mulf %348, %351 : vector<1x1xf32>
    %353 = vector.broadcast %352 : vector<1x1xf32> to vector<1x128xf32>
    %354 = arith.mulf %345, %353 : vector<1x128xf32>
    %c0_411 = arith.constant 0 : index
    %c0_412 = arith.constant 0 : index
    %c0_413 = arith.constant 0 : index
    %355 = vector.load %arg14[%c0_411, %c0_412, %c0_413] : memref<1x1x128xf32, #tpu.memory_space<vmem>>, vector<1x1x128xf32>
    %356 = vector.shape_cast %355 : vector<1x1x128xf32> to vector<1x128xf32>
    %357 = vector.shape_cast %354 : vector<1x128xf32> to vector<1x1x128xf32>
    tpu.vector_store %arg14[%c0_411, %c0_412, %c0_413], %357 {strides = array<i32>} : memref<1x1x128xf32, #tpu.memory_space<vmem>>, vector<1x1x128xf32>,
    return
  }
  func.func @transform_0(%arg0: i32) -> (i32, i32, i32, i32) {
    %c0_i32 = arith.constant 0 : i32
    %c0_i32_0 = arith.constant 0 : i32
    %c0_i32_1 = arith.constant 0 : i32
    %c0_i32_2 = arith.constant 0 : i32
    return %arg0, %c0_i32, %c0_i32_0, %c0_i32_1 : i32, i32, i32, i32
  }
  func.func @transform_1(%arg0: i32) -> (i32, i32) {
    %c0_i32 = arith.constant 0 : i32
    %c0_i32_0 = arith.constant 0 : i32
    %c0_i32_1 = arith.constant 0 : i32
    return %c0_i32, %c0_i32_0 : i32, i32
  }
  func.func @transform_2(%arg0: i32) -> (i32, i32) {
    %c0_i32 = arith.constant 0 : i32
    %c0_i32_0 = arith.constant 0 : i32
    %c0_i32_1 = arith.constant 0 : i32
    return %c0_i32, %c0_i32_0 : i32, i32
  }
  func.func @transform_3(%arg0: i32) -> (i32, i32) {
    %c0_i32 = arith.constant 0 : i32
    %c0_i32_0 = arith.constant 0 : i32
    %c0_i32_1 = arith.constant 0 : i32
    return %c0_i32, %c0_i32_0 : i32, i32
  }
  func.func @transform_4(%arg0: i32) -> (i32, i32) {
    %c0_i32 = arith.constant 0 : i32
    %c0_i32_0 = arith.constant 0 : i32
    %c0_i32_1 = arith.constant 0 : i32
    return %c0_i32, %c0_i32_0 : i32, i32
  }
  func.func @transform_5(%arg0: i32) -> (i32, i32) {
    %c0_i32 = arith.constant 0 : i32
    %c0_i32_0 = arith.constant 0 : i32
    %c0_i32_1 = arith.constant 0 : i32
    return %c0_i32, %c0_i32_0 : i32, i32
  }
  func.func @transform_6(%arg0: i32) -> (i32, i32) {
    %c0_i32 = arith.constant 0 : i32
    %c0_i32_0 = arith.constant 0 : i32
    %c0_i32_1 = arith.constant 0 : i32
    return %c0_i32, %c0_i32_0 : i32, i32
  }
  func.func @transform_7(%arg0: i32) -> (i32, i32, i32) {
    %c0_i32 = arith.constant 0 : i32
    %c0_i32_0 = arith.constant 0 : i32
    %c0_i32_1 = arith.constant 0 : i32
    %c0_i32_2 = arith.constant 0 : i32
    return %c0_i32, %c0_i32_0, %c0_i32_1 : i32, i32, i32
  }
  func.func @transform_8(%arg0: i32) -> (i32, i32) {
    %c0_i32 = arith.constant 0 : i32
    %c0_i32_0 = arith.constant 0 : i32
    %c0_i32_1 = arith.constant 0 : i32
    return %c0_i32, %c0_i32_0 : i32, i32
  }
  func.func @transform_9(%arg0: i32) -> (i32, i32) {
    %c0_i32 = arith.constant 0 : i32
    %c0_i32_0 = arith.constant 0 : i32
    %c0_i32_1 = arith.constant 0 : i32
    return %c0_i32, %c0_i32_0 : i32, i32
  }
  func.func @transform_10(%arg0: i32) -> (i32, i32) {
    %c0_i32 = arith.constant 0 : i32
    %c0_i32_0 = arith.constant 0 : i32
    %c0_i32_1 = arith.constant 0 : i32
    return %c0_i32, %c0_i32_0 : i32, i32
  }
  func.func @transform_11(%arg0: i32) -> (i32, i32) {
    %c0_i32 = arith.constant 0 : i32
    %c0_i32_0 = arith.constant 0 : i32
    %c0_i32_1 = arith.constant 0 : i32
    return %c0_i32, %c0_i32_0 : i32, i32
  }
  func.func @transform_12(%arg0: i32) -> (i32, i32) {
    %c0_i32 = arith.constant 0 : i32
    %c0_i32_0 = arith.constant 0 : i32
    %c0_i32_1 = arith.constant 0 : i32
    return %c0_i32, %c0_i32_0 : i32, i32
  }
  func.func @transform_13(%arg0: i32) -> (i32, i32, i32) {
    %c0_i32 = arith.constant 0 : i32
    %c0_i32_0 = arith.constant 0 : i32
    %c0_i32_1 = arith.constant 0 : i32
    return %arg0, %c0_i32, %c0_i32_0 : i32, i32, i32
  }
}

</mosaic_0001>

<llo_original>
// kernel: forward.1
$region0: #{forward.1}
  #allocation0 [shape = 'u32[]', space=smem, size = 0x4, offset = 0x4, fixed_abs, tag = 'smem constant byte address 0x4 - core index']
  #allocation1 [shape = 'u32[72,128]{1,0:T(1,128)}', space=vmem, size = 0x9000, scoped, tag = 'internal scratch']
  #allocation2 [shape = 'f32[18,18,3]{2,1,0:T(8,128)}', space=vmem, size = 0x36000, scoped, tag = 'scratch operand']
  #allocation3 [shape = 'f32[16,16,27]{2,1,0:T(8,128)}', space=vmem, size = 0x20000, scoped, tag = 'scratch operand']
  #allocation4 [shape = 'f32[256,32]{1,0:T(8,128)}', space=vmem, size = 0x20000, scoped, tag = 'scratch operand']
  #allocation5 [shape = 'f32[8,16,32]{2,1,0:T(8,128)}', space=vmem, size = 0x10000, scoped, tag = 'scratch operand']
  #allocation6 [shape = 'f32[10,10,32]{2,1,0:T(8,128)}', space=vmem, size = 0x14000, scoped, tag = 'scratch operand']
  #allocation7 [shape = 'f32[8,8,288]{2,1,0:T(8,128)}', space=vmem, size = 0x18000, scoped, tag = 'scratch operand']
  #allocation8 [shape = 'f32[64,64]{1,0:T(8,128)}', space=vmem, size = 0x8000, scoped, tag = 'scratch operand']
  #allocation9 [shape = 'f32[4,8,64]{2,1,0:T(8,128)}', space=vmem, size = 0x4000, scoped, tag = 'scratch operand']
  #allocation10 [shape = 'f32[6,6,64]{2,1,0:T(8,128)}', space=vmem, size = 0x6000, scoped, tag = 'scratch operand']
  #allocation11 [shape = 'f32[4,4,576]{2,1,0:T(4,128)}', space=vmem, size = 0xa000, scoped, tag = 'scratch operand']
  %s0 = inlined_call_operand.vmem [shape: f32[2,16,16,3], index: 0, kind: input, shape index: {}]
  %s1 = inlined_call_operand.vmem [shape: bf16[27,32], index: 1, kind: input, shape index: {}]
  %s2 = inlined_call_operand.vmem [shape: f32[1,32], index: 2, kind: input, shape index: {}]
  %s3 = inlined_call_operand.vmem [shape: bf16[288,64], index: 3, kind: input, shape index: {}]
  %s4 = inlined_call_operand.vmem [shape: f32[1,64], index: 4, kind: input, shape index: {}]
  %s5 = inlined_call_operand.vmem [shape: bf16[576,128], index: 5, kind: input, shape index: {}]
  %s6 = inlined_call_operand.vmem [shape: f32[1,128], index: 6, kind: input, shape index: {}]
  %s7 = inlined_call_operand.vmem [shape: bf16[4,128,128], index: 7, kind: input, shape index: {}]
  %s8 = inlined_call_operand.vmem [shape: f32[1,128], index: 8, kind: input, shape index: {}]
  %s9 = inlined_call_operand.vmem [shape: bf16[128,128], index: 9, kind: input, shape index: {}]
  %s10 = inlined_call_operand.vmem [shape: f32[1,128], index: 10, kind: input, shape index: {}]
  %s11 = inlined_call_operand.vmem [shape: bf16[128,128], index: 11, kind: input, shape index: {}]
  %s12 = inlined_call_operand.vmem [shape: f32[1,128], index: 12, kind: input, shape index: {}]
  %s13 = inlined_call_operand.hbm [shape: f32[2,1,128], index: 13, kind: output, shape index: {}]
  %s14 = sld [smem:[#allocation0]]
  $region85: #{forward.1} parent=0
    _
  %s16 = ssub.s32 1, %s14
  %s17 = scalar_select 0, %s16, %s14
  $region1: #{forward.1} parent=0
    #allocation12 [shape = 'u8[1024]{0}', space=vmem, size = 0x400, scoped, tag = 'output window, operand 0']
    #allocation13 [shape = 's32[2]{0}', space=sflag, size = 0x8, scoped, tag = 'scoped memory for forward.1']
    %18 = vsyncpa [#allocation13], 0
    %s19 = scalar_lea.sflag [#allocation13], 1
    %20 = vsyncpa %s19, 0
    loop: start=0, step=1, limit=4
    $region2: #{forward.1} parent=1 // loop_pre_header
      _
    $region3: #{forward.1} parent=1 // loop_header
      %s22 = sphi 0, %s26
      %p23 = scmp.ge.s32.totalorder %s22, 4
      %s32 = sphi 0, %s34
      %s35 = sphi 0, %s32
      %s36 = sphi 0, %s35
      %s52 = sphi 0, %s36
      %s56 = sphi 0, %s56
      %s58 = sphi 0, %s56
      %s59 = sphi 0, %s58
      %s73 = sphi 0, %s59
      %s77 = sphi 0, %s77
      %s79 = sphi 0, %s77
      %s80 = sphi 0, %s79
      %s94 = sphi 0, %s80
      %s98 = sphi 0, %s98
      %s100 = sphi 0, %s98
      %s101 = sphi 0, %s100
      %s115 = sphi 0, %s101
      %s119 = sphi 0, %s119
      %s121 = sphi 0, %s119
      %s122 = sphi 0, %s121
      %s136 = sphi 0, %s122
      %s140 = sphi 0, %s140
      %s142 = sphi 0, %s140
      %s143 = sphi 0, %s142
      %s157 = sphi 0, %s143
      %s161 = sphi 0, %s161
      %s163 = sphi 0, %s161
      %s164 = sphi 0, %s163
      %s178 = sphi 0, %s164
      %s182 = sphi 0, %s182
      %s184 = sphi 0, %s182
      %s185 = sphi 0, %s184
      %s199 = sphi 0, %s185
      %s203 = sphi 0, %s203
      %s205 = sphi 0, %s203
      %s206 = sphi 0, %s205
      %s220 = sphi 0, %s206
      %s224 = sphi 0, %s224
      %s226 = sphi 0, %s224
      %s227 = sphi 0, %s226
      %s241 = sphi 0, %s227
      %s245 = sphi 0, %s245
      %s247 = sphi 0, %s245
      %s248 = sphi 0, %s247
      %s262 = sphi 0, %s248
      %s266 = sphi 0, %s266
      %s268 = sphi 0, %s266
      %s269 = sphi 0, %s268
      %s283 = sphi 0, %s269
      %s287 = sphi 0, %s287
      %s289 = sphi 0, %s287
      %s290 = sphi 0, %s289
      %s304 = sphi 0, %s290
      %s310 = sphi 0, %s312
      %s313 = sphi 0, %s310
      %s314 = sphi 0, %s313
      %s330 = sphi 0, %s314
    $region4: #{forward.1} parent=1 // loop_header_branch
      %25 = sbr.rel (%p23) target = $region8
    $region5: #{forward.1} parent=1 // loop_body
      %s27 = ssub.s32 %s22, 1
      %s28 = ssub.s32 %s22, 2
      %s29 = sadd.s32 %s22, 1
      %s30 = ssub.s32 %s22, %s29
      %p31 = scmp.eq.s32.totalorder %s30, 0
      %s33 = sadd.s32 %s32, 1
      %s34 = scalar_select %p31, %s32, %s33
      %p37 = pneg %p31
      %p38 = scmp.eq.s32.totalorder %s22, 1
      %p39 = por %p37, %p38
      %p40 = scmp.ne.s32.totalorder %s32, %s35
      %p41 = scmp.eq.s32.totalorder %s22, 0
      %p42 = por %p40, %p41
      %p43 = scmp.ne.s32.totalorder %s32, %s35
      %p44 = scmp.eq.s32.totalorder %s27, 1
      %p45 = por %p43, %p44
      %p46 = scmp.ne.s32.totalorder %s35, %s36
      %p47 = scmp.eq.s32.totalorder %s27, 0
      %p48 = por %p46, %p47
      %p49 = scmp.ne.s32.totalorder %s35, %s36
      %p50 = scmp.eq.s32.totalorder %s28, 1
      %p51 = por %p49, %p50
      %p53 = scmp.ne.s32.totalorder %s36, %s52
      %p54 = scmp.eq.s32.totalorder %s28, 0
      %p55 = por %p53, %p54
      %s57 = sadd.s32 %s56, 1
      %p60 = scmp.eq.s32.totalorder %s22, 1
      %p61 = scmp.ne.s32.totalorder %s56, %s58
      %p62 = scmp.eq.s32.totalorder %s22, 0
      %p63 = por %p61, %p62
      %p64 = scmp.ne.s32.totalorder %s56, %s58
      %p65 = scmp.eq.s32.totalorder %s27, 1
      %p66 = por %p64, %p65
      %p67 = scmp.ne.s32.totalorder %s58, %s59
      %p68 = scmp.eq.s32.totalorder %s27, 0
      %p69 = por %p67, %p68
      %p70 = scmp.ne.s32.totalorder %s58, %s59
      %p71 = scmp.eq.s32.totalorder %s28, 1
      %p72 = por %p70, %p71
      %p74 = scmp.ne.s32.totalorder %s59, %s73
      %p75 = scmp.eq.s32.totalorder %s28, 0
      %p76 = por %p74, %p75
      %s78 = sadd.s32 %s77, 1
      %p81 = scmp.eq.s32.totalorder %s22, 1
      %p82 = scmp.ne.s32.totalorder %s77, %s79
      %p83 = scmp.eq.s32.totalorder %s22, 0
      %p84 = por %p82, %p83
      %p85 = scmp.ne.s32.totalorder %s77, %s79
      %p86 = scmp.eq.s32.totalorder %s27, 1
      %p87 = por %p85, %p86
      %p88 = scmp.ne.s32.totalorder %s79, %s80
      %p89 = scmp.eq.s32.totalorder %s27, 0
      %p90 = por %p88, %p89
      %p91 = scmp.ne.s32.totalorder %s79, %s80
      %p92 = scmp.eq.s32.totalorder %s28, 1
      %p93 = por %p91, %p92
      %p95 = scmp.ne.s32.totalorder %s80, %s94
      %p96 = scmp.eq.s32.totalorder %s28, 0
      %p97 = por %p95, %p96
      %s99 = sadd.s32 %s98, 1
      %p102 = scmp.eq.s32.totalorder %s22, 1
      %p103 = scmp.ne.s32.totalorder %s98, %s100
      %p104 = scmp.eq.s32.totalorder %s22, 0
      %p105 = por %p103, %p104
      %p106 = scmp.ne.s32.totalorder %s98, %s100
      %p107 = scmp.eq.s32.totalorder %s27, 1
      %p108 = por %p106, %p107
      %p109 = scmp.ne.s32.totalorder %s100, %s101
      %p110 = scmp.eq.s32.totalorder %s27, 0
      %p111 = por %p109, %p110
      %p112 = scmp.ne.s32.totalorder %s100, %s101
      %p113 = scmp.eq.s32.totalorder %s28, 1
      %p114 = por %p112, %p113
      %p116 = scmp.ne.s32.totalorder %s101, %s115
      %p117 = scmp.eq.s32.totalorder %s28, 0
      %p118 = por %p116, %p117
      %s120 = sadd.s32 %s119, 1
      %p123 = scmp.eq.s32.totalorder %s22, 1
      %p124 = scmp.ne.s32.totalorder %s119, %s121
      %p125 = scmp.eq.s32.totalorder %s22, 0
      %p126 = por %p124, %p125
      %p127 = scmp.ne.s32.totalorder %s119, %s121
      %p128 = scmp.eq.s32.totalorder %s27, 1
      %p129 = por %p127, %p128
      %p130 = scmp.ne.s32.totalorder %s121, %s122
      %p131 = scmp.eq.s32.totalorder %s27, 0
      %p132 = por %p130, %p131
      %p133 = scmp.ne.s32.totalorder %s121, %s122
      %p134 = scmp.eq.s32.totalorder %s28, 1
      %p135 = por %p133, %p134
      %p137 = scmp.ne.s32.totalorder %s122, %s136
      %p138 = scmp.eq.s32.totalorder %s28, 0
      %p139 = por %p137, %p138
      %s141 = sadd.s32 %s140, 1
      %p144 = scmp.eq.s32.totalorder %s22, 1
      %p145 = scmp.ne.s32.totalorder %s140, %s142
      %p146 = scmp.eq.s32.totalorder %s22, 0
      %p147 = por %p145, %p146
      %p148 = scmp.ne.s32.totalorder %s140, %s142
      %p149 = scmp.eq.s32.totalorder %s27, 1
      %p150 = por %p148, %p149
      %p151 = scmp.ne.s32.totalorder %s142, %s143
      %p152 = scmp.eq.s32.totalorder %s27, 0
      %p153 = por %p151, %p152
      %p154 = scmp.ne.s32.totalorder %s142, %s143
      %p155 = scmp.eq.s32.totalorder %s28, 1
      %p156 = por %p154, %p155
      %p158 = scmp.ne.s32.totalorder %s143, %s157
      %p159 = scmp.eq.s32.totalorder %s28, 0
      %p160 = por %p158, %p159
      %s162 = sadd.s32 %s161, 1
      %p165 = scmp.eq.s32.totalorder %s22, 1
      %p166 = scmp.ne.s32.totalorder %s161, %s163
      %p167 = scmp.eq.s32.totalorder %s22, 0
      %p168 = por %p166, %p167
      %p169 = scmp.ne.s32.totalorder %s161, %s163
      %p170 = scmp.eq.s32.totalorder %s27, 1
      %p171 = por %p169, %p170
      %p172 = scmp.ne.s32.totalorder %s163, %s164
      %p173 = scmp.eq.s32.totalorder %s27, 0
      %p174 = por %p172, %p173
      %p175 = scmp.ne.s32.totalorder %s163, %s164
      %p176 = scmp.eq.s32.totalorder %s28, 1
      %p177 = por %p175, %p176
      %p179 = scmp.ne.s32.totalorder %s164, %s178
      %p180 = scmp.eq.s32.totalorder %s28, 0
      %p181 = por %p179, %p180
      %s183 = sadd.s32 %s182, 1
      %p186 = scmp.eq.s32.totalorder %s22, 1
      %p187 = scmp.ne.s32.totalorder %s182, %s184
      %p188 = scmp.eq.s32.totalorder %s22, 0
      %p189 = por %p187, %p188
      %p190 = scmp.ne.s32.totalorder %s182, %s184
      %p191 = scmp.eq.s32.totalorder %s27, 1
      %p192 = por %p190, %p191
      %p193 = scmp.ne.s32.totalorder %s184, %s185
      %p194 = scmp.eq.s32.totalorder %s27, 0
      %p195 = por %p193, %p194
      %p196 = scmp.ne.s32.totalorder %s184, %s185
      %p197 = scmp.eq.s32.totalorder %s28, 1
      %p198 = por %p196, %p197
      %p200 = scmp.ne.s32.totalorder %s185, %s199
      %p201 = scmp.eq.s32.totalorder %s28, 0
      %p202 = por %p200, %p201
      %s204 = sadd.s32 %s203, 1
      %p207 = scmp.eq.s32.totalorder %s22, 1
      %p208 = scmp.ne.s32.totalorder %s203, %s205
      %p209 = scmp.eq.s32.totalorder %s22, 0
      %p210 = por %p208, %p209
      %p211 = scmp.ne.s32.totalorder %s203, %s205
      %p212 = scmp.eq.s32.totalorder %s27, 1
      %p213 = por %p211, %p212
      %p214 = scmp.ne.s32.totalorder %s205, %s206
      %p215 = scmp.eq.s32.totalorder %s27, 0
      %p216 = por %p214, %p215
      %p217 = scmp.ne.s32.totalorder %s205, %s206
      %p218 = scmp.eq.s32.totalorder %s28, 1
      %p219 = por %p217, %p218
      %p221 = scmp.ne.s32.totalorder %s206, %s220
      %p222 = scmp.eq.s32.totalorder %s28, 0
      %p223 = por %p221, %p222
      %s225 = sadd.s32 %s224, 1
      %p228 = scmp.eq.s32.totalorder %s22, 1
      %p229 = scmp.ne.s32.totalorder %s224, %s226
      %p230 = scmp.eq.s32.totalorder %s22, 0
      %p231 = por %p229, %p230
      %p232 = scmp.ne.s32.totalorder %s224, %s226
      %p233 = scmp.eq.s32.totalorder %s27, 1
      %p234 = por %p232, %p233
      %p235 = scmp.ne.s32.totalorder %s226, %s227
      %p236 = scmp.eq.s32.totalorder %s27, 0
      %p237 = por %p235, %p236
      %p238 = scmp.ne.s32.totalorder %s226, %s227
      %p239 = scmp.eq.s32.totalorder %s28, 1
      %p240 = por %p238, %p239
      %p242 = scmp.ne.s32.totalorder %s227, %s241
      %p243 = scmp.eq.s32.totalorder %s28, 0
      %p244 = por %p242, %p243
      %s246 = sadd.s32 %s245, 1
      %p249 = scmp.eq.s32.totalorder %s22, 1
      %p250 = scmp.ne.s32.totalorder %s245, %s247
      %p251 = scmp.eq.s32.totalorder %s22, 0
      %p252 = por %p250, %p251
      %p253 = scmp.ne.s32.totalorder %s245, %s247
      %p254 = scmp.eq.s32.totalorder %s27, 1
      %p255 = por %p253, %p254
      %p256 = scmp.ne.s32.totalorder %s247, %s248
      %p257 = scmp.eq.s32.totalorder %s27, 0
      %p258 = por %p256, %p257
      %p259 = scmp.ne.s32.totalorder %s247, %s248
      %p260 = scmp.eq.s32.totalorder %s28, 1
      %p261 = por %p259, %p260
      %p263 = scmp.ne.s32.totalorder %s248, %s262
      %p264 = scmp.eq.s32.totalorder %s28, 0
      %p265 = por %p263, %p264
      %s267 = sadd.s32 %s266, 1
      %p270 = scmp.eq.s32.totalorder %s22, 1
      %p271 = scmp.ne.s32.totalorder %s266, %s268
      %p272 = scmp.eq.s32.totalorder %s22, 0
      %p273 = por %p271, %p272
      %p274 = scmp.ne.s32.totalorder %s266, %s268
      %p275 = scmp.eq.s32.totalorder %s27, 1
      %p276 = por %p274, %p275
      %p277 = scmp.ne.s32.totalorder %s268, %s269
      %p278 = scmp.eq.s32.totalorder %s27, 0
      %p279 = por %p277, %p278
      %p280 = scmp.ne.s32.totalorder %s268, %s269
      %p281 = scmp.eq.s32.totalorder %s28, 1
      %p282 = por %p280, %p281
      %p284 = scmp.ne.s32.totalorder %s269, %s283
      %p285 = scmp.eq.s32.totalorder %s28, 0
      %p286 = por %p284, %p285
      %s288 = sadd.s32 %s287, 1
      %p291 = scmp.eq.s32.totalorder %s22, 1
      %p292 = scmp.ne.s32.totalorder %s287, %s289
      %p293 = scmp.eq.s32.totalorder %s22, 0
      %p294 = por %p292, %p293
      %p295 = scmp.ne.s32.totalorder %s287, %s289
      %p296 = scmp.eq.s32.totalorder %s27, 1
      %p297 = por %p295, %p296
      %p298 = scmp.ne.s32.totalorder %s289, %s290
      %p299 = scmp.eq.s32.totalorder %s27, 0
      %p300 = por %p298, %p299
      %p301 = scmp.ne.s32.totalorder %s289, %s290
      %p302 = scmp.eq.s32.totalorder %s28, 1
      %p303 = por %p301, %p302
      %p305 = scmp.ne.s32.totalorder %s290, %s304
      %p306 = scmp.eq.s32.totalorder %s28, 0
      %p307 = por %p305, %p306
      %s308 = ssub.s32 %s22, %s29
      %p309 = scmp.eq.s32.totalorder %s308, 0
      %s311 = sadd.s32 %s310, 1
      %s312 = scalar_select %p309, %s310, %s311
      %p315 = pneg %p309
      %p316 = scmp.eq.s32.totalorder %s22, 1
      %p317 = por %p315, %p316
      %p318 = scmp.ne.s32.totalorder %s310, %s313
      %p319 = scmp.eq.s32.totalorder %s22, 0
      %p320 = por %p318, %p319
      %p321 = scmp.ne.s32.totalorder %s310, %s313
      %p322 = scmp.eq.s32.totalorder %s27, 1
      %p323 = por %p321, %p322
      %p324 = scmp.ne.s32.totalorder %s313, %s314
      %p325 = scmp.eq.s32.totalorder %s27, 0
      %p326 = por %p324, %p325
      %p327 = scmp.ne.s32.totalorder %s313, %s314
      %p328 = scmp.eq.s32.totalorder %s28, 1
      %p329 = por %p327, %p328
      %p331 = scmp.ne.s32.totalorder %s314, %s330
      %p332 = scmp.eq.s32.totalorder %s28, 0
      %p333 = por %p331, %p332
      %p334 = scmp.le.s32.totalorder 1, %s22
      %p335 = scmp.lt.s32.totalorder %s22, 3
      %p336 = pnand %p334, %p335
      %p337 = pneg %p336
      // Predicated region
      $region9: #{forward.1} parent=5 // pred_check
        _
      $region10: #{forward.1} parent=5 // pred_check_branch
        %339 = sbr.rel (%p336) target = $region12
      $region11: #{forward.1} parent=5 // pred_region
        %s340 = ssub.s32 %s22, 1
        // Predicated region
        $region13: #{forward.1} parent=11 // pred_check
          %p341 = pneg %p69
        $region14: #{forward.1} parent=11 // pred_check_branch
          %343 = sbr.rel (%p341) target = $region16
        $region15: #{forward.1} parent=11 // pred_region
          _
        $region16: #{forward.1} parent=11 // pred_fallthru
          _
        // Predicated region
        $region17: #{forward.1} parent=11 // pred_check
          %p344 = pneg %p90
        $region18: #{forward.1} parent=11 // pred_check_branch
          %346 = sbr.rel (%p344) target = $region20
        $region19: #{forward.1} parent=11 // pred_region
          _
        $region20: #{forward.1} parent=11 // pred_fallthru
          _
        // Predicated region
        $region21: #{forward.1} parent=11 // pred_check
          %p347 = pneg %p111
        $region22: #{forward.1} parent=11 // pred_check_branch
          %349 = sbr.rel (%p347) target = $region24
        $region23: #{forward.1} parent=11 // pred_region
          _
        $region24: #{forward.1} parent=11 // pred_fallthru
          _
        // Predicated region
        $region25: #{forward.1} parent=11 // pred_check
          %p350 = pneg %p132
        $region26: #{forward.1} parent=11 // pred_check_branch
          %352 = sbr.rel (%p350) target = $region28
        $region27: #{forward.1} parent=11 // pred_region
          _
        $region28: #{forward.1} parent=11 // pred_fallthru
          _
        // Predicated region
        $region29: #{forward.1} parent=11 // pred_check
          %p353 = pneg %p153
        $region30: #{forward.1} parent=11 // pred_check_branch
          %355 = sbr.rel (%p353) target = $region32
        $region31: #{forward.1} parent=11 // pred_region
          _
        $region32: #{forward.1} parent=11 // pred_fallthru
          _
        // Predicated region
        $region33: #{forward.1} parent=11 // pred_check
          %p356 = pneg %p174
        $region34: #{forward.1} parent=11 // pred_check_branch
          %358 = sbr.rel (%p356) target = $region36
        $region35: #{forward.1} parent=11 // pred_region
          _
        $region36: #{forward.1} parent=11 // pred_fallthru
          _
        // Predicated region
        $region37: #{forward.1} parent=11 // pred_check
          %p359 = pneg %p195
        $region38: #{forward.1} parent=11 // pred_check_branch
          %361 = sbr.rel (%p359) target = $region40
        $region39: #{forward.1} parent=11 // pred_region
          _
        $region40: #{forward.1} parent=11 // pred_fallthru
          _
        // Predicated region
        $region41: #{forward.1} parent=11 // pred_check
          %p362 = pneg %p216
        $region42: #{forward.1} parent=11 // pred_check_branch
          %364 = sbr.rel (%p362) target = $region44
        $region43: #{forward.1} parent=11 // pred_region
          _
        $region44: #{forward.1} parent=11 // pred_fallthru
          _
        // Predicated region
        $region45: #{forward.1} parent=11 // pred_check
          %p365 = pneg %p237
        $region46: #{forward.1} parent=11 // pred_check_branch
          %367 = sbr.rel (%p365) target = $region48
        $region47: #{forward.1} parent=11 // pred_region
          _
        $region48: #{forward.1} parent=11 // pred_fallthru
          _
        // Predicated region
        $region49: #{forward.1} parent=11 // pred_check
          %p368 = pneg %p258
        $region50: #{forward.1} parent=11 // pred_check_branch
          %370 = sbr.rel (%p368) target = $region52
        $region51: #{forward.1} parent=11 // pred_region
          _
        $region52: #{forward.1} parent=11 // pred_fallthru
          _
        // Predicated region
        $region53: #{forward.1} parent=11 // pred_check
          %p371 = pneg %p279
        $region54: #{forward.1} parent=11 // pred_check_branch
          %373 = sbr.rel (%p371) target = $region56
        $region55: #{forward.1} parent=11 // pred_region
          _
        $region56: #{forward.1} parent=11 // pred_fallthru
          _
        // Predicated region
        $region57: #{forward.1} parent=11 // pred_check
          %p374 = pneg %p300
        $region58: #{forward.1} parent=11 // pred_check_branch
          %376 = sbr.rel (%p374) target = $region60
        $region59: #{forward.1} parent=11 // pred_region
          _
        $region60: #{forward.1} parent=11 // pred_fallthru
          _
      $region12: #{forward.1} parent=5 // pred_fallthru
        _
      %p377 = scmp.lt.s32.totalorder %s22, 2
      // Predicated region
      $region61: #{forward.1} parent=5 // pred_check
        %p378 = pneg %p377
      $region62: #{forward.1} parent=5 // pred_check_branch
        %380 = sbr.rel (%p378) target = $region64
      $region63: #{forward.1} parent=5 // pred_region
        // Predicated region
        $region65: #{forward.1} parent=63 // pred_check
          %p381 = pneg %p42
        $region66: #{forward.1} parent=63 // pred_check_branch
          %383 = sbr.rel (%p381) target = $region68
        $region67: #{forward.1} parent=63 // pred_region
          %p384 = scmp.lt.s32.totalorder %s22, 1
          %s385 = scalar_select %p384, %s22, 1
          %s386 = smul.addr %s385, 32
          %s387 = smul.addr %s386, 8
          %s388 = scalar_lea.vmem %s0, %s387
        $region68: #{forward.1} parent=63 // pred_fallthru
          _
      $region64: #{forward.1} parent=5 // pred_fallthru
        _
      %p389 = scmp.le.s32.totalorder 1, %s22
      %p390 = scmp.lt.s32.totalorder %s22, 3
      %p391 = pnand %p389, %p390
      %p392 = pneg %p391
      // Predicated region
      $region69: #{forward.1} parent=5 // pred_check
        _
      $region70: #{forward.1} parent=5 // pred_check_branch
        %394 = sbr.rel (%p391) target = $region72
      $region71: #{forward.1} parent=5 // pred_region
        %s395 = ssub.s32 %s22, 1
        %p396 = scmp.lt.s32.totalorder %s27, 1
        %s397 = scalar_select %p396, %s27, 1
        %s398 = smul.addr %s397, 32
        %s399 = smul.addr %s398, 8
        %s400 = scalar_lea.vmem %s0, %s399
        %p401 = pneg %p48
        %p402 = pneg %p45
        %p403 = pneg %p69
        %p404 = pneg %p66
        %p405 = pneg %p90
        %p406 = pneg %p87
        %p407 = pneg %p111
        %p408 = pneg %p108
        %p409 = pneg %p132
        %p410 = pneg %p129
        %p411 = pneg %p153
        %p412 = pneg %p150
        %p413 = pneg %p174
        %p414 = pneg %p171
        %p415 = pneg %p195
        %p416 = pneg %p192
        %p417 = pneg %p216
        %p418 = pneg %p213
        %p419 = pneg %p237
        %p420 = pneg %p234
        %p421 = pneg %p258
        %p422 = pneg %p255
        %p423 = pneg %p279
        %p424 = pneg %p276
        %p425 = pneg %p300
        %p426 = pneg %p297
        %p427 = pneg %p326
        %p428 = pneg %p323
        %s429 = sand.u32 %s313, 1
        %s430 = scalar_lea.sflag [#allocation13], %s429
        %s431 = sand.u32 %s313, 1
        %s432 = scalar_lea.vmem [#allocation12], %s431
        %p433 = scmp.lt.s32.totalorder %s27, 1
        %s434 = scalar_select %p433, %s27, 1
        %s435 = smul.addr %s434, 32
        %s436 = smul.addr %s435, 8
        %s437 = scalar_lea.vmem %s0, %s436
        %vm439 = vcmask 23552
        %440 = vst.msk [vmem:[#allocation2] sm:$0xff] %vm439, 0.0
        %441 = vst.msk [vmem:[#allocation2 + $0x8] sm:$0xff] %vm439, 0.0
        %vm442 = vcmask 17408
        %443 = vst.msk [vmem:[#allocation2 + $0x10] sm:$0x3] %vm442, 0.0
        %444 = vst.msk [vmem:[#allocation2 + $0x18] sm:$0xff] %vm439, 0.0
        %445 = vst.msk [vmem:[#allocation2 + $0x20] sm:$0xff] %vm439, 0.0
        %446 = vst.msk [vmem:[#allocation2 + $0x28] sm:$0x3] %vm442, 0.0
        %447 = vst.msk [vmem:[#allocation2 + $0x30] sm:$0xff] %vm439, 0.0
        %448 = vst.msk [vmem:[#allocation2 + $0x38] sm:$0xff] %vm439, 0.0
        %449 = vst.msk [vmem:[#allocation2 + $0x40] sm:$0x3] %vm442, 0.0
        %450 = vst.msk [vmem:[#allocation2 + $0x48] sm:$0xff] %vm439, 0.0
        %451 = vst.msk [vmem:[#allocation2 + $0x50] sm:$0xff] %vm439, 0.0
        %452 = vst.msk [vmem:[#allocation2 + $0x58] sm:$0x3] %vm442, 0.0
        %453 = vst.msk [vmem:[#allocation2 + $0x60] sm:$0xff] %vm439, 0.0
        %454 = vst.msk [vmem:[#allocation2 + $0x68] sm:$0xff] %vm439, 0.0
        %455 = vst.msk [vmem:[#allocation2 + $0x70] sm:$0x3] %vm442, 0.0
        %456 = vst.msk [vmem:[#allocation2 + $0x78] sm:$0xff] %vm439, 0.0
        %457 = vst.msk [vmem:[#allocation2 + $0x80] sm:$0xff] %vm439, 0.0
        %458 = vst.msk [vmem:[#allocation2 + $0x88] sm:$0x3] %vm442, 0.0
        %459 = vst.msk [vmem:[#allocation2 + $0x90] sm:$0xff] %vm439, 0.0
        %460 = vst.msk [vmem:[#allocation2 + $0x98] sm:$0xff] %vm439, 0.0
        %461 = vst.msk [vmem:[#allocation2 + $0xa0] sm:$0x3] %vm442, 0.0
        %462 = vst.msk [vmem:[#allocation2 + $0xa8] sm:$0xff] %vm439, 0.0
        %463 = vst.msk [vmem:[#allocation2 + $0xb0] sm:$0xff] %vm439, 0.0
        %464 = vst.msk [vmem:[#allocation2 + $0xb8] sm:$0x3] %vm442, 0.0
        %465 = vst.msk [vmem:[#allocation2 + $0xc0] sm:$0xff] %vm439, 0.0
        %466 = vst.msk [vmem:[#allocation2 + $0xc8] sm:$0xff] %vm439, 0.0
        %467 = vst.msk [vmem:[#allocation2 + $0xd0] sm:$0x3] %vm442, 0.0
        %468 = vst.msk [vmem:[#allocation2 + $0xd8] sm:$0xff] %vm439, 0.0
        %469 = vst.msk [vmem:[#allocation2 + $0xe0] sm:$0xff] %vm439, 0.0
        %470 = vst.msk [vmem:[#allocation2 + $0xe8] sm:$0x3] %vm442, 0.0
        %471 = vst.msk [vmem:[#allocation2 + $0xf0] sm:$0xff] %vm439, 0.0
        %472 = vst.msk [vmem:[#allocation2 + $0xf8] sm:$0xff] %vm439, 0.0
        %473 = vst.msk [vmem:[#allocation2 + $0x100] sm:$0x3] %vm442, 0.0
        %474 = vst.msk [vmem:[#allocation2 + $0x108] sm:$0xff] %vm439, 0.0
        %475 = vst.msk [vmem:[#allocation2 + $0x110] sm:$0xff] %vm439, 0.0
        %476 = vst.msk [vmem:[#allocation2 + $0x118] sm:$0x3] %vm442, 0.0
        %477 = vst.msk [vmem:[#allocation2 + $0x120] sm:$0xff] %vm439, 0.0
        %478 = vst.msk [vmem:[#allocation2 + $0x128] sm:$0xff] %vm439, 0.0
        %479 = vst.msk [vmem:[#allocation2 + $0x130] sm:$0x3] %vm442, 0.0
        %480 = vst.msk [vmem:[#allocation2 + $0x138] sm:$0xff] %vm439, 0.0
        %481 = vst.msk [vmem:[#allocation2 + $0x140] sm:$0xff] %vm439, 0.0
        %482 = vst.msk [vmem:[#allocation2 + $0x148] sm:$0x3] %vm442, 0.0
        %483 = vst.msk [vmem:[#allocation2 + $0x150] sm:$0xff] %vm439, 0.0
        %484 = vst.msk [vmem:[#allocation2 + $0x158] sm:$0xff] %vm439, 0.0
        %485 = vst.msk [vmem:[#allocation2 + $0x160] sm:$0x3] %vm442, 0.0
        %486 = vst.msk [vmem:[#allocation2 + $0x168] sm:$0xff] %vm439, 0.0
        %487 = vst.msk [vmem:[#allocation2 + $0x170] sm:$0xff] %vm439, 0.0
        %488 = vst.msk [vmem:[#allocation2 + $0x178] sm:$0x3] %vm442, 0.0
        %489 = vst.msk [vmem:[#allocation2 + $0x180] sm:$0xff] %vm439, 0.0
        %490 = vst.msk [vmem:[#allocation2 + $0x188] sm:$0xff] %vm439, 0.0
        %491 = vst.msk [vmem:[#allocation2 + $0x190] sm:$0x3] %vm442, 0.0
        %492 = vst.msk [vmem:[#allocation2 + $0x198] sm:$0xff] %vm439, 0.0
        %493 = vst.msk [vmem:[#allocation2 + $0x1a0] sm:$0xff] %vm439, 0.0
        %494 = vst.msk [vmem:[#allocation2 + $0x1a8] sm:$0x3] %vm442, 0.0
        %vm495 = vcmask 261120
        %496 = vst.msk [vmem:[#allocation6] sm:$0xff] %vm495, 0.0
        %vm497 = vcmask 254976
        %498 = vst.msk [vmem:[#allocation6 + $0x8] sm:$0x3] %vm497, 0.0
        %499 = vst.msk [vmem:[#allocation6 + $0x10] sm:$0xff] %vm495, 0.0
        %500 = vst.msk [vmem:[#allocation6 + $0x18] sm:$0x3] %vm497, 0.0
        %501 = vst.msk [vmem:[#allocation6 + $0x20] sm:$0xff] %vm495, 0.0
        %502 = vst.msk [vmem:[#allocation6 + $0x28] sm:$0x3] %vm497, 0.0
        %503 = vst.msk [vmem:[#allocation6 + $0x30] sm:$0xff] %vm495, 0.0
        %504 = vst.msk [vmem:[#allocation6 + $0x38] sm:$0x3] %vm497, 0.0
        %505 = vst.msk [vmem:[#allocation6 + $0x40] sm:$0xff] %vm495, 0.0
        %506 = vst.msk [vmem:[#allocation6 + $0x48] sm:$0x3] %vm497, 0.0
        %507 = vst.msk [vmem:[#allocation6 + $0x50] sm:$0xff] %vm495, 0.0
        %508 = vst.msk [vmem:[#allocation6 + $0x58] sm:$0x3] %vm497, 0.0
        %509 = vst.msk [vmem:[#allocation6 + $0x60] sm:$0xff] %vm495, 0.0
        %510 = vst.msk [vmem:[#allocation6 + $0x68] sm:$0x3] %vm497, 0.0
        %511 = vst.msk [vmem:[#allocation6 + $0x70] sm:$0xff] %vm495, 0.0
        %512 = vst.msk [vmem:[#allocation6 + $0x78] sm:$0x3] %vm497, 0.0
        %513 = vst.msk [vmem:[#allocation6 + $0x80] sm:$0xff] %vm495, 0.0
        %514 = vst.msk [vmem:[#allocation6 + $0x88] sm:$0x3] %vm497, 0.0
        %515 = vst.msk [vmem:[#allocation6 + $0x90] sm:$0xff] %vm495, 0.0
        %516 = vst.msk [vmem:[#allocation6 + $0x98] sm:$0x3] %vm497, 0.0
        %vm517 = vcmask 521216
        %518 = vst.msk [vmem:[#allocation10] sm:$0x3f] %vm517, 0.0
        %519 = vst.msk [vmem:[#allocation10 + $0x8] sm:$0x3f] %vm517, 0.0
        %520 = vst.msk [vmem:[#allocation10 + $0x10] sm:$0x3f] %vm517, 0.0
        %521 = vst.msk [vmem:[#allocation10 + $0x18] sm:$0x3f] %vm517, 0.0
        %522 = vst.msk [vmem:[#allocation10 + $0x20] sm:$0x3f] %vm517, 0.0
        %523 = vst.msk [vmem:[#allocation10 + $0x28] sm:$0x3f] %vm517, 0.0
        %v524 = vld [vmem:[%s437] sm:$0xff]
        %v525 = vld [vmem:[%s437 + $0x8] sm:$0xff]
        %v526 = vld [vmem:[%s437 + $0x10] sm:$0xff]
        %v527 = vld [vmem:[%s437 + $0x18] sm:$0xff]
        %v528 = vld [vmem:[%s437 + $0x20] sm:$0xff]
        %v529 = vld [vmem:[%s437 + $0x28] sm:$0xff]
        %v530 = vld [vmem:[%s437 + $0x30] sm:$0xff]
        %v531 = vld [vmem:[%s437 + $0x38] sm:$0xff]
        %v532 = vld [vmem:[%s437 + $0x40] sm:$0xff]
        %v533 = vld [vmem:[%s437 + $0x48] sm:$0xff]
        %v534 = vld [vmem:[%s437 + $0x50] sm:$0xff]
        %v535 = vld [vmem:[%s437 + $0x58] sm:$0xff]
        %v536 = vld [vmem:[%s437 + $0x60] sm:$0xff]
        %v537 = vld [vmem:[%s437 + $0x68] sm:$0xff]
        %v538 = vld [vmem:[%s437 + $0x70] sm:$0xff]
        %v539 = vld [vmem:[%s437 + $0x78] sm:$0xff]
        %v540 = vld [vmem:[%s437 + $0x80] sm:$0xff]
        %v541 = vld [vmem:[%s437 + $0x88] sm:$0xff]
        %v542 = vld [vmem:[%s437 + $0x90] sm:$0xff]
        %v543 = vld [vmem:[%s437 + $0x98] sm:$0xff]
        %v544 = vld [vmem:[%s437 + $0xa0] sm:$0xff]
        %v545 = vld [vmem:[%s437 + $0xa8] sm:$0xff]
        %v546 = vld [vmem:[%s437 + $0xb0] sm:$0xff]
        %v547 = vld [vmem:[%s437 + $0xb8] sm:$0xff]
        %v548 = vld [vmem:[%s437 + $0xc0] sm:$0xff]
        %v549 = vld [vmem:[%s437 + $0xc8] sm:$0xff]
        %v550 = vld [vmem:[%s437 + $0xd0] sm:$0xff]
        %v551 = vld [vmem:[%s437 + $0xd8] sm:$0xff]
        %v552 = vld [vmem:[%s437 + $0xe0] sm:$0xff]
        %v553 = vld [vmem:[%s437 + $0xe8] sm:$0xff]
        %v554 = vld [vmem:[%s437 + $0xf0] sm:$0xff]
        %v555 = vld [vmem:[%s437 + $0xf8] sm:$0xff]
        %s556 = scalar_lea.vmem [#allocation2], 24
        %557 = vst.msk [vmem:[%s556 + $0x1] sm:$0xff] %vm439, %v524
        %558 = vst.msk [vmem:[%s556 + $0x9] sm:$0xff] %vm439, %v525
        %559 = vst.msk [vmem:[%s556 + $0x19] sm:$0xff] %vm439, %v526
        %560 = vst.msk [vmem:[%s556 + $0x21] sm:$0xff] %vm439, %v527
        %561 = vst.msk [vmem:[%s556 + $0x31] sm:$0xff] %vm439, %v528
        %562 = vst.msk [vmem:[%s556 + $0x39] sm:$0xff] %vm439, %v529
        %563 = vst.msk [vmem:[%s556 + $0x49] sm:$0xff] %vm439, %v530
        %564 = vst.msk [vmem:[%s556 + $0x51] sm:$0xff] %vm439, %v531
        %565 = vst.msk [vmem:[%s556 + $0x61] sm:$0xff] %vm439, %v532
        %566 = vst.msk [vmem:[%s556 + $0x69] sm:$0xff] %vm439, %v533
        %567 = vst.msk [vmem:[%s556 + $0x79] sm:$0xff] %vm439, %v534
        %568 = vst.msk [vmem:[%s556 + $0x81] sm:$0xff] %vm439, %v535
        %569 = vst.msk [vmem:[%s556 + $0x91] sm:$0xff] %vm439, %v536
        %570 = vst.msk [vmem:[%s556 + $0x99] sm:$0xff] %vm439, %v537
        %571 = vst.msk [vmem:[%s556 + $0xa9] sm:$0xff] %vm439, %v538
        %572 = vst.msk [vmem:[%s556 + $0xb1] sm:$0xff] %vm439, %v539
        %573 = vst.msk [vmem:[%s556 + $0xc1] sm:$0xff] %vm439, %v540
        %574 = vst.msk [vmem:[%s556 + $0xc9] sm:$0xff] %vm439, %v541
        %575 = vst.msk [vmem:[%s556 + $0xd9] sm:$0xff] %vm439, %v542
        %576 = vst.msk [vmem:[%s556 + $0xe1] sm:$0xff] %vm439, %v543
        %577 = vst.msk [vmem:[%s556 + $0xf1] sm:$0xff] %vm439, %v544
        %578 = vst.msk [vmem:[%s556 + $0xf9] sm:$0xff] %vm439, %v545
        %579 = vst.msk [vmem:[%s556 + $0x109] sm:$0xff] %vm439, %v546
        %580 = vst.msk [vmem:[%s556 + $0x111] sm:$0xff] %vm439, %v547
        %581 = vst.msk [vmem:[%s556 + $0x121] sm:$0xff] %vm439, %v548
        %582 = vst.msk [vmem:[%s556 + $0x129] sm:$0xff] %vm439, %v549
        %583 = vst.msk [vmem:[%s556 + $0x139] sm:$0xff] %vm439, %v550
        %584 = vst.msk [vmem:[%s556 + $0x141] sm:$0xff] %vm439, %v551
        %585 = vst.msk [vmem:[%s556 + $0x151] sm:$0xff] %vm439, %v552
        %586 = vst.msk [vmem:[%s556 + $0x159] sm:$0xff] %vm439, %v553
        %587 = vst.msk [vmem:[%s556 + $0x169] sm:$0xff] %vm439, %v554
        %588 = vst.msk [vmem:[%s556 + $0x171] sm:$0xff] %vm439, %v555
        %v589 = vld [vmem:[#allocation2] sm:$0xff]
        %v590 = vld [vmem:[#allocation2 + $0x8] sm:$0xff]
        %v591 = vld [vmem:[#allocation2 + $0x18] sm:$0xff]
        %v592 = vld [vmem:[#allocation2 + $0x20] sm:$0xff]
        %v593 = vld [vmem:[#allocation2 + $0x30] sm:$0xff]
        %v594 = vld [vmem:[#allocation2 + $0x38] sm:$0xff]
        %v595 = vld [vmem:[#allocation2 + $0x48] sm:$0xff]
        %v596 = vld [vmem:[#allocation2 + $0x50] sm:$0xff]
        %v597 = vld [vmem:[#allocation2 + $0x60] sm:$0xff]
        %v598 = vld [vmem:[#allocation2 + $0x68] sm:$0xff]
        %v599 = vld [vmem:[#allocation2 + $0x78] sm:$0xff]
        %v600 = vld [vmem:[#allocation2 + $0x80] sm:$0xff]
        %v601 = vld [vmem:[#allocation2 + $0x90] sm:$0xff]
        %v602 = vld [vmem:[#allocation2 + $0x98] sm:$0xff]
        %v603 = vld [vmem:[#allocation2 + $0xa8] sm:$0xff]
        %v604 = vld [vmem:[#allocation2 + $0xb0] sm:$0xff]
        %v605 = vld [vmem:[#allocation2 + $0xc0] sm:$0xff]
        %v606 = vld [vmem:[#allocation2 + $0xc8] sm:$0xff]
        %v607 = vld [vmem:[#allocation2 + $0xd8] sm:$0xff]
        %v608 = vld [vmem:[#allocation2 + $0xe0] sm:$0xff]
        %v609 = vld [vmem:[#allocation2 + $0xf0] sm:$0xff]
        %v610 = vld [vmem:[#allocation2 + $0xf8] sm:$0xff]
        %v611 = vld [vmem:[#allocation2 + $0x108] sm:$0xff]
        %v612 = vld [vmem:[#allocation2 + $0x110] sm:$0xff]
        %v613 = vld [vmem:[#allocation2 + $0x120] sm:$0xff]
        %v614 = vld [vmem:[#allocation2 + $0x128] sm:$0xff]
        %v615 = vld [vmem:[#allocation2 + $0x138] sm:$0xff]
        %v616 = vld [vmem:[#allocation2 + $0x140] sm:$0xff]
        %v617 = vld [vmem:[#allocation2 + $0x150] sm:$0xff]
        %v618 = vld [vmem:[#allocation2 + $0x158] sm:$0xff]
        %v619 = vld [vmem:[#allocation2 + $0x168] sm:$0xff]
        %v620 = vld [vmem:[#allocation2 + $0x170] sm:$0xff]
        %621 = vst.msk [vmem:[#allocation3] sm:$0xff] %vm439, %v589
        %622 = vst.msk [vmem:[#allocation3 + $0x8] sm:$0xff] %vm439, %v590
        %623 = vst.msk [vmem:[#allocation3 + $0x10] sm:$0xff] %vm439, %v591
        %624 = vst.msk [vmem:[#allocation3 + $0x18] sm:$0xff] %vm439, %v592
        %625 = vst.msk [vmem:[#allocation3 + $0x20] sm:$0xff] %vm439, %v593
        %626 = vst.msk [vmem:[#allocation3 + $0x28] sm:$0xff] %vm439, %v594
        %627 = vst.msk [vmem:[#allocation3 + $0x30] sm:$0xff] %vm439, %v595
        %628 = vst.msk [vmem:[#allocation3 + $0x38] sm:$0xff] %vm439, %v596
        %629 = vst.msk [vmem:[#allocation3 + $0x40] sm:$0xff] %vm439, %v597
        %630 = vst.msk [vmem:[#allocation3 + $0x48] sm:$0xff] %vm439, %v598
        %631 = vst.msk [vmem:[#allocation3 + $0x50] sm:$0xff] %vm439, %v599
        %632 = vst.msk [vmem:[#allocation3 + $0x58] sm:$0xff] %vm439, %v600
        %633 = vst.msk [vmem:[#allocation3 + $0x60] sm:$0xff] %vm439, %v601
        %634 = vst.msk [vmem:[#allocation3 + $0x68] sm:$0xff] %vm439, %v602
        %635 = vst.msk [vmem:[#allocation3 + $0x70] sm:$0xff] %vm439, %v603
        %636 = vst.msk [vmem:[#allocation3 + $0x78] sm:$0xff] %vm439, %v604
        %637 = vst.msk [vmem:[#allocation3 + $0x80] sm:$0xff] %vm439, %v605
        %638 = vst.msk [vmem:[#allocation3 + $0x88] sm:$0xff] %vm439, %v606
        %639 = vst.msk [vmem:[#allocation3 + $0x90] sm:$0xff] %vm439, %v607
        %640 = vst.msk [vmem:[#allocation3 + $0x98] sm:$0xff] %vm439, %v608
        %641 = vst.msk [vmem:[#allocation3 + $0xa0] sm:$0xff] %vm439, %v609
        %642 = vst.msk [vmem:[#allocation3 + $0xa8] sm:$0xff] %vm439, %v610
        %643 = vst.msk [vmem:[#allocation3 + $0xb0] sm:$0xff] %vm439, %v611
        %644 = vst.msk [vmem:[#allocation3 + $0xb8] sm:$0xff] %vm439, %v612
        %645 = vst.msk [vmem:[#allocation3 + $0xc0] sm:$0xff] %vm439, %v613
        %646 = vst.msk [vmem:[#allocation3 + $0xc8] sm:$0xff] %vm439, %v614
        %647 = vst.msk [vmem:[#allocation3 + $0xd0] sm:$0xff] %vm439, %v615
        %648 = vst.msk [vmem:[#allocation3 + $0xd8] sm:$0xff] %vm439, %v616
        %649 = vst.msk [vmem:[#allocation3 + $0xe0] sm:$0xff] %vm439, %v617
        %650 = vst.msk [vmem:[#allocation3 + $0xe8] sm:$0xff] %vm439, %v618
        %651 = vst.msk [vmem:[#allocation3 + $0xf0] sm:$0xff] %vm439, %v619
        %652 = vst.msk [vmem:[#allocation3 + $0xf8] sm:$0xff] %vm439, %v620
        %v653 = vld [vmem:[#allocation2 + $0x1] sm:$0xff]
        %v654 = vld [vmem:[#allocation2 + $0x9] sm:$0xff]
        %v655 = vld [vmem:[#allocation2 + $0x19] sm:$0xff]
        %v656 = vld [vmem:[#allocation2 + $0x21] sm:$0xff]
        %v657 = vld [vmem:[#allocation2 + $0x31] sm:$0xff]
        %v658 = vld [vmem:[#allocation2 + $0x39] sm:$0xff]
        %v659 = vld [vmem:[#allocation2 + $0x49] sm:$0xff]
        %v660 = vld [vmem:[#allocation2 + $0x51] sm:$0xff]
        %v661 = vld [vmem:[#allocation2 + $0x61] sm:$0xff]
        %v662 = vld [vmem:[#allocation2 + $0x69] sm:$0xff]
        %v663 = vld [vmem:[#allocation2 + $0x79] sm:$0xff]
        %v664 = vld [vmem:[#allocation2 + $0x81] sm:$0xff]
        %v665 = vld [vmem:[#allocation2 + $0x91] sm:$0xff]
        %v666 = vld [vmem:[#allocation2 + $0x99] sm:$0xff]
        %v667 = vld [vmem:[#allocation2 + $0xa9] sm:$0xff]
        %v668 = vld [vmem:[#allocation2 + $0xb1] sm:$0xff]
        %v669 = vld [vmem:[#allocation2 + $0xc1] sm:$0xff]
        %v670 = vld [vmem:[#allocation2 + $0xc9] sm:$0xff]
        %v671 = vld [vmem:[#allocation2 + $0xd9] sm:$0xff]
        %v672 = vld [vmem:[#allocation2 + $0xe1] sm:$0xff]
        %v673 = vld [vmem:[#allocation2 + $0xf1] sm:$0xff]
        %v674 = vld [vmem:[#allocation2 + $0xf9] sm:$0xff]
        %v675 = vld [vmem:[#allocation2 + $0x109] sm:$0xff]
        %v676 = vld [vmem:[#allocation2 + $0x111] sm:$0xff]
        %v677 = vld [vmem:[#allocation2 + $0x121] sm:$0xff]
        %v678 = vld [vmem:[#allocation2 + $0x129] sm:$0xff]
        %v679 = vld [vmem:[#allocation2 + $0x139] sm:$0xff]
        %v680 = vld [vmem:[#allocation2 + $0x141] sm:$0xff]
        %v681 = vld [vmem:[#allocation2 + $0x151] sm:$0xff]
        %v682 = vld [vmem:[#allocation2 + $0x159] sm:$0xff]
        %v683 = vld [vmem:[#allocation2 + $0x169] sm:$0xff]
        %v684 = vld [vmem:[#allocation2 + $0x171] sm:$0xff]
        %717 = vrot.lane.b32.xlu0 %v653, 3
        %v718 = vpop.permute.xlu0 %717
        %719 = vrot.lane.b32.xlu0 %v654, 3
        %v720 = vpop.permute.xlu0 %719
        %721 = vrot.lane.b32.xlu0 %v655, 3
        %v722 = vpop.permute.xlu0 %721
        %723 = vrot.lane.b32.xlu0 %v656, 3
        %v724 = vpop.permute.xlu0 %723
        %725 = vrot.lane.b32.xlu0 %v657, 3
        %v726 = vpop.permute.xlu0 %725
        %727 = vrot.lane.b32.xlu0 %v658, 3
        %v728 = vpop.permute.xlu0 %727
        %729 = vrot.lane.b32.xlu0 %v659, 3
        %v730 = vpop.permute.xlu0 %729
        %731 = vrot.lane.b32.xlu0 %v660, 3
        %v732 = vpop.permute.xlu0 %731
        %733 = vrot.lane.b32.xlu0 %v661, 3
        %v734 = vpop.permute.xlu0 %733
        %735 = vrot.lane.b32.xlu0 %v662, 3
        %v736 = vpop.permute.xlu0 %735
        %737 = vrot.lane.b32.xlu0 %v663, 3
        %v738 = vpop.permute.xlu0 %737
        %739 = vrot.lane.b32.xlu0 %v664, 3
        %v740 = vpop.permute.xlu0 %739
        %741 = vrot.lane.b32.xlu0 %v665, 3
        %v742 = vpop.permute.xlu0 %741
        %743 = vrot.lane.b32.xlu0 %v666, 3
        %v744 = vpop.permute.xlu0 %743
        %745 = vrot.lane.b32.xlu0 %v667, 3
        %v746 = vpop.permute.xlu0 %745
        %747 = vrot.lane.b32.xlu0 %v668, 3
        %v748 = vpop.permute.xlu0 %747
        %749 = vrot.lane.b32.xlu0 %v669, 3
        %v750 = vpop.permute.xlu0 %749
        %751 = vrot.lane.b32.xlu0 %v670, 3
        %v752 = vpop.permute.xlu0 %751
        %753 = vrot.lane.b32.xlu0 %v671, 3
        %v754 = vpop.permute.xlu0 %753
        %755 = vrot.lane.b32.xlu0 %v672, 3
        %v756 = vpop.permute.xlu0 %755
        %757 = vrot.lane.b32.xlu0 %v673, 3
        %v758 = vpop.permute.xlu0 %757
        %759 = vrot.lane.b32.xlu0 %v674, 3
        %v760 = vpop.permute.xlu0 %759
        %761 = vrot.lane.b32.xlu0 %v675, 3
        %v762 = vpop.permute.xlu0 %761
        %763 = vrot.lane.b32.xlu0 %v676, 3
        %v764 = vpop.permute.xlu0 %763
        %765 = vrot.lane.b32.xlu0 %v677, 3
        %v766 = vpop.permute.xlu0 %765
        %767 = vrot.lane.b32.xlu0 %v678, 3
        %v768 = vpop.permute.xlu0 %767
        %769 = vrot.lane.b32.xlu0 %v679, 3
        %v770 = vpop.permute.xlu0 %769
        %771 = vrot.lane.b32.xlu0 %v680, 3
        %v772 = vpop.permute.xlu0 %771
        %773 = vrot.lane.b32.xlu0 %v681, 3
        %v774 = vpop.permute.xlu0 %773
        %775 = vrot.lane.b32.xlu0 %v682, 3
        %v776 = vpop.permute.xlu0 %775
        %777 = vrot.lane.b32.xlu0 %v683, 3
        %v778 = vpop.permute.xlu0 %777
        %779 = vrot.lane.b32.xlu0 %v684, 3
        %v780 = vpop.permute.xlu0 %779
        %vm813 = vcmask 48152
        %814 = vst.msk [vmem:[#allocation3] sm:$0xff] %vm813, %v718
        %815 = vst.msk [vmem:[#allocation3 + $0x8] sm:$0xff] %vm813, %v720
        %816 = vst.msk [vmem:[#allocation3 + $0x10] sm:$0xff] %vm813, %v722
        %817 = vst.msk [vmem:[#allocation3 + $0x18] sm:$0xff] %vm813, %v724
        %818 = vst.msk [vmem:[#allocation3 + $0x20] sm:$0xff] %vm813, %v726
        %819 = vst.msk [vmem:[#allocation3 + $0x28] sm:$0xff] %vm813, %v728
        %820 = vst.msk [vmem:[#allocation3 + $0x30] sm:$0xff] %vm813, %v730
        %821 = vst.msk [vmem:[#allocation3 + $0x38] sm:$0xff] %vm813, %v732
        %822 = vst.msk [vmem:[#allocation3 + $0x40] sm:$0xff] %vm813, %v734
        %823 = vst.msk [vmem:[#allocation3 + $0x48] sm:$0xff] %vm813, %v736
        %824 = vst.msk [vmem:[#allocation3 + $0x50] sm:$0xff] %vm813, %v738
        %825 = vst.msk [vmem:[#allocation3 + $0x58] sm:$0xff] %vm813, %v740
        %826 = vst.msk [vmem:[#allocation3 + $0x60] sm:$0xff] %vm813, %v742
        %827 = vst.msk [vmem:[#allocation3 + $0x68] sm:$0xff] %vm813, %v744
        %828 = vst.msk [vmem:[#allocation3 + $0x70] sm:$0xff] %vm813, %v746
        %829 = vst.msk [vmem:[#allocation3 + $0x78] sm:$0xff] %vm813, %v748
        %830 = vst.msk [vmem:[#allocation3 + $0x80] sm:$0xff] %vm813, %v750
        %831 = vst.msk [vmem:[#allocation3 + $0x88] sm:$0xff] %vm813, %v752
        %832 = vst.msk [vmem:[#allocation3 + $0x90] sm:$0xff] %vm813, %v754
        %833 = vst.msk [vmem:[#allocation3 + $0x98] sm:$0xff] %vm813, %v756
        %834 = vst.msk [vmem:[#allocation3 + $0xa0] sm:$0xff] %vm813, %v758
        %835 = vst.msk [vmem:[#allocation3 + $0xa8] sm:$0xff] %vm813, %v760
        %836 = vst.msk [vmem:[#allocation3 + $0xb0] sm:$0xff] %vm813, %v762
        %837 = vst.msk [vmem:[#allocation3 + $0xb8] sm:$0xff] %vm813, %v764
        %838 = vst.msk [vmem:[#allocation3 + $0xc0] sm:$0xff] %vm813, %v766
        %839 = vst.msk [vmem:[#allocation3 + $0xc8] sm:$0xff] %vm813, %v768
        %840 = vst.msk [vmem:[#allocation3 + $0xd0] sm:$0xff] %vm813, %v770
        %841 = vst.msk [vmem:[#allocation3 + $0xd8] sm:$0xff] %vm813, %v772
        %842 = vst.msk [vmem:[#allocation3 + $0xe0] sm:$0xff] %vm813, %v774
        %843 = vst.msk [vmem:[#allocation3 + $0xe8] sm:$0xff] %vm813, %v776
        %844 = vst.msk [vmem:[#allocation3 + $0xf0] sm:$0xff] %vm813, %v778
        %845 = vst.msk [vmem:[#allocation3 + $0xf8] sm:$0xff] %vm813, %v780
        %v846 = vld [vmem:[#allocation2 + $0x2] sm:$0xff]
        %v847 = vld [vmem:[#allocation2 + $0xa] sm:$0xff]
        %v848 = vld [vmem:[#allocation2 + $0x1a] sm:$0xff]
        %v849 = vld [vmem:[#allocation2 + $0x22] sm:$0xff]
        %v850 = vld [vmem:[#allocation2 + $0x32] sm:$0xff]
        %v851 = vld [vmem:[#allocation2 + $0x3a] sm:$0xff]
        %v852 = vld [vmem:[#allocation2 + $0x4a] sm:$0xff]
        %v853 = vld [vmem:[#allocation2 + $0x52] sm:$0xff]
        %v854 = vld [vmem:[#allocation2 + $0x62] sm:$0xff]
        %v855 = vld [vmem:[#allocation2 + $0x6a] sm:$0xff]
        %v856 = vld [vmem:[#allocation2 + $0x7a] sm:$0xff]
        %v857 = vld [vmem:[#allocation2 + $0x82] sm:$0xff]
        %v858 = vld [vmem:[#allocation2 + $0x92] sm:$0xff]
        %v859 = vld [vmem:[#allocation2 + $0x9a] sm:$0xff]
        %v860 = vld [vmem:[#allocation2 + $0xaa] sm:$0xff]
        %v861 = vld [vmem:[#allocation2 + $0xb2] sm:$0xff]
        %v862 = vld [vmem:[#allocation2 + $0xc2] sm:$0xff]
        %v863 = vld [vmem:[#allocation2 + $0xca] sm:$0xff]
        %v864 = vld [vmem:[#allocation2 + $0xda] sm:$0xff]
        %v865 = vld [vmem:[#allocation2 + $0xe2] sm:$0xff]
        %v866 = vld [vmem:[#allocation2 + $0xf2] sm:$0xff]
        %v867 = vld [vmem:[#allocation2 + $0xfa] sm:$0xff]
        %v868 = vld [vmem:[#allocation2 + $0x10a] sm:$0xff]
        %v869 = vld [vmem:[#allocation2 + $0x112] sm:$0xff]
        %v870 = vld [vmem:[#allocation2 + $0x122] sm:$0xff]
        %v871 = vld [vmem:[#allocation2 + $0x12a] sm:$0xff]
        %v872 = vld [vmem:[#allocation2 + $0x13a] sm:$0xff]
        %v873 = vld [vmem:[#allocation2 + $0x142] sm:$0xff]
        %v874 = vld [vmem:[#allocation2 + $0x152] sm:$0xff]
        %v875 = vld [vmem:[#allocation2 + $0x15a] sm:$0xff]
        %v876 = vld [vmem:[#allocation2 + $0x16a] sm:$0xff]
        %v877 = vld [vmem:[#allocation2 + $0x172] sm:$0xff]
        %910 = vrot.lane.b32.xlu0 %v846, 6
        %v911 = vpop.permute.xlu0 %910
        %912 = vrot.lane.b32.xlu0 %v847, 6
        %v913 = vpop.permute.xlu0 %912
        %914 = vrot.lane.b32.xlu0 %v848, 6
        %v915 = vpop.permute.xlu0 %914
        %916 = vrot.lane.b32.xlu0 %v849, 6
        %v917 = vpop.permute.xlu0 %916
        %918 = vrot.lane.b32.xlu0 %v850, 6
        %v919 = vpop.permute.xlu0 %918
        %920 = vrot.lane.b32.xlu0 %v851, 6
        %v921 = vpop.permute.xlu0 %920
        %922 = vrot.lane.b32.xlu0 %v852, 6
        %v923 = vpop.permute.xlu0 %922
        %924 = vrot.lane.b32.xlu0 %v853, 6
        %v925 = vpop.permute.xlu0 %924
        %926 = vrot.lane.b32.xlu0 %v854, 6
        %v927 = vpop.permute.xlu0 %926
        %928 = vrot.lane.b32.xlu0 %v855, 6
        %v929 = vpop.permute.xlu0 %928
        %930 = vrot.lane.b32.xlu0 %v856, 6
        %v931 = vpop.permute.xlu0 %930
        %932 = vrot.lane.b32.xlu0 %v857, 6
        %v933 = vpop.permute.xlu0 %932
        %934 = vrot.lane.b32.xlu0 %v858, 6
        %v935 = vpop.permute.xlu0 %934
        %936 = vrot.lane.b32.xlu0 %v859, 6
        %v937 = vpop.permute.xlu0 %936
        %938 = vrot.lane.b32.xlu0 %v860, 6
        %v939 = vpop.permute.xlu0 %938
        %940 = vrot.lane.b32.xlu0 %v861, 6
        %v941 = vpop.permute.xlu0 %940
        %942 = vrot.lane.b32.xlu0 %v862, 6
        %v943 = vpop.permute.xlu0 %942
        %944 = vrot.lane.b32.xlu0 %v863, 6
        %v945 = vpop.permute.xlu0 %944
        %946 = vrot.lane.b32.xlu0 %v864, 6
        %v947 = vpop.permute.xlu0 %946
        %948 = vrot.lane.b32.xlu0 %v865, 6
        %v949 = vpop.permute.xlu0 %948
        %950 = vrot.lane.b32.xlu0 %v866, 6
        %v951 = vpop.permute.xlu0 %950
        %952 = vrot.lane.b32.xlu0 %v867, 6
        %v953 = vpop.permute.xlu0 %952
        %954 = vrot.lane.b32.xlu0 %v868, 6
        %v955 = vpop.permute.xlu0 %954
        %956 = vrot.lane.b32.xlu0 %v869, 6
        %v957 = vpop.permute.xlu0 %956
        %958 = vrot.lane.b32.xlu0 %v870, 6
        %v959 = vpop.permute.xlu0 %958
        %960 = vrot.lane.b32.xlu0 %v871, 6
        %v961 = vpop.permute.xlu0 %960
        %962 = vrot.lane.b32.xlu0 %v872, 6
        %v963 = vpop.permute.xlu0 %962
        %964 = vrot.lane.b32.xlu0 %v873, 6
        %v965 = vpop.permute.xlu0 %964
        %966 = vrot.lane.b32.xlu0 %v874, 6
        %v967 = vpop.permute.xlu0 %966
        %968 = vrot.lane.b32.xlu0 %v875, 6
        %v969 = vpop.permute.xlu0 %968
        %970 = vrot.lane.b32.xlu0 %v876, 6
        %v971 = vpop.permute.xlu0 %970
        %972 = vrot.lane.b32.xlu0 %v877, 6
        %v973 = vpop.permute.xlu0 %972
        %vm1006 = vcmask 72752
        %1007 = vst.msk [vmem:[#allocation3] sm:$0xff] %vm1006, %v911
        %1008 = vst.msk [vmem:[#allocation3 + $0x8] sm:$0xff] %vm1006, %v913
        %1009 = vst.msk [vmem:[#allocation3 + $0x10] sm:$0xff] %vm1006, %v915
        %1010 = vst.msk [vmem:[#allocation3 + $0x18] sm:$0xff] %vm1006, %v917
        %1011 = vst.msk [vmem:[#allocation3 + $0x20] sm:$0xff] %vm1006, %v919
        %1012 = vst.msk [vmem:[#allocation3 + $0x28] sm:$0xff] %vm1006, %v921
        %1013 = vst.msk [vmem:[#allocation3 + $0x30] sm:$0xff] %vm1006, %v923
        %1014 = vst.msk [vmem:[#allocation3 + $0x38] sm:$0xff] %vm1006, %v925
        %1015 = vst.msk [vmem:[#allocation3 + $0x40] sm:$0xff] %vm1006, %v927
        %1016 = vst.msk [vmem:[#allocation3 + $0x48] sm:$0xff] %vm1006, %v929
        %1017 = vst.msk [vmem:[#allocation3 + $0x50] sm:$0xff] %vm1006, %v931
        %1018 = vst.msk [vmem:[#allocation3 + $0x58] sm:$0xff] %vm1006, %v933
        %1019 = vst.msk [vmem:[#allocation3 + $0x60] sm:$0xff] %vm1006, %v935
        %1020 = vst.msk [vmem:[#allocation3 + $0x68] sm:$0xff] %vm1006, %v937
        %1021 = vst.msk [vmem:[#allocation3 + $0x70] sm:$0xff] %vm1006, %v939
        %1022 = vst.msk [vmem:[#allocation3 + $0x78] sm:$0xff] %vm1006, %v941
        %1023 = vst.msk [vmem:[#allocation3 + $0x80] sm:$0xff] %vm1006, %v943
        %1024 = vst.msk [vmem:[#allocation3 + $0x88] sm:$0xff] %vm1006, %v945
        %1025 = vst.msk [vmem:[#allocation3 + $0x90] sm:$0xff] %vm1006, %v947
        %1026 = vst.msk [vmem:[#allocation3 + $0x98] sm:$0xff] %vm1006, %v949
        %1027 = vst.msk [vmem:[#allocation3 + $0xa0] sm:$0xff] %vm1006, %v951
        %1028 = vst.msk [vmem:[#allocation3 + $0xa8] sm:$0xff] %vm1006, %v953
        %1029 = vst.msk [vmem:[#allocation3 + $0xb0] sm:$0xff] %vm1006, %v955
        %1030 = vst.msk [vmem:[#allocation3 + $0xb8] sm:$0xff] %vm1006, %v957
        %1031 = vst.msk [vmem:[#allocation3 + $0xc0] sm:$0xff] %vm1006, %v959
        %1032 = vst.msk [vmem:[#allocation3 + $0xc8] sm:$0xff] %vm1006, %v961
        %1033 = vst.msk [vmem:[#allocation3 + $0xd0] sm:$0xff] %vm1006, %v963
        %1034 = vst.msk [vmem:[#allocation3 + $0xd8] sm:$0xff] %vm1006, %v965
        %1035 = vst.msk [vmem:[#allocation3 + $0xe0] sm:$0xff] %vm1006, %v967
        %1036 = vst.msk [vmem:[#allocation3 + $0xe8] sm:$0xff] %vm1006, %v969
        %1037 = vst.msk [vmem:[#allocation3 + $0xf0] sm:$0xff] %vm1006, %v971
        %1038 = vst.msk [vmem:[#allocation3 + $0xf8] sm:$0xff] %vm1006, %v973
        %v1039 = vld [vmem:[%s556] sm:$0xff]
        %v1040 = vld [vmem:[%s556 + $0x8] sm:$0xff]
        %v1041 = vld [vmem:[%s556 + $0x18] sm:$0xff]
        %v1042 = vld [vmem:[%s556 + $0x20] sm:$0xff]
        %v1043 = vld [vmem:[%s556 + $0x30] sm:$0xff]
        %v1044 = vld [vmem:[%s556 + $0x38] sm:$0xff]
        %v1045 = vld [vmem:[%s556 + $0x48] sm:$0xff]
        %v1046 = vld [vmem:[%s556 + $0x50] sm:$0xff]
        %v1047 = vld [vmem:[%s556 + $0x60] sm:$0xff]
        %v1048 = vld [vmem:[%s556 + $0x68] sm:$0xff]
        %v1049 = vld [vmem:[%s556 + $0x78] sm:$0xff]
        %v1050 = vld [vmem:[%s556 + $0x80] sm:$0xff]
        %v1051 = vld [vmem:[%s556 + $0x90] sm:$0xff]
        %v1052 = vld [vmem:[%s556 + $0x98] sm:$0xff]
        %v1053 = vld [vmem:[%s556 + $0xa8] sm:$0xff]
        %v1054 = vld [vmem:[%s556 + $0xb0] sm:$0xff]
        %v1055 = vld [vmem:[%s556 + $0xc0] sm:$0xff]
        %v1056 = vld [vmem:[%s556 + $0xc8] sm:$0xff]
        %v1057 = vld [vmem:[%s556 + $0xd8] sm:$0xff]
        %v1058 = vld [vmem:[%s556 + $0xe0] sm:$0xff]
        %v1059 = vld [vmem:[%s556 + $0xf0] sm:$0xff]
        %v1060 = vld [vmem:[%s556 + $0xf8] sm:$0xff]
        %v1061 = vld [vmem:[%s556 + $0x108] sm:$0xff]
        %v1062 = vld [vmem:[%s556 + $0x110] sm:$0xff]
        %v1063 = vld [vmem:[%s556 + $0x120] sm:$0xff]
        %v1064 = vld [vmem:[%s556 + $0x128] sm:$0xff]
        %v1065 = vld [vmem:[%s556 + $0x138] sm:$0xff]
        %v1066 = vld [vmem:[%s556 + $0x140] sm:$0xff]
        %v1067 = vld [vmem:[%s556 + $0x150] sm:$0xff]
        %v1068 = vld [vmem:[%s556 + $0x158] sm:$0xff]
        %v1069 = vld [vmem:[%s556 + $0x168] sm:$0xff]
        %v1070 = vld [vmem:[%s556 + $0x170] sm:$0xff]
        %1103 = vrot.lane.b32.xlu0 %v1039, 9
        %v1104 = vpop.permute.xlu0 %1103
        %1105 = vrot.lane.b32.xlu0 %v1040, 9
        %v1106 = vpop.permute.xlu0 %1105
        %1107 = vrot.lane.b32.xlu0 %v1041, 9
        %v1108 = vpop.permute.xlu0 %1107
        %1109 = vrot.lane.b32.xlu0 %v1042, 9
        %v1110 = vpop.permute.xlu0 %1109
        %1111 = vrot.lane.b32.xlu0 %v1043, 9
        %v1112 = vpop.permute.xlu0 %1111
        %1113 = vrot.lane.b32.xlu0 %v1044, 9
        %v1114 = vpop.permute.xlu0 %1113
        %1115 = vrot.lane.b32.xlu0 %v1045, 9
        %v1116 = vpop.permute.xlu0 %1115
        %1117 = vrot.lane.b32.xlu0 %v1046, 9
        %v1118 = vpop.permute.xlu0 %1117
        %1119 = vrot.lane.b32.xlu0 %v1047, 9
        %v1120 = vpop.permute.xlu0 %1119
        %1121 = vrot.lane.b32.xlu0 %v1048, 9
        %v1122 = vpop.permute.xlu0 %1121
        %1123 = vrot.lane.b32.xlu0 %v1049, 9
        %v1124 = vpop.permute.xlu0 %1123
        %1125 = vrot.lane.b32.xlu0 %v1050, 9
        %v1126 = vpop.permute.xlu0 %1125
        %1127 = vrot.lane.b32.xlu0 %v1051, 9
        %v1128 = vpop.permute.xlu0 %1127
        %1129 = vrot.lane.b32.xlu0 %v1052, 9
        %v1130 = vpop.permute.xlu0 %1129
        %1131 = vrot.lane.b32.xlu0 %v1053, 9
        %v1132 = vpop.permute.xlu0 %1131
        %1133 = vrot.lane.b32.xlu0 %v1054, 9
        %v1134 = vpop.permute.xlu0 %1133
        %1135 = vrot.lane.b32.xlu0 %v1055, 9
        %v1136 = vpop.permute.xlu0 %1135
        %1137 = vrot.lane.b32.xlu0 %v1056, 9
        %v1138 = vpop.permute.xlu0 %1137
        %1139 = vrot.lane.b32.xlu0 %v1057, 9
        %v1140 = vpop.permute.xlu0 %1139
        %1141 = vrot.lane.b32.xlu0 %v1058, 9
        %v1142 = vpop.permute.xlu0 %1141
        %1143 = vrot.lane.b32.xlu0 %v1059, 9
        %v1144 = vpop.permute.xlu0 %1143
        %1145 = vrot.lane.b32.xlu0 %v1060, 9
        %v1146 = vpop.permute.xlu0 %1145
        %1147 = vrot.lane.b32.xlu0 %v1061, 9
        %v1148 = vpop.permute.xlu0 %1147
        %1149 = vrot.lane.b32.xlu0 %v1062, 9
        %v1150 = vpop.permute.xlu0 %1149
        %1151 = vrot.lane.b32.xlu0 %v1063, 9
        %v1152 = vpop.permute.xlu0 %1151
        %1153 = vrot.lane.b32.xlu0 %v1064, 9
        %v1154 = vpop.permute.xlu0 %1153
        %1155 = vrot.lane.b32.xlu0 %v1065, 9
        %v1156 = vpop.permute.xlu0 %1155
        %1157 = vrot.lane.b32.xlu0 %v1066, 9
        %v1158 = vpop.permute.xlu0 %1157
        %1159 = vrot.lane.b32.xlu0 %v1067, 9
        %v1160 = vpop.permute.xlu0 %1159
        %1161 = vrot.lane.b32.xlu0 %v1068, 9
        %v1162 = vpop.permute.xlu0 %1161
        %1163 = vrot.lane.b32.xlu0 %v1069, 9
        %v1164 = vpop.permute.xlu0 %1163
        %1165 = vrot.lane.b32.xlu0 %v1070, 9
        %v1166 = vpop.permute.xlu0 %1165
        %vm1199 = vcmask 97352
        %1200 = vst.msk [vmem:[#allocation3] sm:$0xff] %vm1199, %v1104
        %1201 = vst.msk [vmem:[#allocation3 + $0x8] sm:$0xff] %vm1199, %v1106
        %1202 = vst.msk [vmem:[#allocation3 + $0x10] sm:$0xff] %vm1199, %v1108
        %1203 = vst.msk [vmem:[#allocation3 + $0x18] sm:$0xff] %vm1199, %v1110
        %1204 = vst.msk [vmem:[#allocation3 + $0x20] sm:$0xff] %vm1199, %v1112
        %1205 = vst.msk [vmem:[#allocation3 + $0x28] sm:$0xff] %vm1199, %v1114
        %1206 = vst.msk [vmem:[#allocation3 + $0x30] sm:$0xff] %vm1199, %v1116
        %1207 = vst.msk [vmem:[#allocation3 + $0x38] sm:$0xff] %vm1199, %v1118
        %1208 = vst.msk [vmem:[#allocation3 + $0x40] sm:$0xff] %vm1199, %v1120
        %1209 = vst.msk [vmem:[#allocation3 + $0x48] sm:$0xff] %vm1199, %v1122
        %1210 = vst.msk [vmem:[#allocation3 + $0x50] sm:$0xff] %vm1199, %v1124
        %1211 = vst.msk [vmem:[#allocation3 + $0x58] sm:$0xff] %vm1199, %v1126
        %1212 = vst.msk [vmem:[#allocation3 + $0x60] sm:$0xff] %vm1199, %v1128
        %1213 = vst.msk [vmem:[#allocation3 + $0x68] sm:$0xff] %vm1199, %v1130
        %1214 = vst.msk [vmem:[#allocation3 + $0x70] sm:$0xff] %vm1199, %v1132
        %1215 = vst.msk [vmem:[#allocation3 + $0x78] sm:$0xff] %vm1199, %v1134
        %1216 = vst.msk [vmem:[#allocation3 + $0x80] sm:$0xff] %vm1199, %v1136
        %1217 = vst.msk [vmem:[#allocation3 + $0x88] sm:$0xff] %vm1199, %v1138
        %1218 = vst.msk [vmem:[#allocation3 + $0x90] sm:$0xff] %vm1199, %v1140
        %1219 = vst.msk [vmem:[#allocation3 + $0x98] sm:$0xff] %vm1199, %v1142
        %1220 = vst.msk [vmem:[#allocation3 + $0xa0] sm:$0xff] %vm1199, %v1144
        %1221 = vst.msk [vmem:[#allocation3 + $0xa8] sm:$0xff] %vm1199, %v1146
        %1222 = vst.msk [vmem:[#allocation3 + $0xb0] sm:$0xff] %vm1199, %v1148
        %1223 = vst.msk [vmem:[#allocation3 + $0xb8] sm:$0xff] %vm1199, %v1150
        %1224 = vst.msk [vmem:[#allocation3 + $0xc0] sm:$0xff] %vm1199, %v1152
        %1225 = vst.msk [vmem:[#allocation3 + $0xc8] sm:$0xff] %vm1199, %v1154
        %1226 = vst.msk [vmem:[#allocation3 + $0xd0] sm:$0xff] %vm1199, %v1156
        %1227 = vst.msk [vmem:[#allocation3 + $0xd8] sm:$0xff] %vm1199, %v1158
        %1228 = vst.msk [vmem:[#allocation3 + $0xe0] sm:$0xff] %vm1199, %v1160
        %1229 = vst.msk [vmem:[#allocation3 + $0xe8] sm:$0xff] %vm1199, %v1162
        %1230 = vst.msk [vmem:[#allocation3 + $0xf0] sm:$0xff] %vm1199, %v1164
        %1231 = vst.msk [vmem:[#allocation3 + $0xf8] sm:$0xff] %vm1199, %v1166
        %v1232 = vld [vmem:[%s556 + $0x1] sm:$0xff]
        %v1233 = vld [vmem:[%s556 + $0x9] sm:$0xff]
        %v1234 = vld [vmem:[%s556 + $0x19] sm:$0xff]
        %v1235 = vld [vmem:[%s556 + $0x21] sm:$0xff]
        %v1236 = vld [vmem:[%s556 + $0x31] sm:$0xff]
        %v1237 = vld [vmem:[%s556 + $0x39] sm:$0xff]
        %v1238 = vld [vmem:[%s556 + $0x49] sm:$0xff]
        %v1239 = vld [vmem:[%s556 + $0x51] sm:$0xff]
        %v1240 = vld [vmem:[%s556 + $0x61] sm:$0xff]
        %v1241 = vld [vmem:[%s556 + $0x69] sm:$0xff]
        %v1242 = vld [vmem:[%s556 + $0x79] sm:$0xff]
        %v1243 = vld [vmem:[%s556 + $0x81] sm:$0xff]
        %v1244 = vld [vmem:[%s556 + $0x91] sm:$0xff]
        %v1245 = vld [vmem:[%s556 + $0x99] sm:$0xff]
        %v1246 = vld [vmem:[%s556 + $0xa9] sm:$0xff]
        %v1247 = vld [vmem:[%s556 + $0xb1] sm:$0xff]
        %v1248 = vld [vmem:[%s556 + $0xc1] sm:$0xff]
        %v1249 = vld [vmem:[%s556 + $0xc9] sm:$0xff]
        %v1250 = vld [vmem:[%s556 + $0xd9] sm:$0xff]
        %v1251 = vld [vmem:[%s556 + $0xe1] sm:$0xff]
        %v1252 = vld [vmem:[%s556 + $0xf1] sm:$0xff]
        %v1253 = vld [vmem:[%s556 + $0xf9] sm:$0xff]
        %v1254 = vld [vmem:[%s556 + $0x109] sm:$0xff]
        %v1255 = vld [vmem:[%s556 + $0x111] sm:$0xff]
        %v1256 = vld [vmem:[%s556 + $0x121] sm:$0xff]
        %v1257 = vld [vmem:[%s556 + $0x129] sm:$0xff]
        %v1258 = vld [vmem:[%s556 + $0x139] sm:$0xff]
        %v1259 = vld [vmem:[%s556 + $0x141] sm:$0xff]
        %v1260 = vld [vmem:[%s556 + $0x151] sm:$0xff]
        %v1261 = vld [vmem:[%s556 + $0x159] sm:$0xff]
        %v1262 = vld [vmem:[%s556 + $0x169] sm:$0xff]
        %v1263 = vld [vmem:[%s556 + $0x171] sm:$0xff]
        %1296 = vrot.lane.b32.xlu0 %v1232, 12
        %v1297 = vpop.permute.xlu0 %1296
        %1298 = vrot.lane.b32.xlu0 %v1233, 12
        %v1299 = vpop.permute.xlu0 %1298
        %1300 = vrot.lane.b32.xlu0 %v1234, 12
        %v1301 = vpop.permute.xlu0 %1300
        %1302 = vrot.lane.b32.xlu0 %v1235, 12
        %v1303 = vpop.permute.xlu0 %1302
        %1304 = vrot.lane.b32.xlu0 %v1236, 12
        %v1305 = vpop.permute.xlu0 %1304
        %1306 = vrot.lane.b32.xlu0 %v1237, 12
        %v1307 = vpop.permute.xlu0 %1306
        %1308 = vrot.lane.b32.xlu0 %v1238, 12
        %v1309 = vpop.permute.xlu0 %1308
        %1310 = vrot.lane.b32.xlu0 %v1239, 12
        %v1311 = vpop.permute.xlu0 %1310
        %1312 = vrot.lane.b32.xlu0 %v1240, 12
        %v1313 = vpop.permute.xlu0 %1312
        %1314 = vrot.lane.b32.xlu0 %v1241, 12
        %v1315 = vpop.permute.xlu0 %1314
        %1316 = vrot.lane.b32.xlu0 %v1242, 12
        %v1317 = vpop.permute.xlu0 %1316
        %1318 = vrot.lane.b32.xlu0 %v1243, 12
        %v1319 = vpop.permute.xlu0 %1318
        %1320 = vrot.lane.b32.xlu0 %v1244, 12
        %v1321 = vpop.permute.xlu0 %1320
        %1322 = vrot.lane.b32.xlu0 %v1245, 12
        %v1323 = vpop.permute.xlu0 %1322
        %1324 = vrot.lane.b32.xlu0 %v1246, 12
        %v1325 = vpop.permute.xlu0 %1324
        %1326 = vrot.lane.b32.xlu0 %v1247, 12
        %v1327 = vpop.permute.xlu0 %1326
        %1328 = vrot.lane.b32.xlu0 %v1248, 12
        %v1329 = vpop.permute.xlu0 %1328
        %1330 = vrot.lane.b32.xlu0 %v1249, 12
        %v1331 = vpop.permute.xlu0 %1330
        %1332 = vrot.lane.b32.xlu0 %v1250, 12
        %v1333 = vpop.permute.xlu0 %1332
        %1334 = vrot.lane.b32.xlu0 %v1251, 12
        %v1335 = vpop.permute.xlu0 %1334
        %1336 = vrot.lane.b32.xlu0 %v1252, 12
        %v1337 = vpop.permute.xlu0 %1336
        %1338 = vrot.lane.b32.xlu0 %v1253, 12
        %v1339 = vpop.permute.xlu0 %1338
        %1340 = vrot.lane.b32.xlu0 %v1254, 12
        %v1341 = vpop.permute.xlu0 %1340
        %1342 = vrot.lane.b32.xlu0 %v1255, 12
        %v1343 = vpop.permute.xlu0 %1342
        %1344 = vrot.lane.b32.xlu0 %v1256, 12
        %v1345 = vpop.permute.xlu0 %1344
        %1346 = vrot.lane.b32.xlu0 %v1257, 12
        %v1347 = vpop.permute.xlu0 %1346
        %1348 = vrot.lane.b32.xlu0 %v1258, 12
        %v1349 = vpop.permute.xlu0 %1348
        %1350 = vrot.lane.b32.xlu0 %v1259, 12
        %v1351 = vpop.permute.xlu0 %1350
        %1352 = vrot.lane.b32.xlu0 %v1260, 12
        %v1353 = vpop.permute.xlu0 %1352
        %1354 = vrot.lane.b32.xlu0 %v1261, 12
        %v1355 = vpop.permute.xlu0 %1354
        %1356 = vrot.lane.b32.xlu0 %v1262, 12
        %v1357 = vpop.permute.xlu0 %1356
        %1358 = vrot.lane.b32.xlu0 %v1263, 12
        %v1359 = vpop.permute.xlu0 %1358
        %vm1392 = vcmask 121952
        %1393 = vst.msk [vmem:[#allocation3] sm:$0xff] %vm1392, %v1297
        %1394 = vst.msk [vmem:[#allocation3 + $0x8] sm:$0xff] %vm1392, %v1299
        %1395 = vst.msk [vmem:[#allocation3 + $0x10] sm:$0xff] %vm1392, %v1301
        %1396 = vst.msk [vmem:[#allocation3 + $0x18] sm:$0xff] %vm1392, %v1303
        %1397 = vst.msk [vmem:[#allocation3 + $0x20] sm:$0xff] %vm1392, %v1305
        %1398 = vst.msk [vmem:[#allocation3 + $0x28] sm:$0xff] %vm1392, %v1307
        %1399 = vst.msk [vmem:[#allocation3 + $0x30] sm:$0xff] %vm1392, %v1309
        %1400 = vst.msk [vmem:[#allocation3 + $0x38] sm:$0xff] %vm1392, %v1311
        %1401 = vst.msk [vmem:[#allocation3 + $0x40] sm:$0xff] %vm1392, %v1313
        %1402 = vst.msk [vmem:[#allocation3 + $0x48] sm:$0xff] %vm1392, %v1315
        %1403 = vst.msk [vmem:[#allocation3 + $0x50] sm:$0xff] %vm1392, %v1317
        %1404 = vst.msk [vmem:[#allocation3 + $0x58] sm:$0xff] %vm1392, %v1319
        %1405 = vst.msk [vmem:[#allocation3 + $0x60] sm:$0xff] %vm1392, %v1321
        %1406 = vst.msk [vmem:[#allocation3 + $0x68] sm:$0xff] %vm1392, %v1323
        %1407 = vst.msk [vmem:[#allocation3 + $0x70] sm:$0xff] %vm1392, %v1325
        %1408 = vst.msk [vmem:[#allocation3 + $0x78] sm:$0xff] %vm1392, %v1327
        %1409 = vst.msk [vmem:[#allocation3 + $0x80] sm:$0xff] %vm1392, %v1329
        %1410 = vst.msk [vmem:[#allocation3 + $0x88] sm:$0xff] %vm1392, %v1331
        %1411 = vst.msk [vmem:[#allocation3 + $0x90] sm:$0xff] %vm1392, %v1333
        %1412 = vst.msk [vmem:[#allocation3 + $0x98] sm:$0xff] %vm1392, %v1335
        %1413 = vst.msk [vmem:[#allocation3 + $0xa0] sm:$0xff] %vm1392, %v1337
        %1414 = vst.msk [vmem:[#allocation3 + $0xa8] sm:$0xff] %vm1392, %v1339
        %1415 = vst.msk [vmem:[#allocation3 + $0xb0] sm:$0xff] %vm1392, %v1341
        %1416 = vst.msk [vmem:[#allocation3 + $0xb8] sm:$0xff] %vm1392, %v1343
        %1417 = vst.msk [vmem:[#allocation3 + $0xc0] sm:$0xff] %vm1392, %v1345
        %1418 = vst.msk [vmem:[#allocation3 + $0xc8] sm:$0xff] %vm1392, %v1347
        %1419 = vst.msk [vmem:[#allocation3 + $0xd0] sm:$0xff] %vm1392, %v1349
        %1420 = vst.msk [vmem:[#allocation3 + $0xd8] sm:$0xff] %vm1392, %v1351
        %1421 = vst.msk [vmem:[#allocation3 + $0xe0] sm:$0xff] %vm1392, %v1353
        %1422 = vst.msk [vmem:[#allocation3 + $0xe8] sm:$0xff] %vm1392, %v1355
        %1423 = vst.msk [vmem:[#allocation3 + $0xf0] sm:$0xff] %vm1392, %v1357
        %1424 = vst.msk [vmem:[#allocation3 + $0xf8] sm:$0xff] %vm1392, %v1359
        %v1425 = vld [vmem:[%s556 + $0x2] sm:$0xff]
        %v1426 = vld [vmem:[%s556 + $0xa] sm:$0xff]
        %v1427 = vld [vmem:[%s556 + $0x1a] sm:$0xff]
        %v1428 = vld [vmem:[%s556 + $0x22] sm:$0xff]
        %v1429 = vld [vmem:[%s556 + $0x32] sm:$0xff]
        %v1430 = vld [vmem:[%s556 + $0x3a] sm:$0xff]
        %v1431 = vld [vmem:[%s556 + $0x4a] sm:$0xff]
        %v1432 = vld [vmem:[%s556 + $0x52] sm:$0xff]
        %v1433 = vld [vmem:[%s556 + $0x62] sm:$0xff]
        %v1434 = vld [vmem:[%s556 + $0x6a] sm:$0xff]
        %v1435 = vld [vmem:[%s556 + $0x7a] sm:$0xff]
        %v1436 = vld [vmem:[%s556 + $0x82] sm:$0xff]
        %v1437 = vld [vmem:[%s556 + $0x92] sm:$0xff]
        %v1438 = vld [vmem:[%s556 + $0x9a] sm:$0xff]
        %v1439 = vld [vmem:[%s556 + $0xaa] sm:$0xff]
        %v1440 = vld [vmem:[%s556 + $0xb2] sm:$0xff]
        %v1441 = vld [vmem:[%s556 + $0xc2] sm:$0xff]
        %v1442 = vld [vmem:[%s556 + $0xca] sm:$0xff]
        %v1443 = vld [vmem:[%s556 + $0xda] sm:$0xff]
        %v1444 = vld [vmem:[%s556 + $0xe2] sm:$0xff]
        %v1445 = vld [vmem:[%s556 + $0xf2] sm:$0xff]
        %v1446 = vld [vmem:[%s556 + $0xfa] sm:$0xff]
        %v1447 = vld [vmem:[%s556 + $0x10a] sm:$0xff]
        %v1448 = vld [vmem:[%s556 + $0x112] sm:$0xff]
        %v1449 = vld [vmem:[%s556 + $0x122] sm:$0xff]
        %v1450 = vld [vmem:[%s556 + $0x12a] sm:$0xff]
        %v1451 = vld [vmem:[%s556 + $0x13a] sm:$0xff]
        %v1452 = vld [vmem:[%s556 + $0x142] sm:$0xff]
        %v1453 = vld [vmem:[%s556 + $0x152] sm:$0xff]
        %v1454 = vld [vmem:[%s556 + $0x15a] sm:$0xff]
        %v1455 = vld [vmem:[%s556 + $0x16a] sm:$0xff]
        %v1456 = vld [vmem:[%s556 + $0x172] sm:$0xff]
        %1489 = vrot.lane.b32.xlu0 %v1425, 15
        %v1490 = vpop.permute.xlu0 %1489
        %1491 = vrot.lane.b32.xlu0 %v1426, 15
        %v1492 = vpop.permute.xlu0 %1491
        %1493 = vrot.lane.b32.xlu0 %v1427, 15
        %v1494 = vpop.permute.xlu0 %1493
        %1495 = vrot.lane.b32.xlu0 %v1428, 15
        %v1496 = vpop.permute.xlu0 %1495
        %1497 = vrot.lane.b32.xlu0 %v1429, 15
        %v1498 = vpop.permute.xlu0 %1497
        %1499 = vrot.lane.b32.xlu0 %v1430, 15
        %v1500 = vpop.permute.xlu0 %1499
        %1501 = vrot.lane.b32.xlu0 %v1431, 15
        %v1502 = vpop.permute.xlu0 %1501
        %1503 = vrot.lane.b32.xlu0 %v1432, 15
        %v1504 = vpop.permute.xlu0 %1503
        %1505 = vrot.lane.b32.xlu0 %v1433, 15
        %v1506 = vpop.permute.xlu0 %1505
        %1507 = vrot.lane.b32.xlu0 %v1434, 15
        %v1508 = vpop.permute.xlu0 %1507
        %1509 = vrot.lane.b32.xlu0 %v1435, 15
        %v1510 = vpop.permute.xlu0 %1509
        %1511 = vrot.lane.b32.xlu0 %v1436, 15
        %v1512 = vpop.permute.xlu0 %1511
        %1513 = vrot.lane.b32.xlu0 %v1437, 15
        %v1514 = vpop.permute.xlu0 %1513
        %1515 = vrot.lane.b32.xlu0 %v1438, 15
        %v1516 = vpop.permute.xlu0 %1515
        %1517 = vrot.lane.b32.xlu0 %v1439, 15
        %v1518 = vpop.permute.xlu0 %1517
        %1519 = vrot.lane.b32.xlu0 %v1440, 15
        %v1520 = vpop.permute.xlu0 %1519
        %1521 = vrot.lane.b32.xlu0 %v1441, 15
        %v1522 = vpop.permute.xlu0 %1521
        %1523 = vrot.lane.b32.xlu0 %v1442, 15
        %v1524 = vpop.permute.xlu0 %1523
        %1525 = vrot.lane.b32.xlu0 %v1443, 15
        %v1526 = vpop.permute.xlu0 %1525
        %1527 = vrot.lane.b32.xlu0 %v1444, 15
        %v1528 = vpop.permute.xlu0 %1527
        %1529 = vrot.lane.b32.xlu0 %v1445, 15
        %v1530 = vpop.permute.xlu0 %1529
        %1531 = vrot.lane.b32.xlu0 %v1446, 15
        %v1532 = vpop.permute.xlu0 %1531
        %1533 = vrot.lane.b32.xlu0 %v1447, 15
        %v1534 = vpop.permute.xlu0 %1533
        %1535 = vrot.lane.b32.xlu0 %v1448, 15
        %v1536 = vpop.permute.xlu0 %1535
        %1537 = vrot.lane.b32.xlu0 %v1449, 15
        %v1538 = vpop.permute.xlu0 %1537
        %1539 = vrot.lane.b32.xlu0 %v1450, 15
        %v1540 = vpop.permute.xlu0 %1539
        %1541 = vrot.lane.b32.xlu0 %v1451, 15
        %v1542 = vpop.permute.xlu0 %1541
        %1543 = vrot.lane.b32.xlu0 %v1452, 15
        %v1544 = vpop.permute.xlu0 %1543
        %1545 = vrot.lane.b32.xlu0 %v1453, 15
        %v1546 = vpop.permute.xlu0 %1545
        %1547 = vrot.lane.b32.xlu0 %v1454, 15
        %v1548 = vpop.permute.xlu0 %1547
        %1549 = vrot.lane.b32.xlu0 %v1455, 15
        %v1550 = vpop.permute.xlu0 %1549
        %1551 = vrot.lane.b32.xlu0 %v1456, 15
        %v1552 = vpop.permute.xlu0 %1551
        %vm1585 = vcmask 146552
        %1586 = vst.msk [vmem:[#allocation3] sm:$0xff] %vm1585, %v1490
        %1587 = vst.msk [vmem:[#allocation3 + $0x8] sm:$0xff] %vm1585, %v1492
        %1588 = vst.msk [vmem:[#allocation3 + $0x10] sm:$0xff] %vm1585, %v1494
        %1589 = vst.msk [vmem:[#allocation3 + $0x18] sm:$0xff] %vm1585, %v1496
        %1590 = vst.msk [vmem:[#allocation3 + $0x20] sm:$0xff] %vm1585, %v1498
        %1591 = vst.msk [vmem:[#allocation3 + $0x28] sm:$0xff] %vm1585, %v1500
        %1592 = vst.msk [vmem:[#allocation3 + $0x30] sm:$0xff] %vm1585, %v1502
        %1593 = vst.msk [vmem:[#allocation3 + $0x38] sm:$0xff] %vm1585, %v1504
        %1594 = vst.msk [vmem:[#allocation3 + $0x40] sm:$0xff] %vm1585, %v1506
        %1595 = vst.msk [vmem:[#allocation3 + $0x48] sm:$0xff] %vm1585, %v1508
        %1596 = vst.msk [vmem:[#allocation3 + $0x50] sm:$0xff] %vm1585, %v1510
        %1597 = vst.msk [vmem:[#allocation3 + $0x58] sm:$0xff] %vm1585, %v1512
        %1598 = vst.msk [vmem:[#allocation3 + $0x60] sm:$0xff] %vm1585, %v1514
        %1599 = vst.msk [vmem:[#allocation3 + $0x68] sm:$0xff] %vm1585, %v1516
        %1600 = vst.msk [vmem:[#allocation3 + $0x70] sm:$0xff] %vm1585, %v1518
        %1601 = vst.msk [vmem:[#allocation3 + $0x78] sm:$0xff] %vm1585, %v1520
        %1602 = vst.msk [vmem:[#allocation3 + $0x80] sm:$0xff] %vm1585, %v1522
        %1603 = vst.msk [vmem:[#allocation3 + $0x88] sm:$0xff] %vm1585, %v1524
        %1604 = vst.msk [vmem:[#allocation3 + $0x90] sm:$0xff] %vm1585, %v1526
        %1605 = vst.msk [vmem:[#allocation3 + $0x98] sm:$0xff] %vm1585, %v1528
        %1606 = vst.msk [vmem:[#allocation3 + $0xa0] sm:$0xff] %vm1585, %v1530
        %1607 = vst.msk [vmem:[#allocation3 + $0xa8] sm:$0xff] %vm1585, %v1532
        %1608 = vst.msk [vmem:[#allocation3 + $0xb0] sm:$0xff] %vm1585, %v1534
        %1609 = vst.msk [vmem:[#allocation3 + $0xb8] sm:$0xff] %vm1585, %v1536
        %1610 = vst.msk [vmem:[#allocation3 + $0xc0] sm:$0xff] %vm1585, %v1538
        %1611 = vst.msk [vmem:[#allocation3 + $0xc8] sm:$0xff] %vm1585, %v1540
        %1612 = vst.msk [vmem:[#allocation3 + $0xd0] sm:$0xff] %vm1585, %v1542
        %1613 = vst.msk [vmem:[#allocation3 + $0xd8] sm:$0xff] %vm1585, %v1544
        %1614 = vst.msk [vmem:[#allocation3 + $0xe0] sm:$0xff] %vm1585, %v1546
        %1615 = vst.msk [vmem:[#allocation3 + $0xe8] sm:$0xff] %vm1585, %v1548
        %1616 = vst.msk [vmem:[#allocation3 + $0xf0] sm:$0xff] %vm1585, %v1550
        %1617 = vst.msk [vmem:[#allocation3 + $0xf8] sm:$0xff] %vm1585, %v1552
        %s1618 = scalar_lea.vmem [#allocation2], 48
        %v1619 = vld [vmem:[%s1618] sm:$0xff]
        %v1620 = vld [vmem:[%s1618 + $0x8] sm:$0xff]
        %v1621 = vld [vmem:[%s1618 + $0x18] sm:$0xff]
        %v1622 = vld [vmem:[%s1618 + $0x20] sm:$0xff]
        %v1623 = vld [vmem:[%s1618 + $0x30] sm:$0xff]
        %v1624 = vld [vmem:[%s1618 + $0x38] sm:$0xff]
        %v1625 = vld [vmem:[%s1618 + $0x48] sm:$0xff]
        %v1626 = vld [vmem:[%s1618 + $0x50] sm:$0xff]
        %v1627 = vld [vmem:[%s1618 + $0x60] sm:$0xff]
        %v1628 = vld [vmem:[%s1618 + $0x68] sm:$0xff]
        %v1629 = vld [vmem:[%s1618 + $0x78] sm:$0xff]
        %v1630 = vld [vmem:[%s1618 + $0x80] sm:$0xff]
        %v1631 = vld [vmem:[%s1618 + $0x90] sm:$0xff]
        %v1632 = vld [vmem:[%s1618 + $0x98] sm:$0xff]
        %v1633 = vld [vmem:[%s1618 + $0xa8] sm:$0xff]
        %v1634 = vld [vmem:[%s1618 + $0xb0] sm:$0xff]
        %v1635 = vld [vmem:[%s1618 + $0xc0] sm:$0xff]
        %v1636 = vld [vmem:[%s1618 + $0xc8] sm:$0xff]
        %v1637 = vld [vmem:[%s1618 + $0xd8] sm:$0xff]
        %v1638 = vld [vmem:[%s1618 + $0xe0] sm:$0xff]
        %v1639 = vld [vmem:[%s1618 + $0xf0] sm:$0xff]
        %v1640 = vld [vmem:[%s1618 + $0xf8] sm:$0xff]
        %v1641 = vld [vmem:[%s1618 + $0x108] sm:$0xff]
        %v1642 = vld [vmem:[%s1618 + $0x110] sm:$0xff]
        %v1643 = vld [vmem:[%s1618 + $0x120] sm:$0xff]
        %v1644 = vld [vmem:[%s1618 + $0x128] sm:$0xff]
        %v1645 = vld [vmem:[%s1618 + $0x138] sm:$0xff]
        %v1646 = vld [vmem:[%s1618 + $0x140] sm:$0xff]
        %v1647 = vld [vmem:[%s1618 + $0x150] sm:$0xff]
        %v1648 = vld [vmem:[%s1618 + $0x158] sm:$0xff]
        %v1649 = vld [vmem:[%s1618 + $0x168] sm:$0xff]
        %v1650 = vld [vmem:[%s1618 + $0x170] sm:$0xff]
        %1683 = vrot.lane.b32.xlu0 %v1619, 18
        %v1684 = vpop.permute.xlu0 %1683
        %1685 = vrot.lane.b32.xlu0 %v1620, 18
        %v1686 = vpop.permute.xlu0 %1685
        %1687 = vrot.lane.b32.xlu0 %v1621, 18
        %v1688 = vpop.permute.xlu0 %1687
        %1689 = vrot.lane.b32.xlu0 %v1622, 18
        %v1690 = vpop.permute.xlu0 %1689
        %1691 = vrot.lane.b32.xlu0 %v1623, 18
        %v1692 = vpop.permute.xlu0 %1691
        %1693 = vrot.lane.b32.xlu0 %v1624, 18
        %v1694 = vpop.permute.xlu0 %1693
        %1695 = vrot.lane.b32.xlu0 %v1625, 18
        %v1696 = vpop.permute.xlu0 %1695
        %1697 = vrot.lane.b32.xlu0 %v1626, 18
        %v1698 = vpop.permute.xlu0 %1697
        %1699 = vrot.lane.b32.xlu0 %v1627, 18
        %v1700 = vpop.permute.xlu0 %1699
        %1701 = vrot.lane.b32.xlu0 %v1628, 18
        %v1702 = vpop.permute.xlu0 %1701
        %1703 = vrot.lane.b32.xlu0 %v1629, 18
        %v1704 = vpop.permute.xlu0 %1703
        %1705 = vrot.lane.b32.xlu0 %v1630, 18
        %v1706 = vpop.permute.xlu0 %1705
        %1707 = vrot.lane.b32.xlu0 %v1631, 18
        %v1708 = vpop.permute.xlu0 %1707
        %1709 = vrot.lane.b32.xlu0 %v1632, 18
        %v1710 = vpop.permute.xlu0 %1709
        %1711 = vrot.lane.b32.xlu0 %v1633, 18
        %v1712 = vpop.permute.xlu0 %1711
        %1713 = vrot.lane.b32.xlu0 %v1634, 18
        %v1714 = vpop.permute.xlu0 %1713
        %1715 = vrot.lane.b32.xlu0 %v1635, 18
        %v1716 = vpop.permute.xlu0 %1715
        %1717 = vrot.lane.b32.xlu0 %v1636, 18
        %v1718 = vpop.permute.xlu0 %1717
        %1719 = vrot.lane.b32.xlu0 %v1637, 18
        %v1720 = vpop.permute.xlu0 %1719
        %1721 = vrot.lane.b32.xlu0 %v1638, 18
        %v1722 = vpop.permute.xlu0 %1721
        %1723 = vrot.lane.b32.xlu0 %v1639, 18
        %v1724 = vpop.permute.xlu0 %1723
        %1725 = vrot.lane.b32.xlu0 %v1640, 18
        %v1726 = vpop.permute.xlu0 %1725
        %1727 = vrot.lane.b32.xlu0 %v1641, 18
        %v1728 = vpop.permute.xlu0 %1727
        %1729 = vrot.lane.b32.xlu0 %v1642, 18
        %v1730 = vpop.permute.xlu0 %1729
        %1731 = vrot.lane.b32.xlu0 %v1643, 18
        %v1732 = vpop.permute.xlu0 %1731
        %1733 = vrot.lane.b32.xlu0 %v1644, 18
        %v1734 = vpop.permute.xlu0 %1733
        %1735 = vrot.lane.b32.xlu0 %v1645, 18
        %v1736 = vpop.permute.xlu0 %1735
        %1737 = vrot.lane.b32.xlu0 %v1646, 18
        %v1738 = vpop.permute.xlu0 %1737
        %1739 = vrot.lane.b32.xlu0 %v1647, 18
        %v1740 = vpop.permute.xlu0 %1739
        %1741 = vrot.lane.b32.xlu0 %v1648, 18
        %v1742 = vpop.permute.xlu0 %1741
        %1743 = vrot.lane.b32.xlu0 %v1649, 18
        %v1744 = vpop.permute.xlu0 %1743
        %1745 = vrot.lane.b32.xlu0 %v1650, 18
        %v1746 = vpop.permute.xlu0 %1745
        %vm1779 = vcmask 171152
        %1780 = vst.msk [vmem:[#allocation3] sm:$0xff] %vm1779, %v1684
        %1781 = vst.msk [vmem:[#allocation3 + $0x8] sm:$0xff] %vm1779, %v1686
        %1782 = vst.msk [vmem:[#allocation3 + $0x10] sm:$0xff] %vm1779, %v1688
        %1783 = vst.msk [vmem:[#allocation3 + $0x18] sm:$0xff] %vm1779, %v1690
        %1784 = vst.msk [vmem:[#allocation3 + $0x20] sm:$0xff] %vm1779, %v1692
        %1785 = vst.msk [vmem:[#allocation3 + $0x28] sm:$0xff] %vm1779, %v1694
        %1786 = vst.msk [vmem:[#allocation3 + $0x30] sm:$0xff] %vm1779, %v1696
        %1787 = vst.msk [vmem:[#allocation3 + $0x38] sm:$0xff] %vm1779, %v1698
        %1788 = vst.msk [vmem:[#allocation3 + $0x40] sm:$0xff] %vm1779, %v1700
        %1789 = vst.msk [vmem:[#allocation3 + $0x48] sm:$0xff] %vm1779, %v1702
        %1790 = vst.msk [vmem:[#allocation3 + $0x50] sm:$0xff] %vm1779, %v1704
        %1791 = vst.msk [vmem:[#allocation3 + $0x58] sm:$0xff] %vm1779, %v1706
        %1792 = vst.msk [vmem:[#allocation3 + $0x60] sm:$0xff] %vm1779, %v1708
        %1793 = vst.msk [vmem:[#allocation3 + $0x68] sm:$0xff] %vm1779, %v1710
        %1794 = vst.msk [vmem:[#allocation3 + $0x70] sm:$0xff] %vm1779, %v1712
        %1795 = vst.msk [vmem:[#allocation3 + $0x78] sm:$0xff] %vm1779, %v1714
        %1796 = vst.msk [vmem:[#allocation3 + $0x80] sm:$0xff] %vm1779, %v1716
        %1797 = vst.msk [vmem:[#allocation3 + $0x88] sm:$0xff] %vm1779, %v1718
        %1798 = vst.msk [vmem:[#allocation3 + $0x90] sm:$0xff] %vm1779, %v1720
        %1799 = vst.msk [vmem:[#allocation3 + $0x98] sm:$0xff] %vm1779, %v1722
        %1800 = vst.msk [vmem:[#allocation3 + $0xa0] sm:$0xff] %vm1779, %v1724
        %1801 = vst.msk [vmem:[#allocation3 + $0xa8] sm:$0xff] %vm1779, %v1726
        %1802 = vst.msk [vmem:[#allocation3 + $0xb0] sm:$0xff] %vm1779, %v1728
        %1803 = vst.msk [vmem:[#allocation3 + $0xb8] sm:$0xff] %vm1779, %v1730
        %1804 = vst.msk [vmem:[#allocation3 + $0xc0] sm:$0xff] %vm1779, %v1732
        %1805 = vst.msk [vmem:[#allocation3 + $0xc8] sm:$0xff] %vm1779, %v1734
        %1806 = vst.msk [vmem:[#allocation3 + $0xd0] sm:$0xff] %vm1779, %v1736
        %1807 = vst.msk [vmem:[#allocation3 + $0xd8] sm:$0xff] %vm1779, %v1738
        %1808 = vst.msk [vmem:[#allocation3 + $0xe0] sm:$0xff] %vm1779, %v1740
        %1809 = vst.msk [vmem:[#allocation3 + $0xe8] sm:$0xff] %vm1779, %v1742
        %1810 = vst.msk [vmem:[#allocation3 + $0xf0] sm:$0xff] %vm1779, %v1744
        %1811 = vst.msk [vmem:[#allocation3 + $0xf8] sm:$0xff] %vm1779, %v1746
        %v1812 = vld [vmem:[%s1618 + $0x1] sm:$0xff]
        %v1813 = vld [vmem:[%s1618 + $0x9] sm:$0xff]
        %v1814 = vld [vmem:[%s1618 + $0x19] sm:$0xff]
        %v1815 = vld [vmem:[%s1618 + $0x21] sm:$0xff]
        %v1816 = vld [vmem:[%s1618 + $0x31] sm:$0xff]
        %v1817 = vld [vmem:[%s1618 + $0x39] sm:$0xff]
        %v1818 = vld [vmem:[%s1618 + $0x49] sm:$0xff]
        %v1819 = vld [vmem:[%s1618 + $0x51] sm:$0xff]
        %v1820 = vld [vmem:[%s1618 + $0x61] sm:$0xff]
        %v1821 = vld [vmem:[%s1618 + $0x69] sm:$0xff]
        %v1822 = vld [vmem:[%s1618 + $0x79] sm:$0xff]
        %v1823 = vld [vmem:[%s1618 + $0x81] sm:$0xff]
        %v1824 = vld [vmem:[%s1618 + $0x91] sm:$0xff]
        %v1825 = vld [vmem:[%s1618 + $0x99] sm:$0xff]
        %v1826 = vld [vmem:[%s1618 + $0xa9] sm:$0xff]
        %v1827 = vld [vmem:[%s1618 + $0xb1] sm:$0xff]
        %v1828 = vld [vmem:[%s1618 + $0xc1] sm:$0xff]
        %v1829 = vld [vmem:[%s1618 + $0xc9] sm:$0xff]
        %v1830 = vld [vmem:[%s1618 + $0xd9] sm:$0xff]
        %v1831 = vld [vmem:[%s1618 + $0xe1] sm:$0xff]
        %v1832 = vld [vmem:[%s1618 + $0xf1] sm:$0xff]
        %v1833 = vld [vmem:[%s1618 + $0xf9] sm:$0xff]
        %v1834 = vld [vmem:[%s1618 + $0x109] sm:$0xff]
        %v1835 = vld [vmem:[%s1618 + $0x111] sm:$0xff]
        %v1836 = vld [vmem:[%s1618 + $0x121] sm:$0xff]
        %v1837 = vld [vmem:[%s1618 + $0x129] sm:$0xff]
        %v1838 = vld [vmem:[%s1618 + $0x139] sm:$0xff]
        %v1839 = vld [vmem:[%s1618 + $0x141] sm:$0xff]
        %v1840 = vld [vmem:[%s1618 + $0x151] sm:$0xff]
        %v1841 = vld [vmem:[%s1618 + $0x159] sm:$0xff]
        %v1842 = vld [vmem:[%s1618 + $0x169] sm:$0xff]
        %v1843 = vld [vmem:[%s1618 + $0x171] sm:$0xff]
        %1876 = vrot.lane.b32.xlu0 %v1812, 21
        %v1877 = vpop.permute.xlu0 %1876
        %1878 = vrot.lane.b32.xlu0 %v1813, 21
        %v1879 = vpop.permute.xlu0 %1878
        %1880 = vrot.lane.b32.xlu0 %v1814, 21
        %v1881 = vpop.permute.xlu0 %1880
        %1882 = vrot.lane.b32.xlu0 %v1815, 21
        %v1883 = vpop.permute.xlu0 %1882
        %1884 = vrot.lane.b32.xlu0 %v1816, 21
        %v1885 = vpop.permute.xlu0 %1884
        %1886 = vrot.lane.b32.xlu0 %v1817, 21
        %v1887 = vpop.permute.xlu0 %1886
        %1888 = vrot.lane.b32.xlu0 %v1818, 21
        %v1889 = vpop.permute.xlu0 %1888
        %1890 = vrot.lane.b32.xlu0 %v1819, 21
        %v1891 = vpop.permute.xlu0 %1890
        %1892 = vrot.lane.b32.xlu0 %v1820, 21
        %v1893 = vpop.permute.xlu0 %1892
        %1894 = vrot.lane.b32.xlu0 %v1821, 21
        %v1895 = vpop.permute.xlu0 %1894
        %1896 = vrot.lane.b32.xlu0 %v1822, 21
        %v1897 = vpop.permute.xlu0 %1896
        %1898 = vrot.lane.b32.xlu0 %v1823, 21
        %v1899 = vpop.permute.xlu0 %1898
        %1900 = vrot.lane.b32.xlu0 %v1824, 21
        %v1901 = vpop.permute.xlu0 %1900
        %1902 = vrot.lane.b32.xlu0 %v1825, 21
        %v1903 = vpop.permute.xlu0 %1902
        %1904 = vrot.lane.b32.xlu0 %v1826, 21
        %v1905 = vpop.permute.xlu0 %1904
        %1906 = vrot.lane.b32.xlu0 %v1827, 21
        %v1907 = vpop.permute.xlu0 %1906
        %1908 = vrot.lane.b32.xlu0 %v1828, 21
        %v1909 = vpop.permute.xlu0 %1908
        %1910 = vrot.lane.b32.xlu0 %v1829, 21
        %v1911 = vpop.permute.xlu0 %1910
        %1912 = vrot.lane.b32.xlu0 %v1830, 21
        %v1913 = vpop.permute.xlu0 %1912
        %1914 = vrot.lane.b32.xlu0 %v1831, 21
        %v1915 = vpop.permute.xlu0 %1914
        %1916 = vrot.lane.b32.xlu0 %v1832, 21
        %v1917 = vpop.permute.xlu0 %1916
        %1918 = vrot.lane.b32.xlu0 %v1833, 21
        %v1919 = vpop.permute.xlu0 %1918
        %1920 = vrot.lane.b32.xlu0 %v1834, 21
        %v1921 = vpop.permute.xlu0 %1920
        %1922 = vrot.lane.b32.xlu0 %v1835, 21
        %v1923 = vpop.permute.xlu0 %1922
        %1924 = vrot.lane.b32.xlu0 %v1836, 21
        %v1925 = vpop.permute.xlu0 %1924
        %1926 = vrot.lane.b32.xlu0 %v1837, 21
        %v1927 = vpop.permute.xlu0 %1926
        %1928 = vrot.lane.b32.xlu0 %v1838, 21
        %v1929 = vpop.permute.xlu0 %1928
        %1930 = vrot.lane.b32.xlu0 %v1839, 21
        %v1931 = vpop.permute.xlu0 %1930
        %1932 = vrot.lane.b32.xlu0 %v1840, 21
        %v1933 = vpop.permute.xlu0 %1932
        %1934 = vrot.lane.b32.xlu0 %v1841, 21
        %v1935 = vpop.permute.xlu0 %1934
        %1936 = vrot.lane.b32.xlu0 %v1842, 21
        %v1937 = vpop.permute.xlu0 %1936
        %1938 = vrot.lane.b32.xlu0 %v1843, 21
        %v1939 = vpop.permute.xlu0 %1938
        %vm1972 = vcmask 195752
        %1973 = vst.msk [vmem:[#allocation3] sm:$0xff] %vm1972, %v1877
        %1974 = vst.msk [vmem:[#allocation3 + $0x8] sm:$0xff] %vm1972, %v1879
        %1975 = vst.msk [vmem:[#allocation3 + $0x10] sm:$0xff] %vm1972, %v1881
        %1976 = vst.msk [vmem:[#allocation3 + $0x18] sm:$0xff] %vm1972, %v1883
        %1977 = vst.msk [vmem:[#allocation3 + $0x20] sm:$0xff] %vm1972, %v1885
        %1978 = vst.msk [vmem:[#allocation3 + $0x28] sm:$0xff] %vm1972, %v1887
        %1979 = vst.msk [vmem:[#allocation3 + $0x30] sm:$0xff] %vm1972, %v1889
        %1980 = vst.msk [vmem:[#allocation3 + $0x38] sm:$0xff] %vm1972, %v1891
        %1981 = vst.msk [vmem:[#allocation3 + $0x40] sm:$0xff] %vm1972, %v1893
        %1982 = vst.msk [vmem:[#allocation3 + $0x48] sm:$0xff] %vm1972, %v1895
        %1983 = vst.msk [vmem:[#allocation3 + $0x50] sm:$0xff] %vm1972, %v1897
        %1984 = vst.msk [vmem:[#allocation3 + $0x58] sm:$0xff] %vm1972, %v1899
        %1985 = vst.msk [vmem:[#allocation3 + $0x60] sm:$0xff] %vm1972, %v1901
        %1986 = vst.msk [vmem:[#allocation3 + $0x68] sm:$0xff] %vm1972, %v1903
        %1987 = vst.msk [vmem:[#allocation3 + $0x70] sm:$0xff] %vm1972, %v1905
        %1988 = vst.msk [vmem:[#allocation3 + $0x78] sm:$0xff] %vm1972, %v1907
        %1989 = vst.msk [vmem:[#allocation3 + $0x80] sm:$0xff] %vm1972, %v1909
        %1990 = vst.msk [vmem:[#allocation3 + $0x88] sm:$0xff] %vm1972, %v1911
        %1991 = vst.msk [vmem:[#allocation3 + $0x90] sm:$0xff] %vm1972, %v1913
        %1992 = vst.msk [vmem:[#allocation3 + $0x98] sm:$0xff] %vm1972, %v1915
        %1993 = vst.msk [vmem:[#allocation3 + $0xa0] sm:$0xff] %vm1972, %v1917
        %1994 = vst.msk [vmem:[#allocation3 + $0xa8] sm:$0xff] %vm1972, %v1919
        %1995 = vst.msk [vmem:[#allocation3 + $0xb0] sm:$0xff] %vm1972, %v1921
        %1996 = vst.msk [vmem:[#allocation3 + $0xb8] sm:$0xff] %vm1972, %v1923
        %1997 = vst.msk [vmem:[#allocation3 + $0xc0] sm:$0xff] %vm1972, %v1925
        %1998 = vst.msk [vmem:[#allocation3 + $0xc8] sm:$0xff] %vm1972, %v1927
        %1999 = vst.msk [vmem:[#allocation3 + $0xd0] sm:$0xff] %vm1972, %v1929
        %2000 = vst.msk [vmem:[#allocation3 + $0xd8] sm:$0xff] %vm1972, %v1931
        %2001 = vst.msk [vmem:[#allocation3 + $0xe0] sm:$0xff] %vm1972, %v1933
        %2002 = vst.msk [vmem:[#allocation3 + $0xe8] sm:$0xff] %vm1972, %v1935
        %2003 = vst.msk [vmem:[#allocation3 + $0xf0] sm:$0xff] %vm1972, %v1937
        %2004 = vst.msk [vmem:[#allocation3 + $0xf8] sm:$0xff] %vm1972, %v1939
        %v2005 = vld [vmem:[%s1618 + $0x2] sm:$0xff]
        %v2006 = vld [vmem:[%s1618 + $0xa] sm:$0xff]
        %v2007 = vld [vmem:[%s1618 + $0x1a] sm:$0xff]
        %v2008 = vld [vmem:[%s1618 + $0x22] sm:$0xff]
        %v2009 = vld [vmem:[%s1618 + $0x32] sm:$0xff]
        %v2010 = vld [vmem:[%s1618 + $0x3a] sm:$0xff]
        %v2011 = vld [vmem:[%s1618 + $0x4a] sm:$0xff]
        %v2012 = vld [vmem:[%s1618 + $0x52] sm:$0xff]
        %v2013 = vld [vmem:[%s1618 + $0x62] sm:$0xff]
        %v2014 = vld [vmem:[%s1618 + $0x6a] sm:$0xff]
        %v2015 = vld [vmem:[%s1618 + $0x7a] sm:$0xff]
        %v2016 = vld [vmem:[%s1618 + $0x82] sm:$0xff]
        %v2017 = vld [vmem:[%s1618 + $0x92] sm:$0xff]
        %v2018 = vld [vmem:[%s1618 + $0x9a] sm:$0xff]
        %v2019 = vld [vmem:[%s1618 + $0xaa] sm:$0xff]
        %v2020 = vld [vmem:[%s1618 + $0xb2] sm:$0xff]
        %v2021 = vld [vmem:[%s1618 + $0xc2] sm:$0xff]
        %v2022 = vld [vmem:[%s1618 + $0xca] sm:$0xff]
        %v2023 = vld [vmem:[%s1618 + $0xda] sm:$0xff]
        %v2024 = vld [vmem:[%s1618 + $0xe2] sm:$0xff]
        %v2025 = vld [vmem:[%s1618 + $0xf2] sm:$0xff]
        %v2026 = vld [vmem:[%s1618 + $0xfa] sm:$0xff]
        %v2027 = vld [vmem:[%s1618 + $0x10a] sm:$0xff]
        %v2028 = vld [vmem:[%s1618 + $0x112] sm:$0xff]
        %v2029 = vld [vmem:[%s1618 + $0x122] sm:$0xff]
        %v2030 = vld [vmem:[%s1618 + $0x12a] sm:$0xff]
        %v2031 = vld [vmem:[%s1618 + $0x13a] sm:$0xff]
        %v2032 = vld [vmem:[%s1618 + $0x142] sm:$0xff]
        %v2033 = vld [vmem:[%s1618 + $0x152] sm:$0xff]
        %v2034 = vld [vmem:[%s1618 + $0x15a] sm:$0xff]
        %v2035 = vld [vmem:[%s1618 + $0x16a] sm:$0xff]
        %v2036 = vld [vmem:[%s1618 + $0x172] sm:$0xff]
        %2069 = vrot.lane.b32.xlu0 %v2005, 24
        %v2070 = vpop.permute.xlu0 %2069
        %2071 = vrot.lane.b32.xlu0 %v2006, 24
        %v2072 = vpop.permute.xlu0 %2071
        %2073 = vrot.lane.b32.xlu0 %v2007, 24
        %v2074 = vpop.permute.xlu0 %2073
        %2075 = vrot.lane.b32.xlu0 %v2008, 24
        %v2076 = vpop.permute.xlu0 %2075
        %2077 = vrot.lane.b32.xlu0 %v2009, 24
        %v2078 = vpop.permute.xlu0 %2077
        %2079 = vrot.lane.b32.xlu0 %v2010, 24
        %v2080 = vpop.permute.xlu0 %2079
        %2081 = vrot.lane.b32.xlu0 %v2011, 24
        %v2082 = vpop.permute.xlu0 %2081
        %2083 = vrot.lane.b32.xlu0 %v2012, 24
        %v2084 = vpop.permute.xlu0 %2083
        %2085 = vrot.lane.b32.xlu0 %v2013, 24
        %v2086 = vpop.permute.xlu0 %2085
        %2087 = vrot.lane.b32.xlu0 %v2014, 24
        %v2088 = vpop.permute.xlu0 %2087
        %2089 = vrot.lane.b32.xlu0 %v2015, 24
        %v2090 = vpop.permute.xlu0 %2089
        %2091 = vrot.lane.b32.xlu0 %v2016, 24
        %v2092 = vpop.permute.xlu0 %2091
        %2093 = vrot.lane.b32.xlu0 %v2017, 24
        %v2094 = vpop.permute.xlu0 %2093
        %2095 = vrot.lane.b32.xlu0 %v2018, 24
        %v2096 = vpop.permute.xlu0 %2095
        %2097 = vrot.lane.b32.xlu0 %v2019, 24
        %v2098 = vpop.permute.xlu0 %2097
        %2099 = vrot.lane.b32.xlu0 %v2020, 24
        %v2100 = vpop.permute.xlu0 %2099
        %2101 = vrot.lane.b32.xlu0 %v2021, 24
        %v2102 = vpop.permute.xlu0 %2101
        %2103 = vrot.lane.b32.xlu0 %v2022, 24
        %v2104 = vpop.permute.xlu0 %2103
        %2105 = vrot.lane.b32.xlu0 %v2023, 24
        %v2106 = vpop.permute.xlu0 %2105
        %2107 = vrot.lane.b32.xlu0 %v2024, 24
        %v2108 = vpop.permute.xlu0 %2107
        %2109 = vrot.lane.b32.xlu0 %v2025, 24
        %v2110 = vpop.permute.xlu0 %2109
        %2111 = vrot.lane.b32.xlu0 %v2026, 24
        %v2112 = vpop.permute.xlu0 %2111
        %2113 = vrot.lane.b32.xlu0 %v2027, 24
        %v2114 = vpop.permute.xlu0 %2113
        %2115 = vrot.lane.b32.xlu0 %v2028, 24
        %v2116 = vpop.permute.xlu0 %2115
        %2117 = vrot.lane.b32.xlu0 %v2029, 24
        %v2118 = vpop.permute.xlu0 %2117
        %2119 = vrot.lane.b32.xlu0 %v2030, 24
        %v2120 = vpop.permute.xlu0 %2119
        %2121 = vrot.lane.b32.xlu0 %v2031, 24
        %v2122 = vpop.permute.xlu0 %2121
        %2123 = vrot.lane.b32.xlu0 %v2032, 24
        %v2124 = vpop.permute.xlu0 %2123
        %2125 = vrot.lane.b32.xlu0 %v2033, 24
        %v2126 = vpop.permute.xlu0 %2125
        %2127 = vrot.lane.b32.xlu0 %v2034, 24
        %v2128 = vpop.permute.xlu0 %2127
        %2129 = vrot.lane.b32.xlu0 %v2035, 24
        %v2130 = vpop.permute.xlu0 %2129
        %2131 = vrot.lane.b32.xlu0 %v2036, 24
        %v2132 = vpop.permute.xlu0 %2131
        %vm2165 = vcmask 220352
        %2166 = vst.msk [vmem:[#allocation3] sm:$0xff] %vm2165, %v2070
        %2167 = vst.msk [vmem:[#allocation3 + $0x8] sm:$0xff] %vm2165, %v2072
        %2168 = vst.msk [vmem:[#allocation3 + $0x10] sm:$0xff] %vm2165, %v2074
        %2169 = vst.msk [vmem:[#allocation3 + $0x18] sm:$0xff] %vm2165, %v2076
        %2170 = vst.msk [vmem:[#allocation3 + $0x20] sm:$0xff] %vm2165, %v2078
        %2171 = vst.msk [vmem:[#allocation3 + $0x28] sm:$0xff] %vm2165, %v2080
        %2172 = vst.msk [vmem:[#allocation3 + $0x30] sm:$0xff] %vm2165, %v2082
        %2173 = vst.msk [vmem:[#allocation3 + $0x38] sm:$0xff] %vm2165, %v2084
        %2174 = vst.msk [vmem:[#allocation3 + $0x40] sm:$0xff] %vm2165, %v2086
        %2175 = vst.msk [vmem:[#allocation3 + $0x48] sm:$0xff] %vm2165, %v2088
        %2176 = vst.msk [vmem:[#allocation3 + $0x50] sm:$0xff] %vm2165, %v2090
        %2177 = vst.msk [vmem:[#allocation3 + $0x58] sm:$0xff] %vm2165, %v2092
        %2178 = vst.msk [vmem:[#allocation3 + $0x60] sm:$0xff] %vm2165, %v2094
        %2179 = vst.msk [vmem:[#allocation3 + $0x68] sm:$0xff] %vm2165, %v2096
        %2180 = vst.msk [vmem:[#allocation3 + $0x70] sm:$0xff] %vm2165, %v2098
        %2181 = vst.msk [vmem:[#allocation3 + $0x78] sm:$0xff] %vm2165, %v2100
        %2182 = vst.msk [vmem:[#allocation3 + $0x80] sm:$0xff] %vm2165, %v2102
        %2183 = vst.msk [vmem:[#allocation3 + $0x88] sm:$0xff] %vm2165, %v2104
        %2184 = vst.msk [vmem:[#allocation3 + $0x90] sm:$0xff] %vm2165, %v2106
        %2185 = vst.msk [vmem:[#allocation3 + $0x98] sm:$0xff] %vm2165, %v2108
        %2186 = vst.msk [vmem:[#allocation3 + $0xa0] sm:$0xff] %vm2165, %v2110
        %2187 = vst.msk [vmem:[#allocation3 + $0xa8] sm:$0xff] %vm2165, %v2112
        %2188 = vst.msk [vmem:[#allocation3 + $0xb0] sm:$0xff] %vm2165, %v2114
        %2189 = vst.msk [vmem:[#allocation3 + $0xb8] sm:$0xff] %vm2165, %v2116
        %2190 = vst.msk [vmem:[#allocation3 + $0xc0] sm:$0xff] %vm2165, %v2118
        %2191 = vst.msk [vmem:[#allocation3 + $0xc8] sm:$0xff] %vm2165, %v2120
        %2192 = vst.msk [vmem:[#allocation3 + $0xd0] sm:$0xff] %vm2165, %v2122
        %2193 = vst.msk [vmem:[#allocation3 + $0xd8] sm:$0xff] %vm2165, %v2124
        %2194 = vst.msk [vmem:[#allocation3 + $0xe0] sm:$0xff] %vm2165, %v2126
        %2195 = vst.msk [vmem:[#allocation3 + $0xe8] sm:$0xff] %vm2165, %v2128
        %2196 = vst.msk [vmem:[#allocation3 + $0xf0] sm:$0xff] %vm2165, %v2130
        %2197 = vst.msk [vmem:[#allocation3 + $0xf8] sm:$0xff] %vm2165, %v2132
        %v2198 = vld [vmem:[#allocation3] sm:$0xff]
        %v2199 = vld [vmem:[#allocation3 + $0x8] sm:$0xff]
        %v2200 = vld [vmem:[#allocation3 + $0x10] sm:$0xff]
        %v2201 = vld [vmem:[#allocation3 + $0x18] sm:$0xff]
        %v2202 = vld [vmem:[#allocation3 + $0x20] sm:$0xff]
        %v2203 = vld [vmem:[#allocation3 + $0x28] sm:$0xff]
        %v2204 = vld [vmem:[#allocation3 + $0x30] sm:$0xff]
        %v2205 = vld [vmem:[#allocation3 + $0x38] sm:$0xff]
        %v2206 = vld [vmem:[#allocation3 + $0x40] sm:$0xff]
        %v2207 = vld [vmem:[#allocation3 + $0x48] sm:$0xff]
        %v2208 = vld [vmem:[#allocation3 + $0x50] sm:$0xff]
        %v2209 = vld [vmem:[#allocation3 + $0x58] sm:$0xff]
        %v2210 = vld [vmem:[#allocation3 + $0x60] sm:$0xff]
        %v2211 = vld [vmem:[#allocation3 + $0x68] sm:$0xff]
        %v2212 = vld [vmem:[#allocation3 + $0x70] sm:$0xff]
        %v2213 = vld [vmem:[#allocation3 + $0x78] sm:$0xff]
        %v2214 = vld [vmem:[#allocation3 + $0x80] sm:$0xff]
        %v2215 = vld [vmem:[#allocation3 + $0x88] sm:$0xff]
        %v2216 = vld [vmem:[#allocation3 + $0x90] sm:$0xff]
        %v2217 = vld [vmem:[#allocation3 + $0x98] sm:$0xff]
        %v2218 = vld [vmem:[#allocation3 + $0xa0] sm:$0xff]
        %v2219 = vld [vmem:[#allocation3 + $0xa8] sm:$0xff]
        %v2220 = vld [vmem:[#allocation3 + $0xb0] sm:$0xff]
        %v2221 = vld [vmem:[#allocation3 + $0xb8] sm:$0xff]
        %v2222 = vld [vmem:[#allocation3 + $0xc0] sm:$0xff]
        %v2223 = vld [vmem:[#allocation3 + $0xc8] sm:$0xff]
        %v2224 = vld [vmem:[#allocation3 + $0xd0] sm:$0xff]
        %v2225 = vld [vmem:[#allocation3 + $0xd8] sm:$0xff]
        %v2226 = vld [vmem:[#allocation3 + $0xe0] sm:$0xff]
        %v2227 = vld [vmem:[#allocation3 + $0xe8] sm:$0xff]
        %v2228 = vld [vmem:[#allocation3 + $0xf0] sm:$0xff]
        %v2229 = vld [vmem:[#allocation3 + $0xf8] sm:$0xff]
        %v2230 = vpack.c.bf16 %v2199, %v2198
        %v2231 = vpack.c.bf16 %v2201, %v2200
        %v2232 = vpack.c.bf16 %v2203, %v2202
        %v2233 = vpack.c.bf16 %v2205, %v2204
        %v2234 = vpack.c.bf16 %v2207, %v2206
        %v2235 = vpack.c.bf16 %v2209, %v2208
        %v2236 = vpack.c.bf16 %v2211, %v2210
        %v2237 = vpack.c.bf16 %v2213, %v2212
        %v2238 = vpack.c.bf16 %v2215, %v2214
        %v2239 = vpack.c.bf16 %v2217, %v2216
        %v2240 = vpack.c.bf16 %v2219, %v2218
        %v2241 = vpack.c.bf16 %v2221, %v2220
        %v2242 = vpack.c.bf16 %v2223, %v2222
        %v2243 = vpack.c.bf16 %v2225, %v2224
        %v2244 = vpack.c.bf16 %v2227, %v2226
        %v2245 = vpack.c.bf16 %v2229, %v2228
        %v2246 = vld [vmem:[%s1] sm:$0xf]
        %v2247 = vld [vmem:[%s1 + $0x4] sm:$0xf]
        %v2248 = vld [vmem:[%s1 + $0x8] sm:$0xf]
        %v2249 = vld [vmem:[%s1 + $0xc] sm:$0x3]
        %v2250 = vld [vmem:[%s2] sm:$0x1]
        %v2252 = vperm.slane %v2250, 0
        %v2258 = vunpack.c.l.b16 %v2246
        %v2259 = vunpack.c.l.b16 %v2247
        %v2260 = vunpack.c.l.b16 %v2248
        %v2261 = vunpack.c.l.b16 %v2249
        %v2262 = vpack.c.b16 %v2259, %v2258
        %v2263 = vpack.c.b16 %v2261, %v2260
        %vm2265 = vcmask 220160
        %v2267 = vsel %vm2265, %v2230, 0
        %v2270 = vsel %vm2265, %v2231, 0
        %v2273 = vsel %vm2265, %v2232, 0
        %v2276 = vsel %vm2265, %v2233, 0
        %v2279 = vsel %vm2265, %v2234, 0
        %v2282 = vsel %vm2265, %v2235, 0
        %v2285 = vsel %vm2265, %v2236, 0
        %v2288 = vsel %vm2265, %v2237, 0
        %v2291 = vsel %vm2265, %v2238, 0
        %v2294 = vsel %vm2265, %v2239, 0
        %v2297 = vsel %vm2265, %v2240, 0
        %v2300 = vsel %vm2265, %v2241, 0
        %v2303 = vsel %vm2265, %v2242, 0
        %v2306 = vsel %vm2265, %v2243, 0
        %v2309 = vsel %vm2265, %v2244, 0
        %v2312 = vsel %vm2265, %v2245, 0
        %vm2314 = vcmask 1044480
        %vm2315 = vcmask 1045504
        %v2316 = vsel %vm2314, 4294967295, 65535
        %v2317 = vsel %vm2315, %v2316, 0
        %v2319 = vand.u32 %v2263, %v2317
        %2321 = vmatpush.bf16.msra.mxu0 0
        %2322 = vmatpush.bf16.msra.mxu0 0
        %2323 = vmatpush.bf16.msra.mxu0 0
        %2324 = vmatpush.bf16.msra.mxu0 0
        %2325 = vmatpush.bf16.msra.mxu0 0
        %2326 = vmatpush.bf16.msra.mxu0 0
        %2327 = vmatpush.bf16.msra.mxu0 %v2319
        %2328 = vmatpush.bf16.msra.mxu0 %v2262
        %2329 = vmatmul.bf16.gmra.mxu0 %v2267
        %v2330 = vpop.f32.mrf.mxu0
        %v2331 = vadd.f32 %v2252, %v2330
        %v2332 = vpop.f32.mrf.mxu0
        %v2333 = vadd.f32 %v2252, %v2332
        %2334 = vmatmul.bf16.gmra.mxu0 %v2270
        %v2335 = vpop.f32.mrf.mxu0
        %v2336 = vadd.f32 %v2252, %v2335
        %v2337 = vpop.f32.mrf.mxu0
        %v2338 = vadd.f32 %v2252, %v2337
        %2339 = vmatmul.bf16.gmra.mxu0 %v2273
        %v2340 = vpop.f32.mrf.mxu0
        %v2341 = vadd.f32 %v2252, %v2340
        %v2342 = vpop.f32.mrf.mxu0
        %v2343 = vadd.f32 %v2252, %v2342
        %2344 = vmatmul.bf16.gmra.mxu0 %v2276
        %v2345 = vpop.f32.mrf.mxu0
        %v2346 = vadd.f32 %v2252, %v2345
        %v2347 = vpop.f32.mrf.mxu0
        %v2348 = vadd.f32 %v2252, %v2347
        %2349 = vmatmul.bf16.gmra.mxu0 %v2279
        %v2350 = vpop.f32.mrf.mxu0
        %v2351 = vadd.f32 %v2252, %v2350
        %v2352 = vpop.f32.mrf.mxu0
        %v2353 = vadd.f32 %v2252, %v2352
        %2354 = vmatmul.bf16.gmra.mxu0 %v2282
        %v2355 = vpop.f32.mrf.mxu0
        %v2356 = vadd.f32 %v2252, %v2355
        %v2357 = vpop.f32.mrf.mxu0
        %v2358 = vadd.f32 %v2252, %v2357
        %2359 = vmatmul.bf16.gmra.mxu0 %v2285
        %v2360 = vpop.f32.mrf.mxu0
        %v2361 = vadd.f32 %v2252, %v2360
        %v2362 = vpop.f32.mrf.mxu0
        %v2363 = vadd.f32 %v2252, %v2362
        %2364 = vmatmul.bf16.gmra.mxu0 %v2288
        %v2365 = vpop.f32.mrf.mxu0
        %v2366 = vadd.f32 %v2252, %v2365
        %v2367 = vpop.f32.mrf.mxu0
        %v2368 = vadd.f32 %v2252, %v2367
        %2369 = vmatmul.bf16.gmra.mxu0 %v2291
        %v2370 = vpop.f32.mrf.mxu0
        %v2371 = vadd.f32 %v2252, %v2370
        %v2372 = vpop.f32.mrf.mxu0
        %v2373 = vadd.f32 %v2252, %v2372
        %2374 = vmatmul.bf16.gmra.mxu0 %v2294
        %v2375 = vpop.f32.mrf.mxu0
        %v2376 = vadd.f32 %v2252, %v2375
        %v2377 = vpop.f32.mrf.mxu0
        %v2378 = vadd.f32 %v2252, %v2377
        %2379 = vmatmul.bf16.gmra.mxu0 %v2297
        %v2380 = vpop.f32.mrf.mxu0
        %v2381 = vadd.f32 %v2252, %v2380
        %v2382 = vpop.f32.mrf.mxu0
        %v2383 = vadd.f32 %v2252, %v2382
        %2384 = vmatmul.bf16.gmra.mxu0 %v2300
        %v2385 = vpop.f32.mrf.mxu0
        %v2386 = vadd.f32 %v2252, %v2385
        %v2387 = vpop.f32.mrf.mxu0
        %v2388 = vadd.f32 %v2252, %v2387
        %2389 = vmatmul.bf16.gmra.mxu0 %v2303
        %v2390 = vpop.f32.mrf.mxu0
        %v2391 = vadd.f32 %v2252, %v2390
        %v2392 = vpop.f32.mrf.mxu0
        %v2393 = vadd.f32 %v2252, %v2392
        %2394 = vmatmul.bf16.gmra.mxu0 %v2306
        %v2395 = vpop.f32.mrf.mxu0
        %v2396 = vadd.f32 %v2252, %v2395
        %v2397 = vpop.f32.mrf.mxu0
        %v2398 = vadd.f32 %v2252, %v2397
        %2399 = vmatmul.bf16.gmra.mxu0 %v2309
        %v2400 = vpop.f32.mrf.mxu0
        %v2401 = vadd.f32 %v2252, %v2400
        %v2402 = vpop.f32.mrf.mxu0
        %v2403 = vadd.f32 %v2252, %v2402
        %2404 = vmatmul.bf16.gmra.mxu0 %v2312
        %v2405 = vpop.f32.mrf.mxu0
        %v2406 = vadd.f32 %v2252, %v2405
        %v2407 = vpop.f32.mrf.mxu0
        %v2408 = vadd.f32 %v2252, %v2407
        %2409 = vdwg.mxu0
        %v2410 = vmax.f32 %v2331, 0.0
        %v2411 = vmax.f32 %v2333, 0.0
        %v2412 = vmax.f32 %v2336, 0.0
        %v2413 = vmax.f32 %v2338, 0.0
        %v2414 = vmax.f32 %v2341, 0.0
        %v2415 = vmax.f32 %v2343, 0.0
        %v2416 = vmax.f32 %v2346, 0.0
        %v2417 = vmax.f32 %v2348, 0.0
        %v2418 = vmax.f32 %v2351, 0.0
        %v2419 = vmax.f32 %v2353, 0.0
        %v2420 = vmax.f32 %v2356, 0.0
        %v2421 = vmax.f32 %v2358, 0.0
        %v2422 = vmax.f32 %v2361, 0.0
        %v2423 = vmax.f32 %v2363, 0.0
        %v2424 = vmax.f32 %v2366, 0.0
        %v2425 = vmax.f32 %v2368, 0.0
        %v2426 = vmax.f32 %v2371, 0.0
        %v2427 = vmax.f32 %v2373, 0.0
        %v2428 = vmax.f32 %v2376, 0.0
        %v2429 = vmax.f32 %v2378, 0.0
        %v2430 = vmax.f32 %v2381, 0.0
        %v2431 = vmax.f32 %v2383, 0.0
        %v2432 = vmax.f32 %v2386, 0.0
        %v2433 = vmax.f32 %v2388, 0.0
        %v2434 = vmax.f32 %v2391, 0.0
        %v2435 = vmax.f32 %v2393, 0.0
        %v2436 = vmax.f32 %v2396, 0.0
        %v2437 = vmax.f32 %v2398, 0.0
        %v2438 = vmax.f32 %v2401, 0.0
        %v2439 = vmax.f32 %v2403, 0.0
        %v2440 = vmax.f32 %v2406, 0.0
        %v2441 = vmax.f32 %v2408, 0.0
        %2442 = vst.msk [vmem:[#allocation4] sm:$0xff] %vm495, %v2410
        %2443 = vst.msk [vmem:[#allocation4 + $0x8] sm:$0xff] %vm495, %v2411
        %2444 = vst.msk [vmem:[#allocation4 + $0x10] sm:$0xff] %vm495, %v2412
        %2445 = vst.msk [vmem:[#allocation4 + $0x18] sm:$0xff] %vm495, %v2413
        %2446 = vst.msk [vmem:[#allocation4 + $0x20] sm:$0xff] %vm495, %v2414
        %2447 = vst.msk [vmem:[#allocation4 + $0x28] sm:$0xff] %vm495, %v2415
        %2448 = vst.msk [vmem:[#allocation4 + $0x30] sm:$0xff] %vm495, %v2416
        %2449 = vst.msk [vmem:[#allocation4 + $0x38] sm:$0xff] %vm495, %v2417
        %2450 = vst.msk [vmem:[#allocation4 + $0x40] sm:$0xff] %vm495, %v2418
        %2451 = vst.msk [vmem:[#allocation4 + $0x48] sm:$0xff] %vm495, %v2419
        %2452 = vst.msk [vmem:[#allocation4 + $0x50] sm:$0xff] %vm495, %v2420
        %2453 = vst.msk [vmem:[#allocation4 + $0x58] sm:$0xff] %vm495, %v2421
        %2454 = vst.msk [vmem:[#allocation4 + $0x60] sm:$0xff] %vm495, %v2422
        %2455 = vst.msk [vmem:[#allocation4 + $0x68] sm:$0xff] %vm495, %v2423
        %2456 = vst.msk [vmem:[#allocation4 + $0x70] sm:$0xff] %vm495, %v2424
        %2457 = vst.msk [vmem:[#allocation4 + $0x78] sm:$0xff] %vm495, %v2425
        %2458 = vst.msk [vmem:[#allocation4 + $0x80] sm:$0xff] %vm495, %v2426
        %2459 = vst.msk [vmem:[#allocation4 + $0x88] sm:$0xff] %vm495, %v2427
        %2460 = vst.msk [vmem:[#allocation4 + $0x90] sm:$0xff] %vm495, %v2428
        %2461 = vst.msk [vmem:[#allocation4 + $0x98] sm:$0xff] %vm495, %v2429
        %2462 = vst.msk [vmem:[#allocation4 + $0xa0] sm:$0xff] %vm495, %v2430
        %2463 = vst.msk [vmem:[#allocation4 + $0xa8] sm:$0xff] %vm495, %v2431
        %2464 = vst.msk [vmem:[#allocation4 + $0xb0] sm:$0xff] %vm495, %v2432
        %2465 = vst.msk [vmem:[#allocation4 + $0xb8] sm:$0xff] %vm495, %v2433
        %2466 = vst.msk [vmem:[#allocation4 + $0xc0] sm:$0xff] %vm495, %v2434
        %2467 = vst.msk [vmem:[#allocation4 + $0xc8] sm:$0xff] %vm495, %v2435
        %2468 = vst.msk [vmem:[#allocation4 + $0xd0] sm:$0xff] %vm495, %v2436
        %2469 = vst.msk [vmem:[#allocation4 + $0xd8] sm:$0xff] %vm495, %v2437
        %2470 = vst.msk [vmem:[#allocation4 + $0xe0] sm:$0xff] %vm495, %v2438
        %2471 = vst.msk [vmem:[#allocation4 + $0xe8] sm:$0xff] %vm495, %v2439
        %2472 = vst.msk [vmem:[#allocation4 + $0xf0] sm:$0xff] %vm495, %v2440
        %2473 = vst.msk [vmem:[#allocation4 + $0xf8] sm:$0xff] %vm495, %v2441
        %v2474 = vld [vmem:[#allocation4] sm:$0xff]
        %v2475 = vld [vmem:[#allocation4 + $0x8] sm:$0xff]
        %v2476 = vld [vmem:[#allocation4 + $0x10] sm:$0xff]
        %v2477 = vld [vmem:[#allocation4 + $0x18] sm:$0xff]
        %v2478 = vmax.f32 %v2474, %v2476
        %v2479 = vmax.f32 %v2475, %v2477
        %2480 = vst.msk [vmem:[#allocation5] sm:$0xff] %vm495, %v2478
        %2481 = vst.msk [vmem:[#allocation5 + $0x8] sm:$0xff] %vm495, %v2479
        %v2482 = vld [vmem:[#allocation4 + $0x20] sm:$0xff]
        %v2483 = vld [vmem:[#allocation4 + $0x28] sm:$0xff]
        %v2484 = vld [vmem:[#allocation4 + $0x30] sm:$0xff]
        %v2485 = vld [vmem:[#allocation4 + $0x38] sm:$0xff]
        %v2486 = vmax.f32 %v2482, %v2484
        %v2487 = vmax.f32 %v2483, %v2485
        %s2488 = scalar_lea.vmem [#allocation5], 16
        %2489 = vst.msk [vmem:[%s2488] sm:$0xff] %vm495, %v2486
        %2490 = vst.msk [vmem:[%s2488 + $0x8] sm:$0xff] %vm495, %v2487
        %v2491 = vld [vmem:[#allocation4 + $0x40] sm:$0xff]
        %v2492 = vld [vmem:[#allocation4 + $0x48] sm:$0xff]
        %v2493 = vld [vmem:[#allocation4 + $0x50] sm:$0xff]
        %v2494 = vld [vmem:[#allocation4 + $0x58] sm:$0xff]
        %v2495 = vmax.f32 %v2491, %v2493
        %v2496 = vmax.f32 %v2492, %v2494
        %s2497 = scalar_lea.vmem [#allocation5], 32
        %2498 = vst.msk [vmem:[%s2497] sm:$0xff] %vm495, %v2495
        %2499 = vst.msk [vmem:[%s2497 + $0x8] sm:$0xff] %vm495, %v2496
        %v2500 = vld [vmem:[#allocation4 + $0x60] sm:$0xff]
        %v2501 = vld [vmem:[#allocation4 + $0x68] sm:$0xff]
        %v2502 = vld [vmem:[#allocation4 + $0x70] sm:$0xff]
        %v2503 = vld [vmem:[#allocation4 + $0x78] sm:$0xff]
        %v2504 = vmax.f32 %v2500, %v2502
        %v2505 = vmax.f32 %v2501, %v2503
        %s2506 = scalar_lea.vmem [#allocation5], 48
        %2507 = vst.msk [vmem:[%s2506] sm:$0xff] %vm495, %v2504
        %2508 = vst.msk [vmem:[%s2506 + $0x8] sm:$0xff] %vm495, %v2505
        %v2509 = vld [vmem:[#allocation4 + $0x80] sm:$0xff]
        %v2510 = vld [vmem:[#allocation4 + $0x88] sm:$0xff]
        %v2511 = vld [vmem:[#allocation4 + $0x90] sm:$0xff]
        %v2512 = vld [vmem:[#allocation4 + $0x98] sm:$0xff]
        %v2513 = vmax.f32 %v2509, %v2511
        %v2514 = vmax.f32 %v2510, %v2512
        %s2515 = scalar_lea.vmem [#allocation5], 64
        %2516 = vst.msk [vmem:[%s2515] sm:$0xff] %vm495, %v2513
        %2517 = vst.msk [vmem:[%s2515 + $0x8] sm:$0xff] %vm495, %v2514
        %v2518 = vld [vmem:[#allocation4 + $0xa0] sm:$0xff]
        %v2519 = vld [vmem:[#allocation4 + $0xa8] sm:$0xff]
        %v2520 = vld [vmem:[#allocation4 + $0xb0] sm:$0xff]
        %v2521 = vld [vmem:[#allocation4 + $0xb8] sm:$0xff]
        %v2522 = vmax.f32 %v2518, %v2520
        %v2523 = vmax.f32 %v2519, %v2521
        %s2524 = scalar_lea.vmem [#allocation5], 80
        %2525 = vst.msk [vmem:[%s2524] sm:$0xff] %vm495, %v2522
        %2526 = vst.msk [vmem:[%s2524 + $0x8] sm:$0xff] %vm495, %v2523
        %v2527 = vld [vmem:[#allocation4 + $0xc0] sm:$0xff]
        %v2528 = vld [vmem:[#allocation4 + $0xc8] sm:$0xff]
        %v2529 = vld [vmem:[#allocation4 + $0xd0] sm:$0xff]
        %v2530 = vld [vmem:[#allocation4 + $0xd8] sm:$0xff]
        %v2531 = vmax.f32 %v2527, %v2529
        %v2532 = vmax.f32 %v2528, %v2530
        %s2533 = scalar_lea.vmem [#allocation5], 96
        %2534 = vst.msk [vmem:[%s2533] sm:$0xff] %vm495, %v2531
        %2535 = vst.msk [vmem:[%s2533 + $0x8] sm:$0xff] %vm495, %v2532
        %v2536 = vld [vmem:[#allocation4 + $0xe0] sm:$0xff]
        %v2537 = vld [vmem:[#allocation4 + $0xe8] sm:$0xff]
        %v2538 = vld [vmem:[#allocation4 + $0xf0] sm:$0xff]
        %v2539 = vld [vmem:[#allocation4 + $0xf8] sm:$0xff]
        %v2540 = vmax.f32 %v2536, %v2538
        %v2541 = vmax.f32 %v2537, %v2539
        %s2542 = scalar_lea.vmem [#allocation5], 112
        %2543 = vst.msk [vmem:[%s2542] sm:$0xff] %vm495, %v2540
        %2544 = vst.msk [vmem:[%s2542 + $0x8] sm:$0xff] %vm495, %v2541
        %v2545 = vld [vmem:[#allocation5] sm:$0x1]
        %v2546 = vld [vmem:[#allocation5 + $0x10] sm:$0x1]
        %v2547 = vld [vmem:[#allocation5 + $0x20] sm:$0x1]
        %v2548 = vld [vmem:[#allocation5 + $0x30] sm:$0x1]
        %v2549 = vld [vmem:[#allocation5 + $0x40] sm:$0x1]
        %v2550 = vld [vmem:[#allocation5 + $0x50] sm:$0x1]
        %v2551 = vld [vmem:[#allocation5 + $0x60] sm:$0x1]
        %v2552 = vld [vmem:[#allocation5 + $0x70] sm:$0x1]
        %v2553 = vld [vmem:[#allocation5 + $0x1] sm:$0x1]
        %v2554 = vld [vmem:[#allocation5 + $0x11] sm:$0x1]
        %v2555 = vld [vmem:[#allocation5 + $0x21] sm:$0x1]
        %v2556 = vld [vmem:[#allocation5 + $0x31] sm:$0x1]
        %v2557 = vld [vmem:[#allocation5 + $0x41] sm:$0x1]
        %v2558 = vld [vmem:[#allocation5 + $0x51] sm:$0x1]
        %v2559 = vld [vmem:[#allocation5 + $0x61] sm:$0x1]
        %v2560 = vld [vmem:[#allocation5 + $0x71] sm:$0x1]
        %v2561 = vmax.f32 %v2545, %v2553
        %v2562 = vmax.f32 %v2546, %v2554
        %v2563 = vmax.f32 %v2547, %v2555
        %v2564 = vmax.f32 %v2548, %v2556
        %v2565 = vmax.f32 %v2549, %v2557
        %v2566 = vmax.f32 %v2550, %v2558
        %v2567 = vmax.f32 %v2551, %v2559
        %v2568 = vmax.f32 %v2552, %v2560
        %s2569 = scalar_lea.vmem [#allocation6], 16
        %vm2570 = vcmask 253952
        %2571 = vst.msk [vmem:[%s2569 + $0x1] sm:$0x1] %vm2570, %v2561
        %2572 = vst.msk [vmem:[%s2569 + $0x11] sm:$0x1] %vm2570, %v2562
        %2573 = vst.msk [vmem:[%s2569 + $0x21] sm:$0x1] %vm2570, %v2563
        %2574 = vst.msk [vmem:[%s2569 + $0x31] sm:$0x1] %vm2570, %v2564
        %2575 = vst.msk [vmem:[%s2569 + $0x41] sm:$0x1] %vm2570, %v2565
        %2576 = vst.msk [vmem:[%s2569 + $0x51] sm:$0x1] %vm2570, %v2566
        %2577 = vst.msk [vmem:[%s2569 + $0x61] sm:$0x1] %vm2570, %v2567
        %2578 = vst.msk [vmem:[%s2569 + $0x71] sm:$0x1] %vm2570, %v2568
        %v2579 = vld [vmem:[#allocation5 + $0x2] sm:$0x1]
        %v2580 = vld [vmem:[#allocation5 + $0x12] sm:$0x1]
        %v2581 = vld [vmem:[#allocation5 + $0x22] sm:$0x1]
        %v2582 = vld [vmem:[#allocation5 + $0x32] sm:$0x1]
        %v2583 = vld [vmem:[#allocation5 + $0x42] sm:$0x1]
        %v2584 = vld [vmem:[#allocation5 + $0x52] sm:$0x1]
        %v2585 = vld [vmem:[#allocation5 + $0x62] sm:$0x1]
        %v2586 = vld [vmem:[#allocation5 + $0x72] sm:$0x1]
        %v2587 = vld [vmem:[#allocation5 + $0x3] sm:$0x1]
        %v2588 = vld [vmem:[#allocation5 + $0x13] sm:$0x1]
        %v2589 = vld [vmem:[#allocation5 + $0x23] sm:$0x1]
        %v2590 = vld [vmem:[#allocation5 + $0x33] sm:$0x1]
        %v2591 = vld [vmem:[#allocation5 + $0x43] sm:$0x1]
        %v2592 = vld [vmem:[#allocation5 + $0x53] sm:$0x1]
        %v2593 = vld [vmem:[#allocation5 + $0x63] sm:$0x1]
        %v2594 = vld [vmem:[#allocation5 + $0x73] sm:$0x1]
        %v2595 = vmax.f32 %v2579, %v2587
        %v2596 = vmax.f32 %v2580, %v2588
        %v2597 = vmax.f32 %v2581, %v2589
        %v2598 = vmax.f32 %v2582, %v2590
        %v2599 = vmax.f32 %v2583, %v2591
        %v2600 = vmax.f32 %v2584, %v2592
        %v2601 = vmax.f32 %v2585, %v2593
        %v2602 = vmax.f32 %v2586, %v2594
        %2603 = vst.msk [vmem:[%s2569 + $0x2] sm:$0x1] %vm2570, %v2595
        %2604 = vst.msk [vmem:[%s2569 + $0x12] sm:$0x1] %vm2570, %v2596
        %2605 = vst.msk [vmem:[%s2569 + $0x22] sm:$0x1] %vm2570, %v2597
        %2606 = vst.msk [vmem:[%s2569 + $0x32] sm:$0x1] %vm2570, %v2598
        %2607 = vst.msk [vmem:[%s2569 + $0x42] sm:$0x1] %vm2570, %v2599
        %2608 = vst.msk [vmem:[%s2569 + $0x52] sm:$0x1] %vm2570, %v2600
        %2609 = vst.msk [vmem:[%s2569 + $0x62] sm:$0x1] %vm2570, %v2601
        %2610 = vst.msk [vmem:[%s2569 + $0x72] sm:$0x1] %vm2570, %v2602
        %v2611 = vld [vmem:[#allocation5 + $0x4] sm:$0x1]
        %v2612 = vld [vmem:[#allocation5 + $0x14] sm:$0x1]
        %v2613 = vld [vmem:[#allocation5 + $0x24] sm:$0x1]
        %v2614 = vld [vmem:[#allocation5 + $0x34] sm:$0x1]
        %v2615 = vld [vmem:[#allocation5 + $0x44] sm:$0x1]
        %v2616 = vld [vmem:[#allocation5 + $0x54] sm:$0x1]
        %v2617 = vld [vmem:[#allocation5 + $0x64] sm:$0x1]
        %v2618 = vld [vmem:[#allocation5 + $0x74] sm:$0x1]
        %v2619 = vld [vmem:[#allocation5 + $0x5] sm:$0x1]
        %v2620 = vld [vmem:[#allocation5 + $0x15] sm:$0x1]
        %v2621 = vld [vmem:[#allocation5 + $0x25] sm:$0x1]
        %v2622 = vld [vmem:[#allocation5 + $0x35] sm:$0x1]
        %v2623 = vld [vmem:[#allocation5 + $0x45] sm:$0x1]
        %v2624 = vld [vmem:[#allocation5 + $0x55] sm:$0x1]
        %v2625 = vld [vmem:[#allocation5 + $0x65] sm:$0x1]
        %v2626 = vld [vmem:[#allocation5 + $0x75] sm:$0x1]
        %v2627 = vmax.f32 %v2611, %v2619
        %v2628 = vmax.f32 %v2612, %v2620
        %v2629 = vmax.f32 %v2613, %v2621
        %v2630 = vmax.f32 %v2614, %v2622
        %v2631 = vmax.f32 %v2615, %v2623
        %v2632 = vmax.f32 %v2616, %v2624
        %v2633 = vmax.f32 %v2617, %v2625
        %v2634 = vmax.f32 %v2618, %v2626
        %2635 = vst.msk [vmem:[%s2569 + $0x3] sm:$0x1] %vm2570, %v2627
        %2636 = vst.msk [vmem:[%s2569 + $0x13] sm:$0x1] %vm2570, %v2628
        %2637 = vst.msk [vmem:[%s2569 + $0x23] sm:$0x1] %vm2570, %v2629
        %2638 = vst.msk [vmem:[%s2569 + $0x33] sm:$0x1] %vm2570, %v2630
        %2639 = vst.msk [vmem:[%s2569 + $0x43] sm:$0x1] %vm2570, %v2631
        %2640 = vst.msk [vmem:[%s2569 + $0x53] sm:$0x1] %vm2570, %v2632
        %2641 = vst.msk [vmem:[%s2569 + $0x63] sm:$0x1] %vm2570, %v2633
        %2642 = vst.msk [vmem:[%s2569 + $0x73] sm:$0x1] %vm2570, %v2634
        %v2643 = vld [vmem:[#allocation5 + $0x6] sm:$0x1]
        %v2644 = vld [vmem:[#allocation5 + $0x16] sm:$0x1]
        %v2645 = vld [vmem:[#allocation5 + $0x26] sm:$0x1]
        %v2646 = vld [vmem:[#allocation5 + $0x36] sm:$0x1]
        %v2647 = vld [vmem:[#allocation5 + $0x46] sm:$0x1]
        %v2648 = vld [vmem:[#allocation5 + $0x56] sm:$0x1]
        %v2649 = vld [vmem:[#allocation5 + $0x66] sm:$0x1]
        %v2650 = vld [vmem:[#allocation5 + $0x76] sm:$0x1]
        %v2651 = vld [vmem:[#allocation5 + $0x7] sm:$0x1]
        %v2652 = vld [vmem:[#allocation5 + $0x17] sm:$0x1]
        %v2653 = vld [vmem:[#allocation5 + $0x27] sm:$0x1]
        %v2654 = vld [vmem:[#allocation5 + $0x37] sm:$0x1]
        %v2655 = vld [vmem:[#allocation5 + $0x47] sm:$0x1]
        %v2656 = vld [vmem:[#allocation5 + $0x57] sm:$0x1]
        %v2657 = vld [vmem:[#allocation5 + $0x67] sm:$0x1]
        %v2658 = vld [vmem:[#allocation5 + $0x77] sm:$0x1]
        %v2659 = vmax.f32 %v2643, %v2651
        %v2660 = vmax.f32 %v2644, %v2652
        %v2661 = vmax.f32 %v2645, %v2653
        %v2662 = vmax.f32 %v2646, %v2654
        %v2663 = vmax.f32 %v2647, %v2655
        %v2664 = vmax.f32 %v2648, %v2656
        %v2665 = vmax.f32 %v2649, %v2657
        %v2666 = vmax.f32 %v2650, %v2658
        %2667 = vst.msk [vmem:[%s2569 + $0x4] sm:$0x1] %vm2570, %v2659
        %2668 = vst.msk [vmem:[%s2569 + $0x14] sm:$0x1] %vm2570, %v2660
        %2669 = vst.msk [vmem:[%s2569 + $0x24] sm:$0x1] %vm2570, %v2661
        %2670 = vst.msk [vmem:[%s2569 + $0x34] sm:$0x1] %vm2570, %v2662
        %2671 = vst.msk [vmem:[%s2569 + $0x44] sm:$0x1] %vm2570, %v2663
        %2672 = vst.msk [vmem:[%s2569 + $0x54] sm:$0x1] %vm2570, %v2664
        %2673 = vst.msk [vmem:[%s2569 + $0x64] sm:$0x1] %vm2570, %v2665
        %2674 = vst.msk [vmem:[%s2569 + $0x74] sm:$0x1] %vm2570, %v2666
        %v2675 = vld [vmem:[#allocation5 + $0x8] sm:$0x1]
        %v2676 = vld [vmem:[#allocation5 + $0x18] sm:$0x1]
        %v2677 = vld [vmem:[#allocation5 + $0x28] sm:$0x1]
        %v2678 = vld [vmem:[#allocation5 + $0x38] sm:$0x1]
        %v2679 = vld [vmem:[#allocation5 + $0x48] sm:$0x1]
        %v2680 = vld [vmem:[#allocation5 + $0x58] sm:$0x1]
        %v2681 = vld [vmem:[#allocation5 + $0x68] sm:$0x1]
        %v2682 = vld [vmem:[#allocation5 + $0x78] sm:$0x1]
        %v2683 = vld [vmem:[#allocation5 + $0x9] sm:$0x1]
        %v2684 = vld [vmem:[#allocation5 + $0x19] sm:$0x1]
        %v2685 = vld [vmem:[#allocation5 + $0x29] sm:$0x1]
        %v2686 = vld [vmem:[#allocation5 + $0x39] sm:$0x1]
        %v2687 = vld [vmem:[#allocation5 + $0x49] sm:$0x1]
        %v2688 = vld [vmem:[#allocation5 + $0x59] sm:$0x1]
        %v2689 = vld [vmem:[#allocation5 + $0x69] sm:$0x1]
        %v2690 = vld [vmem:[#allocation5 + $0x79] sm:$0x1]
        %v2691 = vmax.f32 %v2675, %v2683
        %v2692 = vmax.f32 %v2676, %v2684
        %v2693 = vmax.f32 %v2677, %v2685
        %v2694 = vmax.f32 %v2678, %v2686
        %v2695 = vmax.f32 %v2679, %v2687
        %v2696 = vmax.f32 %v2680, %v2688
        %v2697 = vmax.f32 %v2681, %v2689
        %v2698 = vmax.f32 %v2682, %v2690
        %2699 = vst.msk [vmem:[%s2569 + $0x5] sm:$0x1] %vm2570, %v2691
        %2700 = vst.msk [vmem:[%s2569 + $0x15] sm:$0x1] %vm2570, %v2692
        %2701 = vst.msk [vmem:[%s2569 + $0x25] sm:$0x1] %vm2570, %v2693
        %2702 = vst.msk [vmem:[%s2569 + $0x35] sm:$0x1] %vm2570, %v2694
        %2703 = vst.msk [vmem:[%s2569 + $0x45] sm:$0x1] %vm2570, %v2695
        %2704 = vst.msk [vmem:[%s2569 + $0x55] sm:$0x1] %vm2570, %v2696
        %2705 = vst.msk [vmem:[%s2569 + $0x65] sm:$0x1] %vm2570, %v2697
        %2706 = vst.msk [vmem:[%s2569 + $0x75] sm:$0x1] %vm2570, %v2698
        %v2707 = vld [vmem:[#allocation5 + $0xa] sm:$0x1]
        %v2708 = vld [vmem:[#allocation5 + $0x1a] sm:$0x1]
        %v2709 = vld [vmem:[#allocation5 + $0x2a] sm:$0x1]
        %v2710 = vld [vmem:[#allocation5 + $0x3a] sm:$0x1]
        %v2711 = vld [vmem:[#allocation5 + $0x4a] sm:$0x1]
        %v2712 = vld [vmem:[#allocation5 + $0x5a] sm:$0x1]
        %v2713 = vld [vmem:[#allocation5 + $0x6a] sm:$0x1]
        %v2714 = vld [vmem:[#allocation5 + $0x7a] sm:$0x1]
        %v2715 = vld [vmem:[#allocation5 + $0xb] sm:$0x1]
        %v2716 = vld [vmem:[#allocation5 + $0x1b] sm:$0x1]
        %v2717 = vld [vmem:[#allocation5 + $0x2b] sm:$0x1]
        %v2718 = vld [vmem:[#allocation5 + $0x3b] sm:$0x1]
        %v2719 = vld [vmem:[#allocation5 + $0x4b] sm:$0x1]
        %v2720 = vld [vmem:[#allocation5 + $0x5b] sm:$0x1]
        %v2721 = vld [vmem:[#allocation5 + $0x6b] sm:$0x1]
        %v2722 = vld [vmem:[#allocation5 + $0x7b] sm:$0x1]
        %v2723 = vmax.f32 %v2707, %v2715
        %v2724 = vmax.f32 %v2708, %v2716
        %v2725 = vmax.f32 %v2709, %v2717
        %v2726 = vmax.f32 %v2710, %v2718
        %v2727 = vmax.f32 %v2711, %v2719
        %v2728 = vmax.f32 %v2712, %v2720
        %v2729 = vmax.f32 %v2713, %v2721
        %v2730 = vmax.f32 %v2714, %v2722
        %2731 = vst.msk [vmem:[%s2569 + $0x6] sm:$0x1] %vm2570, %v2723
        %2732 = vst.msk [vmem:[%s2569 + $0x16] sm:$0x1] %vm2570, %v2724
        %2733 = vst.msk [vmem:[%s2569 + $0x26] sm:$0x1] %vm2570, %v2725
        %2734 = vst.msk [vmem:[%s2569 + $0x36] sm:$0x1] %vm2570, %v2726
        %2735 = vst.msk [vmem:[%s2569 + $0x46] sm:$0x1] %vm2570, %v2727
        %2736 = vst.msk [vmem:[%s2569 + $0x56] sm:$0x1] %vm2570, %v2728
        %2737 = vst.msk [vmem:[%s2569 + $0x66] sm:$0x1] %vm2570, %v2729
        %2738 = vst.msk [vmem:[%s2569 + $0x76] sm:$0x1] %vm2570, %v2730
        %v2739 = vld [vmem:[#allocation5 + $0xc] sm:$0x1]
        %v2740 = vld [vmem:[#allocation5 + $0x1c] sm:$0x1]
        %v2741 = vld [vmem:[#allocation5 + $0x2c] sm:$0x1]
        %v2742 = vld [vmem:[#allocation5 + $0x3c] sm:$0x1]
        %v2743 = vld [vmem:[#allocation5 + $0x4c] sm:$0x1]
        %v2744 = vld [vmem:[#allocation5 + $0x5c] sm:$0x1]
        %v2745 = vld [vmem:[#allocation5 + $0x6c] sm:$0x1]
        %v2746 = vld [vmem:[#allocation5 + $0x7c] sm:$0x1]
        %v2747 = vld [vmem:[#allocation5 + $0xd] sm:$0x1]
        %v2748 = vld [vmem:[#allocation5 + $0x1d] sm:$0x1]
        %v2749 = vld [vmem:[#allocation5 + $0x2d] sm:$0x1]
        %v2750 = vld [vmem:[#allocation5 + $0x3d] sm:$0x1]
        %v2751 = vld [vmem:[#allocation5 + $0x4d] sm:$0x1]
        %v2752 = vld [vmem:[#allocation5 + $0x5d] sm:$0x1]
        %v2753 = vld [vmem:[#allocation5 + $0x6d] sm:$0x1]
        %v2754 = vld [vmem:[#allocation5 + $0x7d] sm:$0x1]
        %v2755 = vmax.f32 %v2739, %v2747
        %v2756 = vmax.f32 %v2740, %v2748
        %v2757 = vmax.f32 %v2741, %v2749
        %v2758 = vmax.f32 %v2742, %v2750
        %v2759 = vmax.f32 %v2743, %v2751
        %v2760 = vmax.f32 %v2744, %v2752
        %v2761 = vmax.f32 %v2745, %v2753
        %v2762 = vmax.f32 %v2746, %v2754
        %2763 = vst.msk [vmem:[%s2569 + $0x7] sm:$0x1] %vm2570, %v2755
        %2764 = vst.msk [vmem:[%s2569 + $0x17] sm:$0x1] %vm2570, %v2756
        %2765 = vst.msk [vmem:[%s2569 + $0x27] sm:$0x1] %vm2570, %v2757
        %2766 = vst.msk [vmem:[%s2569 + $0x37] sm:$0x1] %vm2570, %v2758
        %2767 = vst.msk [vmem:[%s2569 + $0x47] sm:$0x1] %vm2570, %v2759
        %2768 = vst.msk [vmem:[%s2569 + $0x57] sm:$0x1] %vm2570, %v2760
        %2769 = vst.msk [vmem:[%s2569 + $0x67] sm:$0x1] %vm2570, %v2761
        %2770 = vst.msk [vmem:[%s2569 + $0x77] sm:$0x1] %vm2570, %v2762
        %v2771 = vld [vmem:[#allocation5 + $0xe] sm:$0x1]
        %v2772 = vld [vmem:[#allocation5 + $0x1e] sm:$0x1]
        %v2773 = vld [vmem:[#allocation5 + $0x2e] sm:$0x1]
        %v2774 = vld [vmem:[#allocation5 + $0x3e] sm:$0x1]
        %v2775 = vld [vmem:[#allocation5 + $0x4e] sm:$0x1]
        %v2776 = vld [vmem:[#allocation5 + $0x5e] sm:$0x1]
        %v2777 = vld [vmem:[#allocation5 + $0x6e] sm:$0x1]
        %v2778 = vld [vmem:[#allocation5 + $0x7e] sm:$0x1]
        %v2779 = vld [vmem:[#allocation5 + $0xf] sm:$0x1]
        %v2780 = vld [vmem:[#allocation5 + $0x1f] sm:$0x1]
        %v2781 = vld [vmem:[#allocation5 + $0x2f] sm:$0x1]
        %v2782 = vld [vmem:[#allocation5 + $0x3f] sm:$0x1]
        %v2783 = vld [vmem:[#allocation5 + $0x4f] sm:$0x1]
        %v2784 = vld [vmem:[#allocation5 + $0x5f] sm:$0x1]
        %v2785 = vld [vmem:[#allocation5 + $0x6f] sm:$0x1]
        %v2786 = vld [vmem:[#allocation5 + $0x7f] sm:$0x1]
        %v2787 = vmax.f32 %v2771, %v2779
        %v2788 = vmax.f32 %v2772, %v2780
        %v2789 = vmax.f32 %v2773, %v2781
        %v2790 = vmax.f32 %v2774, %v2782
        %v2791 = vmax.f32 %v2775, %v2783
        %v2792 = vmax.f32 %v2776, %v2784
        %v2793 = vmax.f32 %v2777, %v2785
        %v2794 = vmax.f32 %v2778, %v2786
        %2795 = vst.msk [vmem:[%s2569 + $0x8] sm:$0x1] %vm2570, %v2787
        %2796 = vst.msk [vmem:[%s2569 + $0x18] sm:$0x1] %vm2570, %v2788
        %2797 = vst.msk [vmem:[%s2569 + $0x28] sm:$0x1] %vm2570, %v2789
        %2798 = vst.msk [vmem:[%s2569 + $0x38] sm:$0x1] %vm2570, %v2790
        %2799 = vst.msk [vmem:[%s2569 + $0x48] sm:$0x1] %vm2570, %v2791
        %2800 = vst.msk [vmem:[%s2569 + $0x58] sm:$0x1] %vm2570, %v2792
        %2801 = vst.msk [vmem:[%s2569 + $0x68] sm:$0x1] %vm2570, %v2793
        %2802 = vst.msk [vmem:[%s2569 + $0x78] sm:$0x1] %vm2570, %v2794
        %v2803 = vld [vmem:[#allocation6] sm:$0xff]
        %v2804 = vld [vmem:[#allocation6 + $0x10] sm:$0xff]
        %v2805 = vld [vmem:[#allocation6 + $0x20] sm:$0xff]
        %v2806 = vld [vmem:[#allocation6 + $0x30] sm:$0xff]
        %v2807 = vld [vmem:[#allocation6 + $0x40] sm:$0xff]
        %v2808 = vld [vmem:[#allocation6 + $0x50] sm:$0xff]
        %v2809 = vld [vmem:[#allocation6 + $0x60] sm:$0xff]
        %v2810 = vld [vmem:[#allocation6 + $0x70] sm:$0xff]
        %2811 = vst.msk [vmem:[#allocation7] sm:$0xff] %vm495, %v2803
        %2812 = vst.msk [vmem:[#allocation7 + $0x18] sm:$0xff] %vm495, %v2804
        %2813 = vst.msk [vmem:[#allocation7 + $0x30] sm:$0xff] %vm495, %v2805
        %2814 = vst.msk [vmem:[#allocation7 + $0x48] sm:$0xff] %vm495, %v2806
        %2815 = vst.msk [vmem:[#allocation7 + $0x60] sm:$0xff] %vm495, %v2807
        %2816 = vst.msk [vmem:[#allocation7 + $0x78] sm:$0xff] %vm495, %v2808
        %2817 = vst.msk [vmem:[#allocation7 + $0x90] sm:$0xff] %vm495, %v2809
        %2818 = vst.msk [vmem:[#allocation7 + $0xa8] sm:$0xff] %vm495, %v2810
        %v2819 = vld [vmem:[#allocation6 + $0x1] sm:$0xff]
        %v2820 = vld [vmem:[#allocation6 + $0x11] sm:$0xff]
        %v2821 = vld [vmem:[#allocation6 + $0x21] sm:$0xff]
        %v2822 = vld [vmem:[#allocation6 + $0x31] sm:$0xff]
        %v2823 = vld [vmem:[#allocation6 + $0x41] sm:$0xff]
        %v2824 = vld [vmem:[#allocation6 + $0x51] sm:$0xff]
        %v2825 = vld [vmem:[#allocation6 + $0x61] sm:$0xff]
        %v2826 = vld [vmem:[#allocation6 + $0x71] sm:$0xff]
        %2835 = vrot.lane.b32.xlu0 %v2819, 32
        %v2836 = vpop.permute.xlu0 %2835
        %2837 = vrot.lane.b32.xlu0 %v2820, 32
        %v2838 = vpop.permute.xlu0 %2837
        %2839 = vrot.lane.b32.xlu0 %v2821, 32
        %v2840 = vpop.permute.xlu0 %2839
        %2841 = vrot.lane.b32.xlu0 %v2822, 32
        %v2842 = vpop.permute.xlu0 %2841
        %2843 = vrot.lane.b32.xlu0 %v2823, 32
        %v2844 = vpop.permute.xlu0 %2843
        %2845 = vrot.lane.b32.xlu0 %v2824, 32
        %v2846 = vpop.permute.xlu0 %2845
        %2847 = vrot.lane.b32.xlu0 %v2825, 32
        %v2848 = vpop.permute.xlu0 %2847
        %2849 = vrot.lane.b32.xlu0 %v2826, 32
        %v2850 = vpop.permute.xlu0 %2849
        %vm2859 = vcmask 523520
        %2860 = vst.msk [vmem:[#allocation7] sm:$0xff] %vm2859, %v2836
        %2861 = vst.msk [vmem:[#allocation7 + $0x18] sm:$0xff] %vm2859, %v2838
        %2862 = vst.msk [vmem:[#allocation7 + $0x30] sm:$0xff] %vm2859, %v2840
        %2863 = vst.msk [vmem:[#allocation7 + $0x48] sm:$0xff] %vm2859, %v2842
        %2864 = vst.msk [vmem:[#allocation7 + $0x60] sm:$0xff] %vm2859, %v2844
        %2865 = vst.msk [vmem:[#allocation7 + $0x78] sm:$0xff] %vm2859, %v2846
        %2866 = vst.msk [vmem:[#allocation7 + $0x90] sm:$0xff] %vm2859, %v2848
        %2867 = vst.msk [vmem:[#allocation7 + $0xa8] sm:$0xff] %vm2859, %v2850
        %v2868 = vld [vmem:[#allocation6 + $0x2] sm:$0xff]
        %v2869 = vld [vmem:[#allocation6 + $0x12] sm:$0xff]
        %v2870 = vld [vmem:[#allocation6 + $0x22] sm:$0xff]
        %v2871 = vld [vmem:[#allocation6 + $0x32] sm:$0xff]
        %v2872 = vld [vmem:[#allocation6 + $0x42] sm:$0xff]
        %v2873 = vld [vmem:[#allocation6 + $0x52] sm:$0xff]
        %v2874 = vld [vmem:[#allocation6 + $0x62] sm:$0xff]
        %v2875 = vld [vmem:[#allocation6 + $0x72] sm:$0xff]
        %2884 = vrot.lane.b32.xlu0 %v2868, 64
        %v2885 = vpop.permute.xlu0 %2884
        %2886 = vrot.lane.b32.xlu0 %v2869, 64
        %v2887 = vpop.permute.xlu0 %2886
        %2888 = vrot.lane.b32.xlu0 %v2870, 64
        %v2889 = vpop.permute.xlu0 %2888
        %2890 = vrot.lane.b32.xlu0 %v2871, 64
        %v2891 = vpop.permute.xlu0 %2890
        %2892 = vrot.lane.b32.xlu0 %v2872, 64
        %v2893 = vpop.permute.xlu0 %2892
        %2894 = vrot.lane.b32.xlu0 %v2873, 64
        %v2895 = vpop.permute.xlu0 %2894
        %2896 = vrot.lane.b32.xlu0 %v2874, 64
        %v2897 = vpop.permute.xlu0 %2896
        %2898 = vrot.lane.b32.xlu0 %v2875, 64
        %v2899 = vpop.permute.xlu0 %2898
        %vm2908 = vcmask 785920
        %2909 = vst.msk [vmem:[#allocation7] sm:$0xff] %vm2908, %v2885
        %2910 = vst.msk [vmem:[#allocation7 + $0x18] sm:$0xff] %vm2908, %v2887
        %2911 = vst.msk [vmem:[#allocation7 + $0x30] sm:$0xff] %vm2908, %v2889
        %2912 = vst.msk [vmem:[#allocation7 + $0x48] sm:$0xff] %vm2908, %v2891
        %2913 = vst.msk [vmem:[#allocation7 + $0x60] sm:$0xff] %vm2908, %v2893
        %2914 = vst.msk [vmem:[#allocation7 + $0x78] sm:$0xff] %vm2908, %v2895
        %2915 = vst.msk [vmem:[#allocation7 + $0x90] sm:$0xff] %vm2908, %v2897
        %2916 = vst.msk [vmem:[#allocation7 + $0xa8] sm:$0xff] %vm2908, %v2899
        %v2917 = vld [vmem:[%s2569] sm:$0xff]
        %v2918 = vld [vmem:[%s2569 + $0x10] sm:$0xff]
        %v2919 = vld [vmem:[%s2569 + $0x20] sm:$0xff]
        %v2920 = vld [vmem:[%s2569 + $0x30] sm:$0xff]
        %v2921 = vld [vmem:[%s2569 + $0x40] sm:$0xff]
        %v2922 = vld [vmem:[%s2569 + $0x50] sm:$0xff]
        %v2923 = vld [vmem:[%s2569 + $0x60] sm:$0xff]
        %v2924 = vld [vmem:[%s2569 + $0x70] sm:$0xff]
        %2933 = vrot.lane.b32.xlu0 %v2917, 96
        %v2934 = vpop.permute.xlu0 %2933
        %2935 = vrot.lane.b32.xlu0 %v2918, 96
        %v2936 = vpop.permute.xlu0 %2935
        %2937 = vrot.lane.b32.xlu0 %v2919, 96
        %v2938 = vpop.permute.xlu0 %2937
        %2939 = vrot.lane.b32.xlu0 %v2920, 96
        %v2940 = vpop.permute.xlu0 %2939
        %2941 = vrot.lane.b32.xlu0 %v2921, 96
        %v2942 = vpop.permute.xlu0 %2941
        %2943 = vrot.lane.b32.xlu0 %v2922, 96
        %v2944 = vpop.permute.xlu0 %2943
        %2945 = vrot.lane.b32.xlu0 %v2923, 96
        %v2946 = vpop.permute.xlu0 %2945
        %2947 = vrot.lane.b32.xlu0 %v2924, 96
        %v2948 = vpop.permute.xlu0 %2947
        %vm2957 = vcmask 1048320
        %2958 = vst.msk [vmem:[#allocation7] sm:$0xff] %vm2957, %v2934
        %2959 = vst.msk [vmem:[#allocation7 + $0x18] sm:$0xff] %vm2957, %v2936
        %2960 = vst.msk [vmem:[#allocation7 + $0x30] sm:$0xff] %vm2957, %v2938
        %2961 = vst.msk [vmem:[#allocation7 + $0x48] sm:$0xff] %vm2957, %v2940
        %2962 = vst.msk [vmem:[#allocation7 + $0x60] sm:$0xff] %vm2957, %v2942
        %2963 = vst.msk [vmem:[#allocation7 + $0x78] sm:$0xff] %vm2957, %v2944
        %2964 = vst.msk [vmem:[#allocation7 + $0x90] sm:$0xff] %vm2957, %v2946
        %2965 = vst.msk [vmem:[#allocation7 + $0xa8] sm:$0xff] %vm2957, %v2948
        %v2966 = vld [vmem:[%s2569 + $0x1] sm:$0xff]
        %v2967 = vld [vmem:[%s2569 + $0x11] sm:$0xff]
        %v2968 = vld [vmem:[%s2569 + $0x21] sm:$0xff]
        %v2969 = vld [vmem:[%s2569 + $0x31] sm:$0xff]
        %v2970 = vld [vmem:[%s2569 + $0x41] sm:$0xff]
        %v2971 = vld [vmem:[%s2569 + $0x51] sm:$0xff]
        %v2972 = vld [vmem:[%s2569 + $0x61] sm:$0xff]
        %v2973 = vld [vmem:[%s2569 + $0x71] sm:$0xff]
        %2974 = vst.msk [vmem:[#allocation7 + $0x8] sm:$0xff] %vm495, %v2966
        %2975 = vst.msk [vmem:[#allocation7 + $0x20] sm:$0xff] %vm495, %v2967
        %2976 = vst.msk [vmem:[#allocation7 + $0x38] sm:$0xff] %vm495, %v2968
        %2977 = vst.msk [vmem:[#allocation7 + $0x50] sm:$0xff] %vm495, %v2969
        %2978 = vst.msk [vmem:[#allocation7 + $0x68] sm:$0xff] %vm495, %v2970
        %2979 = vst.msk [vmem:[#allocation7 + $0x80] sm:$0xff] %vm495, %v2971
        %2980 = vst.msk [vmem:[#allocation7 + $0x98] sm:$0xff] %vm495, %v2972
        %2981 = vst.msk [vmem:[#allocation7 + $0xb0] sm:$0xff] %vm495, %v2973
        %v2982 = vld [vmem:[%s2569 + $0x2] sm:$0xff]
        %v2983 = vld [vmem:[%s2569 + $0x12] sm:$0xff]
        %v2984 = vld [vmem:[%s2569 + $0x22] sm:$0xff]
        %v2985 = vld [vmem:[%s2569 + $0x32] sm:$0xff]
        %v2986 = vld [vmem:[%s2569 + $0x42] sm:$0xff]
        %v2987 = vld [vmem:[%s2569 + $0x52] sm:$0xff]
        %v2988 = vld [vmem:[%s2569 + $0x62] sm:$0xff]
        %v2989 = vld [vmem:[%s2569 + $0x72] sm:$0xff]
        %2998 = vrot.lane.b32.xlu0 %v2982, 32
        %v2999 = vpop.permute.xlu0 %2998
        %3000 = vrot.lane.b32.xlu0 %v2983, 32
        %v3001 = vpop.permute.xlu0 %3000
        %3002 = vrot.lane.b32.xlu0 %v2984, 32
        %v3003 = vpop.permute.xlu0 %3002
        %3004 = vrot.lane.b32.xlu0 %v2985, 32
        %v3005 = vpop.permute.xlu0 %3004
        %3006 = vrot.lane.b32.xlu0 %v2986, 32
        %v3007 = vpop.permute.xlu0 %3006
        %3008 = vrot.lane.b32.xlu0 %v2987, 32
        %v3009 = vpop.permute.xlu0 %3008
        %3010 = vrot.lane.b32.xlu0 %v2988, 32
        %v3011 = vpop.permute.xlu0 %3010
        %3012 = vrot.lane.b32.xlu0 %v2989, 32
        %v3013 = vpop.permute.xlu0 %3012
        %3022 = vst.msk [vmem:[#allocation7 + $0x8] sm:$0xff] %vm2859, %v2999
        %3023 = vst.msk [vmem:[#allocation7 + $0x20] sm:$0xff] %vm2859, %v3001
        %3024 = vst.msk [vmem:[#allocation7 + $0x38] sm:$0xff] %vm2859, %v3003
        %3025 = vst.msk [vmem:[#allocation7 + $0x50] sm:$0xff] %vm2859, %v3005
        %3026 = vst.msk [vmem:[#allocation7 + $0x68] sm:$0xff] %vm2859, %v3007
        %3027 = vst.msk [vmem:[#allocation7 + $0x80] sm:$0xff] %vm2859, %v3009
        %3028 = vst.msk [vmem:[#allocation7 + $0x98] sm:$0xff] %vm2859, %v3011
        %3029 = vst.msk [vmem:[#allocation7 + $0xb0] sm:$0xff] %vm2859, %v3013
        %s3030 = scalar_lea.vmem [#allocation6], 32
        %v3031 = vld [vmem:[%s3030] sm:$0xff]
        %v3032 = vld [vmem:[%s3030 + $0x10] sm:$0xff]
        %v3033 = vld [vmem:[%s3030 + $0x20] sm:$0xff]
        %v3034 = vld [vmem:[%s3030 + $0x30] sm:$0xff]
        %v3035 = vld [vmem:[%s3030 + $0x40] sm:$0xff]
        %v3036 = vld [vmem:[%s3030 + $0x50] sm:$0xff]
        %v3037 = vld [vmem:[%s3030 + $0x60] sm:$0xff]
        %v3038 = vld [vmem:[%s3030 + $0x70] sm:$0xff]
        %3047 = vrot.lane.b32.xlu0 %v3031, 64
        %v3048 = vpop.permute.xlu0 %3047
        %3049 = vrot.lane.b32.xlu0 %v3032, 64
        %v3050 = vpop.permute.xlu0 %3049
        %3051 = vrot.lane.b32.xlu0 %v3033, 64
        %v3052 = vpop.permute.xlu0 %3051
        %3053 = vrot.lane.b32.xlu0 %v3034, 64
        %v3054 = vpop.permute.xlu0 %3053
        %3055 = vrot.lane.b32.xlu0 %v3035, 64
        %v3056 = vpop.permute.xlu0 %3055
        %3057 = vrot.lane.b32.xlu0 %v3036, 64
        %v3058 = vpop.permute.xlu0 %3057
        %3059 = vrot.lane.b32.xlu0 %v3037, 64
        %v3060 = vpop.permute.xlu0 %3059
        %3061 = vrot.lane.b32.xlu0 %v3038, 64
        %v3062 = vpop.permute.xlu0 %3061
        %3071 = vst.msk [vmem:[#allocation7 + $0x8] sm:$0xff] %vm2908, %v3048
        %3072 = vst.msk [vmem:[#allocation7 + $0x20] sm:$0xff] %vm2908, %v3050
        %3073 = vst.msk [vmem:[#allocation7 + $0x38] sm:$0xff] %vm2908, %v3052
        %3074 = vst.msk [vmem:[#allocation7 + $0x50] sm:$0xff] %vm2908, %v3054
        %3075 = vst.msk [vmem:[#allocation7 + $0x68] sm:$0xff] %vm2908, %v3056
        %3076 = vst.msk [vmem:[#allocation7 + $0x80] sm:$0xff] %vm2908, %v3058
        %3077 = vst.msk [vmem:[#allocation7 + $0x98] sm:$0xff] %vm2908, %v3060
        %3078 = vst.msk [vmem:[#allocation7 + $0xb0] sm:$0xff] %vm2908, %v3062
        %v3079 = vld [vmem:[%s3030 + $0x1] sm:$0xff]
        %v3080 = vld [vmem:[%s3030 + $0x11] sm:$0xff]
        %v3081 = vld [vmem:[%s3030 + $0x21] sm:$0xff]
        %v3082 = vld [vmem:[%s3030 + $0x31] sm:$0xff]
        %v3083 = vld [vmem:[%s3030 + $0x41] sm:$0xff]
        %v3084 = vld [vmem:[%s3030 + $0x51] sm:$0xff]
        %v3085 = vld [vmem:[%s3030 + $0x61] sm:$0xff]
        %v3086 = vld [vmem:[%s3030 + $0x71] sm:$0xff]
        %3095 = vrot.lane.b32.xlu0 %v3079, 96
        %v3096 = vpop.permute.xlu0 %3095
        %3097 = vrot.lane.b32.xlu0 %v3080, 96
        %v3098 = vpop.permute.xlu0 %3097
        %3099 = vrot.lane.b32.xlu0 %v3081, 96
        %v3100 = vpop.permute.xlu0 %3099
        %3101 = vrot.lane.b32.xlu0 %v3082, 96
        %v3102 = vpop.permute.xlu0 %3101
        %3103 = vrot.lane.b32.xlu0 %v3083, 96
        %v3104 = vpop.permute.xlu0 %3103
        %3105 = vrot.lane.b32.xlu0 %v3084, 96
        %v3106 = vpop.permute.xlu0 %3105
        %3107 = vrot.lane.b32.xlu0 %v3085, 96
        %v3108 = vpop.permute.xlu0 %3107
        %3109 = vrot.lane.b32.xlu0 %v3086, 96
        %v3110 = vpop.permute.xlu0 %3109
        %3119 = vst.msk [vmem:[#allocation7 + $0x8] sm:$0xff] %vm2957, %v3096
        %3120 = vst.msk [vmem:[#allocation7 + $0x20] sm:$0xff] %vm2957, %v3098
        %3121 = vst.msk [vmem:[#allocation7 + $0x38] sm:$0xff] %vm2957, %v3100
        %3122 = vst.msk [vmem:[#allocation7 + $0x50] sm:$0xff] %vm2957, %v3102
        %3123 = vst.msk [vmem:[#allocation7 + $0x68] sm:$0xff] %vm2957, %v3104
        %3124 = vst.msk [vmem:[#allocation7 + $0x80] sm:$0xff] %vm2957, %v3106
        %3125 = vst.msk [vmem:[#allocation7 + $0x98] sm:$0xff] %vm2957, %v3108
        %3126 = vst.msk [vmem:[#allocation7 + $0xb0] sm:$0xff] %vm2957, %v3110
        %v3127 = vld [vmem:[%s3030 + $0x2] sm:$0xff]
        %v3128 = vld [vmem:[%s3030 + $0x12] sm:$0xff]
        %v3129 = vld [vmem:[%s3030 + $0x22] sm:$0xff]
        %v3130 = vld [vmem:[%s3030 + $0x32] sm:$0xff]
        %v3131 = vld [vmem:[%s3030 + $0x42] sm:$0xff]
        %v3132 = vld [vmem:[%s3030 + $0x52] sm:$0xff]
        %v3133 = vld [vmem:[%s3030 + $0x62] sm:$0xff]
        %v3134 = vld [vmem:[%s3030 + $0x72] sm:$0xff]
        %3135 = vst.msk [vmem:[#allocation7 + $0x10] sm:$0xff] %vm495, %v3127
        %3136 = vst.msk [vmem:[#allocation7 + $0x28] sm:$0xff] %vm495, %v3128
        %3137 = vst.msk [vmem:[#allocation7 + $0x40] sm:$0xff] %vm495, %v3129
        %3138 = vst.msk [vmem:[#allocation7 + $0x58] sm:$0xff] %vm495, %v3130
        %3139 = vst.msk [vmem:[#allocation7 + $0x70] sm:$0xff] %vm495, %v3131
        %3140 = vst.msk [vmem:[#allocation7 + $0x88] sm:$0xff] %vm495, %v3132
        %3141 = vst.msk [vmem:[#allocation7 + $0xa0] sm:$0xff] %vm495, %v3133
        %3142 = vst.msk [vmem:[#allocation7 + $0xb8] sm:$0xff] %vm495, %v3134
        %v3143 = vld [vmem:[#allocation7] sm:$0xff]
        %v3144 = vld [vmem:[#allocation7 + $0x8] sm:$0xff]
        %v3145 = vld [vmem:[#allocation7 + $0x10] sm:$0xff]
        %v3146 = vld [vmem:[#allocation7 + $0x18] sm:$0xff]
        %v3147 = vld [vmem:[#allocation7 + $0x20] sm:$0xff]
        %v3148 = vld [vmem:[#allocation7 + $0x28] sm:$0xff]
        %v3149 = vld [vmem:[#allocation7 + $0x30] sm:$0xff]
        %v3150 = vld [vmem:[#allocation7 + $0x38] sm:$0xff]
        %v3151 = vld [vmem:[#allocation7 + $0x40] sm:$0xff]
        %v3152 = vld [vmem:[#allocation7 + $0x48] sm:$0xff]
        %v3153 = vld [vmem:[#allocation7 + $0x50] sm:$0xff]
        %v3154 = vld [vmem:[#allocation7 + $0x58] sm:$0xff]
        %v3155 = vld [vmem:[#allocation7 + $0x60] sm:$0xff]
        %v3156 = vld [vmem:[#allocation7 + $0x68] sm:$0xff]
        %v3157 = vld [vmem:[#allocation7 + $0x70] sm:$0xff]
        %v3158 = vld [vmem:[#allocation7 + $0x78] sm:$0xff]
        %v3159 = vld [vmem:[#allocation7 + $0x80] sm:$0xff]
        %v3160 = vld [vmem:[#allocation7 + $0x88] sm:$0xff]
        %v3161 = vld [vmem:[#allocation7 + $0x90] sm:$0xff]
        %v3162 = vld [vmem:[#allocation7 + $0x98] sm:$0xff]
        %v3163 = vld [vmem:[#allocation7 + $0xa0] sm:$0xff]
        %v3164 = vld [vmem:[#allocation7 + $0xa8] sm:$0xff]
        %v3165 = vld [vmem:[#allocation7 + $0xb0] sm:$0xff]
        %v3166 = vld [vmem:[#allocation7 + $0xb8] sm:$0xff]
        %v3167 = vpack.c.bf16 %v3146, %v3143
        %v3168 = vpack.c.bf16 %v3147, %v3144
        %v3169 = vpack.c.bf16 %v3148, %v3145
        %v3170 = vpack.c.bf16 %v3152, %v3149
        %v3171 = vpack.c.bf16 %v3153, %v3150
        %v3172 = vpack.c.bf16 %v3154, %v3151
        %v3173 = vpack.c.bf16 %v3158, %v3155
        %v3174 = vpack.c.bf16 %v3159, %v3156
        %v3175 = vpack.c.bf16 %v3160, %v3157
        %v3176 = vpack.c.bf16 %v3164, %v3161
        %v3177 = vpack.c.bf16 %v3165, %v3162
        %v3178 = vpack.c.bf16 %v3166, %v3163
        %v3179 = vld [vmem:[%s3] sm:$0xf]
        %v3180 = vld [vmem:[%s3 + $0x4] sm:$0xf]
        %v3181 = vld [vmem:[%s3 + $0x8] sm:$0xf]
        %v3182 = vld [vmem:[%s3 + $0xc] sm:$0xf]
        %v3183 = vld [vmem:[%s3 + $0x10] sm:$0xf]
        %v3184 = vld [vmem:[%s3 + $0x14] sm:$0xf]
        %v3185 = vld [vmem:[%s3 + $0x18] sm:$0xf]
        %v3186 = vld [vmem:[%s3 + $0x1c] sm:$0xf]
        %v3187 = vld [vmem:[%s3 + $0x20] sm:$0xf]
        %v3188 = vld [vmem:[%s3 + $0x24] sm:$0xf]
        %v3189 = vld [vmem:[%s3 + $0x28] sm:$0xf]
        %v3190 = vld [vmem:[%s3 + $0x2c] sm:$0xf]
        %v3191 = vld [vmem:[%s3 + $0x30] sm:$0xf]
        %v3192 = vld [vmem:[%s3 + $0x34] sm:$0xf]
        %v3193 = vld [vmem:[%s3 + $0x38] sm:$0xf]
        %v3194 = vld [vmem:[%s3 + $0x3c] sm:$0xf]
        %v3195 = vld [vmem:[%s3 + $0x40] sm:$0xf]
        %v3196 = vld [vmem:[%s3 + $0x44] sm:$0xf]
        %v3197 = vld [vmem:[%s3 + $0x48] sm:$0xf]
        %v3198 = vld [vmem:[%s3 + $0x4c] sm:$0xf]
        %v3199 = vld [vmem:[%s3 + $0x50] sm:$0xf]
        %v3200 = vld [vmem:[%s3 + $0x54] sm:$0xf]
        %v3201 = vld [vmem:[%s3 + $0x58] sm:$0xf]
        %v3202 = vld [vmem:[%s3 + $0x5c] sm:$0xf]
        %v3203 = vld [vmem:[%s3 + $0x60] sm:$0xf]
        %v3204 = vld [vmem:[%s3 + $0x64] sm:$0xf]
        %v3205 = vld [vmem:[%s3 + $0x68] sm:$0xf]
        %v3206 = vld [vmem:[%s3 + $0x6c] sm:$0xf]
        %v3207 = vld [vmem:[%s3 + $0x70] sm:$0xf]
        %v3208 = vld [vmem:[%s3 + $0x74] sm:$0xf]
        %v3209 = vld [vmem:[%s3 + $0x78] sm:$0xf]
        %v3210 = vld [vmem:[%s3 + $0x7c] sm:$0xf]
        %v3211 = vld [vmem:[%s3 + $0x80] sm:$0xf]
        %v3212 = vld [vmem:[%s3 + $0x84] sm:$0xf]
        %v3213 = vld [vmem:[%s3 + $0x88] sm:$0xf]
        %v3214 = vld [vmem:[%s3 + $0x8c] sm:$0xf]
        %v3215 = vld [vmem:[%s4] sm:$0x1]
        %v3217 = vperm.slane %v3215, 0
        %v3255 = vunpack.c.l.b16 %v3179
        %v3256 = vunpack.c.l.b16 %v3180
        %v3257 = vunpack.c.l.b16 %v3181
        %v3258 = vunpack.c.l.b16 %v3182
        %v3259 = vunpack.c.l.b16 %v3183
        %v3260 = vunpack.c.l.b16 %v3184
        %v3261 = vunpack.c.l.b16 %v3185
        %v3262 = vunpack.c.l.b16 %v3186
        %v3263 = vunpack.c.l.b16 %v3187
        %v3264 = vunpack.c.l.b16 %v3188
        %v3265 = vunpack.c.l.b16 %v3189
        %v3266 = vunpack.c.l.b16 %v3190
        %v3267 = vunpack.c.l.b16 %v3191
        %v3268 = vunpack.c.l.b16 %v3192
        %v3269 = vunpack.c.l.b16 %v3193
        %v3270 = vunpack.c.l.b16 %v3194
        %v3271 = vunpack.c.l.b16 %v3195
        %v3272 = vunpack.c.l.b16 %v3196
        %v3273 = vunpack.c.l.b16 %v3197
        %v3274 = vunpack.c.l.b16 %v3198
        %v3275 = vunpack.c.l.b16 %v3199
        %v3276 = vunpack.c.l.b16 %v3200
        %v3277 = vunpack.c.l.b16 %v3201
        %v3278 = vunpack.c.l.b16 %v3202
        %v3279 = vunpack.c.l.b16 %v3203
        %v3280 = vunpack.c.l.b16 %v3204
        %v3281 = vunpack.c.l.b16 %v3205
        %v3282 = vunpack.c.l.b16 %v3206
        %v3283 = vunpack.c.l.b16 %v3207
        %v3284 = vunpack.c.l.b16 %v3208
        %v3285 = vunpack.c.l.b16 %v3209
        %v3286 = vunpack.c.l.b16 %v3210
        %v3287 = vunpack.c.l.b16 %v3211
        %v3288 = vunpack.c.l.b16 %v3212
        %v3289 = vunpack.c.l.b16 %v3213
        %v3290 = vunpack.c.l.b16 %v3214
        %v3291 = vpack.c.b16 %v3256, %v3255
        %v3292 = vpack.c.b16 %v3258, %v3257
        %v3293 = vpack.c.b16 %v3260, %v3259
        %v3294 = vpack.c.b16 %v3262, %v3261
        %v3295 = vpack.c.b16 %v3264, %v3263
        %v3296 = vpack.c.b16 %v3266, %v3265
        %v3297 = vpack.c.b16 %v3268, %v3267
        %v3298 = vpack.c.b16 %v3270, %v3269
        %v3299 = vpack.c.b16 %v3272, %v3271
        %v3300 = vpack.c.b16 %v3274, %v3273
        %v3301 = vpack.c.b16 %v3276, %v3275
        %v3302 = vpack.c.b16 %v3278, %v3277
        %v3303 = vpack.c.b16 %v3280, %v3279
        %v3304 = vpack.c.b16 %v3282, %v3281
        %v3305 = vpack.c.b16 %v3284, %v3283
        %v3306 = vpack.c.b16 %v3286, %v3285
        %v3307 = vpack.c.b16 %v3288, %v3287
        %v3308 = vpack.c.b16 %v3290, %v3289
        %v3328 = vsel %vm495, %v3169, 0
        %v3331 = vsel %vm495, %v3172, 0
        %v3334 = vsel %vm495, %v3175, 0
        %v3337 = vsel %vm495, %v3178, 0
        %3339 = vmatpush.bf16.msra.mxu0 %v3298
        %3340 = vmatpush.bf16.msra.mxu0 %v3297
        %3341 = vmatpush.bf16.msra.mxu0 %v3296
        %3342 = vmatpush.bf16.msra.mxu0 %v3295
        %3343 = vmatpush.bf16.msra.mxu0 %v3294
        %3344 = vmatpush.bf16.msra.mxu0 %v3293
        %3345 = vmatpush.bf16.msra.mxu0 %v3292
        %3346 = vmatpush.bf16.msra.mxu0 %v3291
        %3347 = vmatmul.bf16.gmra.mxu0 %v3167
        %v3348 = vpop.f32.mrf.mxu0
        %v3349 = vadd.f32 %v3217, %v3348
        %v3350 = vpop.f32.mrf.mxu0
        %v3351 = vadd.f32 %v3217, %v3350
        %3352 = vmatmul.bf16.gmra.mxu0 %v3170
        %v3353 = vpop.f32.mrf.mxu0
        %v3354 = vadd.f32 %v3217, %v3353
        %v3355 = vpop.f32.mrf.mxu0
        %v3356 = vadd.f32 %v3217, %v3355
        %3357 = vmatmul.bf16.gmra.mxu0 %v3173
        %v3358 = vpop.f32.mrf.mxu0
        %v3359 = vadd.f32 %v3217, %v3358
        %v3360 = vpop.f32.mrf.mxu0
        %v3361 = vadd.f32 %v3217, %v3360
        %3362 = vmatmul.bf16.gmra.mxu0 %v3176
        %v3363 = vpop.f32.mrf.mxu0
        %v3364 = vadd.f32 %v3217, %v3363
        %v3365 = vpop.f32.mrf.mxu0
        %v3366 = vadd.f32 %v3217, %v3365
        %3367 = vdwg.mxu0
        %3368 = vmatpush.bf16.msra.mxu0 %v3306
        %3369 = vmatpush.bf16.msra.mxu0 %v3305
        %3370 = vmatpush.bf16.msra.mxu0 %v3304
        %3371 = vmatpush.bf16.msra.mxu0 %v3303
        %3372 = vmatpush.bf16.msra.mxu0 %v3302
        %3373 = vmatpush.bf16.msra.mxu0 %v3301
        %3374 = vmatpush.bf16.msra.mxu0 %v3300
        %3375 = vmatpush.bf16.msra.mxu0 %v3299
        %3376 = vmatmul.bf16.gmra.mxu0 %v3168
        %v3377 = vpop.f32.mrf.mxu0
        %v3378 = vadd.f32 %v3349, %v3377
        %v3379 = vpop.f32.mrf.mxu0
        %v3380 = vadd.f32 %v3351, %v3379
        %3381 = vmatmul.bf16.gmra.mxu0 %v3171
        %v3382 = vpop.f32.mrf.mxu0
        %v3383 = vadd.f32 %v3354, %v3382
        %v3384 = vpop.f32.mrf.mxu0
        %v3385 = vadd.f32 %v3356, %v3384
        %3386 = vmatmul.bf16.gmra.mxu0 %v3174
        %v3387 = vpop.f32.mrf.mxu0
        %v3388 = vadd.f32 %v3359, %v3387
        %v3389 = vpop.f32.mrf.mxu0
        %v3390 = vadd.f32 %v3361, %v3389
        %3391 = vmatmul.bf16.gmra.mxu0 %v3177
        %v3392 = vpop.f32.mrf.mxu0
        %v3393 = vadd.f32 %v3364, %v3392
        %v3394 = vpop.f32.mrf.mxu0
        %v3395 = vadd.f32 %v3366, %v3394
        %3396 = vdwg.mxu0
        %3397 = vmatpush.bf16.msra.mxu0 0
        %3398 = vmatpush.bf16.msra.mxu0 0
        %3399 = vmatpush.bf16.msra.mxu0 0
        %3400 = vmatpush.bf16.msra.mxu0 0
        %3401 = vmatpush.bf16.msra.mxu0 0
        %3402 = vmatpush.bf16.msra.mxu0 0
        %3403 = vmatpush.bf16.msra.mxu0 %v3308
        %3404 = vmatpush.bf16.msra.mxu0 %v3307
        %3405 = vmatmul.bf16.gmra.mxu0 %v3328
        %v3406 = vpop.f32.mrf.mxu0
        %v3407 = vadd.f32 %v3378, %v3406
        %v3408 = vpop.f32.mrf.mxu0
        %v3409 = vadd.f32 %v3380, %v3408
        %3410 = vmatmul.bf16.gmra.mxu0 %v3331
        %v3411 = vpop.f32.mrf.mxu0
        %v3412 = vadd.f32 %v3383, %v3411
        %v3413 = vpop.f32.mrf.mxu0
        %v3414 = vadd.f32 %v3385, %v3413
        %3415 = vmatmul.bf16.gmra.mxu0 %v3334
        %v3416 = vpop.f32.mrf.mxu0
        %v3417 = vadd.f32 %v3388, %v3416
        %v3418 = vpop.f32.mrf.mxu0
        %v3419 = vadd.f32 %v3390, %v3418
        %3420 = vmatmul.bf16.gmra.mxu0 %v3337
        %v3421 = vpop.f32.mrf.mxu0
        %v3422 = vadd.f32 %v3393, %v3421
        %v3423 = vpop.f32.mrf.mxu0
        %v3424 = vadd.f32 %v3395, %v3423
        %3425 = vdwg.mxu0
        %v3426 = vmax.f32 %v3407, 0.0
        %v3427 = vmax.f32 %v3409, 0.0
        %v3428 = vmax.f32 %v3412, 0.0
        %v3429 = vmax.f32 %v3414, 0.0
        %v3430 = vmax.f32 %v3417, 0.0
        %v3431 = vmax.f32 %v3419, 0.0
        %v3432 = vmax.f32 %v3422, 0.0
        %v3433 = vmax.f32 %v3424, 0.0
        %vm3434 = vcmask 523264
        %3435 = vst.msk [vmem:[#allocation8] sm:$0xff] %vm3434, %v3426
        %3436 = vst.msk [vmem:[#allocation8 + $0x8] sm:$0xff] %vm3434, %v3427
        %3437 = vst.msk [vmem:[#allocation8 + $0x10] sm:$0xff] %vm3434, %v3428
        %3438 = vst.msk [vmem:[#allocation8 + $0x18] sm:$0xff] %vm3434, %v3429
        %3439 = vst.msk [vmem:[#allocation8 + $0x20] sm:$0xff] %vm3434, %v3430
        %3440 = vst.msk [vmem:[#allocation8 + $0x28] sm:$0xff] %vm3434, %v3431
        %3441 = vst.msk [vmem:[#allocation8 + $0x30] sm:$0xff] %vm3434, %v3432
        %3442 = vst.msk [vmem:[#allocation8 + $0x38] sm:$0xff] %vm3434, %v3433
        %v3443 = vld [vmem:[#allocation8] sm:$0xff]
        %v3444 = vld [vmem:[#allocation8 + $0x8] sm:$0xff]
        %v3445 = vmax.f32 %v3443, %v3444
        %3446 = vst.msk [vmem:[#allocation9] sm:$0xff] %vm3434, %v3445
        %v3447 = vld [vmem:[#allocation8 + $0x10] sm:$0xff]
        %v3448 = vld [vmem:[#allocation8 + $0x18] sm:$0xff]
        %v3449 = vmax.f32 %v3447, %v3448
        %s3450 = scalar_lea.vmem [#allocation9], 8
        %3451 = vst.msk [vmem:[%s3450] sm:$0xff] %vm3434, %v3449
        %v3452 = vld [vmem:[#allocation8 + $0x20] sm:$0xff]
        %v3453 = vld [vmem:[#allocation8 + $0x28] sm:$0xff]
        %v3454 = vmax.f32 %v3452, %v3453
        %s3455 = scalar_lea.vmem [#allocation9], 16
        %3456 = vst.msk [vmem:[%s3455] sm:$0xff] %vm3434, %v3454
        %v3457 = vld [vmem:[#allocation8 + $0x30] sm:$0xff]
        %v3458 = vld [vmem:[#allocation8 + $0x38] sm:$0xff]
        %v3459 = vmax.f32 %v3457, %v3458
        %s3460 = scalar_lea.vmem [#allocation9], 24
        %3461 = vst.msk [vmem:[%s3460] sm:$0xff] %vm3434, %v3459
        %v3462 = vld [vmem:[#allocation9] sm:$0x1]
        %v3463 = vld [vmem:[#allocation9 + $0x8] sm:$0x1]
        %v3464 = vld [vmem:[#allocation9 + $0x10] sm:$0x1]
        %v3465 = vld [vmem:[#allocation9 + $0x18] sm:$0x1]
        %v3466 = vld [vmem:[#allocation9 + $0x1] sm:$0x1]
        %v3467 = vld [vmem:[#allocation9 + $0x9] sm:$0x1]
        %v3468 = vld [vmem:[#allocation9 + $0x11] sm:$0x1]
        %v3469 = vld [vmem:[#allocation9 + $0x19] sm:$0x1]
        %v3470 = vmax.f32 %v3462, %v3466
        %v3471 = vmax.f32 %v3463, %v3467
        %v3472 = vmax.f32 %v3464, %v3468
        %v3473 = vmax.f32 %v3465, %v3469
        %s3474 = scalar_lea.vmem [#allocation10], 8
        %vm3475 = vcmask 516096
        %3476 = vst.msk [vmem:[%s3474 + $0x1] sm:$0x1] %vm3475, %v3470
        %3477 = vst.msk [vmem:[%s3474 + $0x9] sm:$0x1] %vm3475, %v3471
        %3478 = vst.msk [vmem:[%s3474 + $0x11] sm:$0x1] %vm3475, %v3472
        %3479 = vst.msk [vmem:[%s3474 + $0x19] sm:$0x1] %vm3475, %v3473
        %v3480 = vld [vmem:[#allocation9 + $0x2] sm:$0x1]
        %v3481 = vld [vmem:[#allocation9 + $0xa] sm:$0x1]
        %v3482 = vld [vmem:[#allocation9 + $0x12] sm:$0x1]
        %v3483 = vld [vmem:[#allocation9 + $0x1a] sm:$0x1]
        %v3484 = vld [vmem:[#allocation9 + $0x3] sm:$0x1]
        %v3485 = vld [vmem:[#allocation9 + $0xb] sm:$0x1]
        %v3486 = vld [vmem:[#allocation9 + $0x13] sm:$0x1]
        %v3487 = vld [vmem:[#allocation9 + $0x1b] sm:$0x1]
        %v3488 = vmax.f32 %v3480, %v3484
        %v3489 = vmax.f32 %v3481, %v3485
        %v3490 = vmax.f32 %v3482, %v3486
        %v3491 = vmax.f32 %v3483, %v3487
        %3492 = vst.msk [vmem:[%s3474 + $0x2] sm:$0x1] %vm3475, %v3488
        %3493 = vst.msk [vmem:[%s3474 + $0xa] sm:$0x1] %vm3475, %v3489
        %3494 = vst.msk [vmem:[%s3474 + $0x12] sm:$0x1] %vm3475, %v3490
        %3495 = vst.msk [vmem:[%s3474 + $0x1a] sm:$0x1] %vm3475, %v3491
        %v3496 = vld [vmem:[#allocation9 + $0x4] sm:$0x1]
        %v3497 = vld [vmem:[#allocation9 + $0xc] sm:$0x1]
        %v3498 = vld [vmem:[#allocation9 + $0x14] sm:$0x1]
        %v3499 = vld [vmem:[#allocation9 + $0x1c] sm:$0x1]
        %v3500 = vld [vmem:[#allocation9 + $0x5] sm:$0x1]
        %v3501 = vld [vmem:[#allocation9 + $0xd] sm:$0x1]
        %v3502 = vld [vmem:[#allocation9 + $0x15] sm:$0x1]
        %v3503 = vld [vmem:[#allocation9 + $0x1d] sm:$0x1]
        %v3504 = vmax.f32 %v3496, %v3500
        %v3505 = vmax.f32 %v3497, %v3501
        %v3506 = vmax.f32 %v3498, %v3502
        %v3507 = vmax.f32 %v3499, %v3503
        %3508 = vst.msk [vmem:[%s3474 + $0x3] sm:$0x1] %vm3475, %v3504
        %3509 = vst.msk [vmem:[%s3474 + $0xb] sm:$0x1] %vm3475, %v3505
        %3510 = vst.msk [vmem:[%s3474 + $0x13] sm:$0x1] %vm3475, %v3506
        %3511 = vst.msk [vmem:[%s3474 + $0x1b] sm:$0x1] %vm3475, %v3507
        %v3512 = vld [vmem:[#allocation9 + $0x6] sm:$0x1]
        %v3513 = vld [vmem:[#allocation9 + $0xe] sm:$0x1]
        %v3514 = vld [vmem:[#allocation9 + $0x16] sm:$0x1]
        %v3515 = vld [vmem:[#allocation9 + $0x1e] sm:$0x1]
        %v3516 = vld [vmem:[#allocation9 + $0x7] sm:$0x1]
        %v3517 = vld [vmem:[#allocation9 + $0xf] sm:$0x1]
        %v3518 = vld [vmem:[#allocation9 + $0x17] sm:$0x1]
        %v3519 = vld [vmem:[#allocation9 + $0x1f] sm:$0x1]
        %v3520 = vmax.f32 %v3512, %v3516
        %v3521 = vmax.f32 %v3513, %v3517
        %v3522 = vmax.f32 %v3514, %v3518
        %v3523 = vmax.f32 %v3515, %v3519
        %3524 = vst.msk [vmem:[%s3474 + $0x4] sm:$0x1] %vm3475, %v3520
        %3525 = vst.msk [vmem:[%s3474 + $0xc] sm:$0x1] %vm3475, %v3521
        %3526 = vst.msk [vmem:[%s3474 + $0x14] sm:$0x1] %vm3475, %v3522
        %3527 = vst.msk [vmem:[%s3474 + $0x1c] sm:$0x1] %vm3475, %v3523
        %v3528 = vld [vmem:[#allocation10] sm:$0xf]
        %v3529 = vld [vmem:[#allocation10 + $0x8] sm:$0xf]
        %v3530 = vld [vmem:[#allocation10 + $0x10] sm:$0xf]
        %v3531 = vld [vmem:[#allocation10 + $0x18] sm:$0xf]
        %vm3532 = vcmask 519168
        %3533 = vst.msk [vmem:[#allocation11] sm:$0xf] %vm3532, %v3528
        %3534 = vst.msk [vmem:[#allocation11 + $0x14] sm:$0xf] %vm3532, %v3529
        %3535 = vst.msk [vmem:[#allocation11 + $0x28] sm:$0xf] %vm3532, %v3530
        %3536 = vst.msk [vmem:[#allocation11 + $0x3c] sm:$0xf] %vm3532, %v3531
        %v3537 = vld [vmem:[#allocation10 + $0x1] sm:$0xf]
        %v3538 = vld [vmem:[#allocation10 + $0x9] sm:$0xf]
        %v3539 = vld [vmem:[#allocation10 + $0x11] sm:$0xf]
        %v3540 = vld [vmem:[#allocation10 + $0x19] sm:$0xf]
        %3545 = vrot.lane.b32.xlu0 %v3537, 64
        %v3546 = vpop.permute.xlu0 %3545
        %3547 = vrot.lane.b32.xlu0 %v3538, 64
        %v3548 = vpop.permute.xlu0 %3547
        %3549 = vrot.lane.b32.xlu0 %v3539, 64
        %v3550 = vpop.permute.xlu0 %3549
        %3551 = vrot.lane.b32.xlu0 %v3540, 64
        %v3552 = vpop.permute.xlu0 %3551
        %vm3557 = vcmask 1043968
        %3558 = vst.msk [vmem:[#allocation11] sm:$0xf] %vm3557, %v3546
        %3559 = vst.msk [vmem:[#allocation11 + $0x14] sm:$0xf] %vm3557, %v3548
        %3560 = vst.msk [vmem:[#allocation11 + $0x28] sm:$0xf] %vm3557, %v3550
        %3561 = vst.msk [vmem:[#allocation11 + $0x3c] sm:$0xf] %vm3557, %v3552
        %v3562 = vld [vmem:[#allocation10 + $0x2] sm:$0xf]
        %v3563 = vld [vmem:[#allocation10 + $0xa] sm:$0xf]
        %v3564 = vld [vmem:[#allocation10 + $0x12] sm:$0xf]
        %v3565 = vld [vmem:[#allocation10 + $0x1a] sm:$0xf]
        %3566 = vst.msk [vmem:[#allocation11 + $0x4] sm:$0xf] %vm3532, %v3562
        %3567 = vst.msk [vmem:[#allocation11 + $0x18] sm:$0xf] %vm3532, %v3563
        %3568 = vst.msk [vmem:[#allocation11 + $0x2c] sm:$0xf] %vm3532, %v3564
        %3569 = vst.msk [vmem:[#allocation11 + $0x40] sm:$0xf] %vm3532, %v3565
        %v3570 = vld [vmem:[%s3474] sm:$0xf]
        %v3571 = vld [vmem:[%s3474 + $0x8] sm:$0xf]
        %v3572 = vld [vmem:[%s3474 + $0x10] sm:$0xf]
        %v3573 = vld [vmem:[%s3474 + $0x18] sm:$0xf]
        %3578 = vrot.lane.b32.xlu0 %v3570, 64
        %v3579 = vpop.permute.xlu0 %3578
        %3580 = vrot.lane.b32.xlu0 %v3571, 64
        %v3581 = vpop.permute.xlu0 %3580
        %3582 = vrot.lane.b32.xlu0 %v3572, 64
        %v3583 = vpop.permute.xlu0 %3582
        %3584 = vrot.lane.b32.xlu0 %v3573, 64
        %v3585 = vpop.permute.xlu0 %3584
        %3590 = vst.msk [vmem:[#allocation11 + $0x4] sm:$0xf] %vm3557, %v3579
        %3591 = vst.msk [vmem:[#allocation11 + $0x18] sm:$0xf] %vm3557, %v3581
        %3592 = vst.msk [vmem:[#allocation11 + $0x2c] sm:$0xf] %vm3557, %v3583
        %3593 = vst.msk [vmem:[#allocation11 + $0x40] sm:$0xf] %vm3557, %v3585
        %v3594 = vld [vmem:[%s3474 + $0x1] sm:$0xf]
        %v3595 = vld [vmem:[%s3474 + $0x9] sm:$0xf]
        %v3596 = vld [vmem:[%s3474 + $0x11] sm:$0xf]
        %v3597 = vld [vmem:[%s3474 + $0x19] sm:$0xf]
        %3598 = vst.msk [vmem:[#allocation11 + $0x8] sm:$0xf] %vm3532, %v3594
        %3599 = vst.msk [vmem:[#allocation11 + $0x1c] sm:$0xf] %vm3532, %v3595
        %3600 = vst.msk [vmem:[#allocation11 + $0x30] sm:$0xf] %vm3532, %v3596
        %3601 = vst.msk [vmem:[#allocation11 + $0x44] sm:$0xf] %vm3532, %v3597
        %v3602 = vld [vmem:[%s3474 + $0x2] sm:$0xf]
        %v3603 = vld [vmem:[%s3474 + $0xa] sm:$0xf]
        %v3604 = vld [vmem:[%s3474 + $0x12] sm:$0xf]
        %v3605 = vld [vmem:[%s3474 + $0x1a] sm:$0xf]
        %3610 = vrot.lane.b32.xlu0 %v3602, 64
        %v3611 = vpop.permute.xlu0 %3610
        %3612 = vrot.lane.b32.xlu0 %v3603, 64
        %v3613 = vpop.permute.xlu0 %3612
        %3614 = vrot.lane.b32.xlu0 %v3604, 64
        %v3615 = vpop.permute.xlu0 %3614
        %3616 = vrot.lane.b32.xlu0 %v3605, 64
        %v3617 = vpop.permute.xlu0 %3616
        %3622 = vst.msk [vmem:[#allocation11 + $0x8] sm:$0xf] %vm3557, %v3611
        %3623 = vst.msk [vmem:[#allocation11 + $0x1c] sm:$0xf] %vm3557, %v3613
        %3624 = vst.msk [vmem:[#allocation11 + $0x30] sm:$0xf] %vm3557, %v3615
        %3625 = vst.msk [vmem:[#allocation11 + $0x44] sm:$0xf] %vm3557, %v3617
        %s3626 = scalar_lea.vmem [#allocation10], 16
        %v3627 = vld [vmem:[%s3626] sm:$0xf]
        %v3628 = vld [vmem:[%s3626 + $0x8] sm:$0xf]
        %v3629 = vld [vmem:[%s3626 + $0x10] sm:$0xf]
        %v3630 = vld [vmem:[%s3626 + $0x18] sm:$0xf]
        %3631 = vst.msk [vmem:[#allocation11 + $0xc] sm:$0xf] %vm3532, %v3627
        %3632 = vst.msk [vmem:[#allocation11 + $0x20] sm:$0xf] %vm3532, %v3628
        %3633 = vst.msk [vmem:[#allocation11 + $0x34] sm:$0xf] %vm3532, %v3629
        %3634 = vst.msk [vmem:[#allocation11 + $0x48] sm:$0xf] %vm3532, %v3630
        %v3635 = vld [vmem:[%s3626 + $0x1] sm:$0xf]
        %v3636 = vld [vmem:[%s3626 + $0x9] sm:$0xf]
        %v3637 = vld [vmem:[%s3626 + $0x11] sm:$0xf]
        %v3638 = vld [vmem:[%s3626 + $0x19] sm:$0xf]
        %3643 = vrot.lane.b32.xlu0 %v3635, 64
        %v3644 = vpop.permute.xlu0 %3643
        %3645 = vrot.lane.b32.xlu0 %v3636, 64
        %v3646 = vpop.permute.xlu0 %3645
        %3647 = vrot.lane.b32.xlu0 %v3637, 64
        %v3648 = vpop.permute.xlu0 %3647
        %3649 = vrot.lane.b32.xlu0 %v3638, 64
        %v3650 = vpop.permute.xlu0 %3649
        %3655 = vst.msk [vmem:[#allocation11 + $0xc] sm:$0xf] %vm3557, %v3644
        %3656 = vst.msk [vmem:[#allocation11 + $0x20] sm:$0xf] %vm3557, %v3646
        %3657 = vst.msk [vmem:[#allocation11 + $0x34] sm:$0xf] %vm3557, %v3648
        %3658 = vst.msk [vmem:[#allocation11 + $0x48] sm:$0xf] %vm3557, %v3650
        %v3659 = vld [vmem:[%s3626 + $0x2] sm:$0xf]
        %v3660 = vld [vmem:[%s3626 + $0xa] sm:$0xf]
        %v3661 = vld [vmem:[%s3626 + $0x12] sm:$0xf]
        %v3662 = vld [vmem:[%s3626 + $0x1a] sm:$0xf]
        %3663 = vst.msk [vmem:[#allocation11 + $0x10] sm:$0xf] %vm3532, %v3659
        %3664 = vst.msk [vmem:[#allocation11 + $0x24] sm:$0xf] %vm3532, %v3660
        %3665 = vst.msk [vmem:[#allocation11 + $0x38] sm:$0xf] %vm3532, %v3661
        %3666 = vst.msk [vmem:[#allocation11 + $0x4c] sm:$0xf] %vm3532, %v3662
        %v3667 = vld [vmem:[%s5] sm:$0xf]
        %v3668 = vld [vmem:[%s5 + $0x4] sm:$0xf]
        %v3669 = vld [vmem:[%s5 + $0x8] sm:$0xf]
        %v3670 = vld [vmem:[%s5 + $0xc] sm:$0xf]
        %v3671 = vld [vmem:[%s5 + $0x10] sm:$0xf]
        %v3672 = vld [vmem:[%s5 + $0x14] sm:$0xf]
        %v3673 = vld [vmem:[%s5 + $0x18] sm:$0xf]
        %v3674 = vld [vmem:[%s5 + $0x1c] sm:$0xf]
        %v3675 = vld [vmem:[%s5 + $0x20] sm:$0xf]
        %v3676 = vld [vmem:[%s5 + $0x24] sm:$0xf]
        %v3677 = vld [vmem:[%s5 + $0x28] sm:$0xf]
        %v3678 = vld [vmem:[%s5 + $0x2c] sm:$0xf]
        %v3679 = vld [vmem:[%s5 + $0x30] sm:$0xf]
        %v3680 = vld [vmem:[%s5 + $0x34] sm:$0xf]
        %v3681 = vld [vmem:[%s5 + $0x38] sm:$0xf]
        %v3682 = vld [vmem:[%s5 + $0x3c] sm:$0xf]
        %v3683 = vld [vmem:[%s5 + $0x40] sm:$0xf]
        %v3684 = vld [vmem:[%s5 + $0x44] sm:$0xf]
        %v3685 = vld [vmem:[%s5 + $0x48] sm:$0xf]
        %v3686 = vld [vmem:[%s5 + $0x4c] sm:$0xf]
        %v3687 = vld [vmem:[%s5 + $0x50] sm:$0xf]
        %v3688 = vld [vmem:[%s5 + $0x54] sm:$0xf]
        %v3689 = vld [vmem:[%s5 + $0x58] sm:$0xf]
        %v3690 = vld [vmem:[%s5 + $0x5c] sm:$0xf]
        %v3691 = vld [vmem:[%s5 + $0x60] sm:$0xf]
        %v3692 = vld [vmem:[%s5 + $0x64] sm:$0xf]
        %v3693 = vld [vmem:[%s5 + $0x68] sm:$0xf]
        %v3694 = vld [vmem:[%s5 + $0x6c] sm:$0xf]
        %v3695 = vld [vmem:[%s5 + $0x70] sm:$0xf]
        %v3696 = vld [vmem:[%s5 + $0x74] sm:$0xf]
        %v3697 = vld [vmem:[%s5 + $0x78] sm:$0xf]
        %v3698 = vld [vmem:[%s5 + $0x7c] sm:$0xf]
        %v3699 = vld [vmem:[%s5 + $0x80] sm:$0xf]
        %v3700 = vld [vmem:[%s5 + $0x84] sm:$0xf]
        %v3701 = vld [vmem:[%s5 + $0x88] sm:$0xf]
        %v3702 = vld [vmem:[%s5 + $0x8c] sm:$0xf]
        %v3703 = vld [vmem:[%s5 + $0x90] sm:$0xf]
        %v3704 = vld [vmem:[%s5 + $0x94] sm:$0xf]
        %v3705 = vld [vmem:[%s5 + $0x98] sm:$0xf]
        %v3706 = vld [vmem:[%s5 + $0x9c] sm:$0xf]
        %v3707 = vld [vmem:[%s5 + $0xa0] sm:$0xf]
        %v3708 = vld [vmem:[%s5 + $0xa4] sm:$0xf]
        %v3709 = vld [vmem:[%s5 + $0xa8] sm:$0xf]
        %v3710 = vld [vmem:[%s5 + $0xac] sm:$0xf]
        %v3711 = vld [vmem:[%s5 + $0xb0] sm:$0xf]
        %v3712 = vld [vmem:[%s5 + $0xb4] sm:$0xf]
        %v3713 = vld [vmem:[%s5 + $0xb8] sm:$0xf]
        %v3714 = vld [vmem:[%s5 + $0xbc] sm:$0xf]
        %v3715 = vld [vmem:[%s5 + $0xc0] sm:$0xf]
        %v3716 = vld [vmem:[%s5 + $0xc4] sm:$0xf]
        %v3717 = vld [vmem:[%s5 + $0xc8] sm:$0xf]
        %v3718 = vld [vmem:[%s5 + $0xcc] sm:$0xf]
        %v3719 = vld [vmem:[%s5 + $0xd0] sm:$0xf]
        %v3720 = vld [vmem:[%s5 + $0xd4] sm:$0xf]
        %v3721 = vld [vmem:[%s5 + $0xd8] sm:$0xf]
        %v3722 = vld [vmem:[%s5 + $0xdc] sm:$0xf]
        %v3723 = vld [vmem:[%s5 + $0xe0] sm:$0xf]
        %v3724 = vld [vmem:[%s5 + $0xe4] sm:$0xf]
        %v3725 = vld [vmem:[%s5 + $0xe8] sm:$0xf]
        %v3726 = vld [vmem:[%s5 + $0xec] sm:$0xf]
        %v3727 = vld [vmem:[%s5 + $0xf0] sm:$0xf]
        %v3728 = vld [vmem:[%s5 + $0xf4] sm:$0xf]
        %v3729 = vld [vmem:[%s5 + $0xf8] sm:$0xf]
        %v3730 = vld [vmem:[%s5 + $0xfc] sm:$0xf]
        %v3731 = vld [vmem:[%s5 + $0x100] sm:$0xf]
        %v3732 = vld [vmem:[%s5 + $0x104] sm:$0xf]
        %v3733 = vld [vmem:[%s5 + $0x108] sm:$0xf]
        %v3734 = vld [vmem:[%s5 + $0x10c] sm:$0xf]
        %v3735 = vld [vmem:[%s5 + $0x110] sm:$0xf]
        %v3736 = vld [vmem:[%s5 + $0x114] sm:$0xf]
        %v3737 = vld [vmem:[%s5 + $0x118] sm:$0xf]
        %v3738 = vld [vmem:[%s5 + $0x11c] sm:$0xf]
        %v3739 = vld [vmem:[%s6] sm:$0x1]
        %v3740 = vld [vmem:[#allocation11] sm:$0xff]
        %v3741 = vld [vmem:[#allocation11 + $0x8] sm:$0xff]
        %v3742 = vld [vmem:[#allocation11 + $0x10] sm:$0xf]
        %3746 = vst [vmem:[#allocation1] ss:$2 sm:$0xff] %v3740
        %s3747 = scalar_lea.vmem [#allocation1], 16
        %3748 = vst [vmem:[%s3747] ss:$2 sm:$0xff] %v3741
        %s3749 = scalar_lea.vmem [#allocation1], 32
        %3750 = vst [vmem:[%s3749] ss:$2 sm:$0xff] %v3742
        %v3751 = vld.sshfl [vmem:[#allocation1] sm:$0xff pattern:$0x75316420]
        %v3752 = vld.sshfl [vmem:[#allocation1 + $0x8] sm:$0xff pattern:$0x75316420]
        %v3753 = vld.sshfl [vmem:[#allocation1 + $0x10] sm:$0xff pattern:$0x75316420]
        %v3754 = vld.sshfl [vmem:[#allocation1 + $0x18] sm:$0xff pattern:$0x75316420]
        %v3755 = vld.sshfl [vmem:[#allocation1 + $0x20] sm:$0xff pattern:$0x75316420]
        %v3761 = vpack.c.bf16 %v3751, %v3751
        %v3762 = vpack.c.bf16 %v3752, %v3752
        %v3763 = vpack.c.bf16 %v3753, %v3753
        %v3764 = vpack.c.bf16 %v3754, %v3754
        %v3765 = vpack.c.bf16 %v3755, %v3755
        %v3767 = vperm.slane %v3739, 0
        %v3841 = vunpack.c.l.b16 %v3667
        %v3842 = vunpack.c.l.b16 %v3668
        %v3843 = vunpack.c.l.b16 %v3669
        %v3844 = vunpack.c.l.b16 %v3670
        %v3845 = vunpack.c.l.b16 %v3671
        %v3846 = vunpack.c.l.b16 %v3672
        %v3847 = vunpack.c.l.b16 %v3673
        %v3848 = vunpack.c.l.b16 %v3674
        %v3849 = vunpack.c.l.b16 %v3675
        %v3850 = vunpack.c.l.b16 %v3676
        %v3851 = vunpack.c.l.b16 %v3677
        %v3852 = vunpack.c.l.b16 %v3678
        %v3853 = vunpack.c.l.b16 %v3679
        %v3854 = vunpack.c.l.b16 %v3680
        %v3855 = vunpack.c.l.b16 %v3681
        %v3856 = vunpack.c.l.b16 %v3682
        %v3857 = vunpack.c.l.b16 %v3683
        %v3858 = vunpack.c.l.b16 %v3684
        %v3859 = vunpack.c.l.b16 %v3685
        %v3860 = vunpack.c.l.b16 %v3686
        %v3861 = vunpack.c.l.b16 %v3687
        %v3862 = vunpack.c.l.b16 %v3688
        %v3863 = vunpack.c.l.b16 %v3689
        %v3864 = vunpack.c.l.b16 %v3690
        %v3865 = vunpack.c.l.b16 %v3691
        %v3866 = vunpack.c.l.b16 %v3692
        %v3867 = vunpack.c.l.b16 %v3693
        %v3868 = vunpack.c.l.b16 %v3694
        %v3869 = vunpack.c.l.b16 %v3695
        %v3870 = vunpack.c.l.b16 %v3696
        %v3871 = vunpack.c.l.b16 %v3697
        %v3872 = vunpack.c.l.b16 %v3698
        %v3873 = vunpack.c.l.b16 %v3699
        %v3874 = vunpack.c.l.b16 %v3700
        %v3875 = vunpack.c.l.b16 %v3701
        %v3876 = vunpack.c.l.b16 %v3702
        %v3877 = vunpack.c.l.b16 %v3703
        %v3878 = vunpack.c.l.b16 %v3704
        %v3879 = vunpack.c.l.b16 %v3705
        %v3880 = vunpack.c.l.b16 %v3706
        %v3881 = vunpack.c.l.b16 %v3707
        %v3882 = vunpack.c.l.b16 %v3708
        %v3883 = vunpack.c.l.b16 %v3709
        %v3884 = vunpack.c.l.b16 %v3710
        %v3885 = vunpack.c.l.b16 %v3711
        %v3886 = vunpack.c.l.b16 %v3712
        %v3887 = vunpack.c.l.b16 %v3713
        %v3888 = vunpack.c.l.b16 %v3714
        %v3889 = vunpack.c.l.b16 %v3715
        %v3890 = vunpack.c.l.b16 %v3716
        %v3891 = vunpack.c.l.b16 %v3717
        %v3892 = vunpack.c.l.b16 %v3718
        %v3893 = vunpack.c.l.b16 %v3719
        %v3894 = vunpack.c.l.b16 %v3720
        %v3895 = vunpack.c.l.b16 %v3721
        %v3896 = vunpack.c.l.b16 %v3722
        %v3897 = vunpack.c.l.b16 %v3723
        %v3898 = vunpack.c.l.b16 %v3724
        %v3899 = vunpack.c.l.b16 %v3725
        %v3900 = vunpack.c.l.b16 %v3726
        %v3901 = vunpack.c.l.b16 %v3727
        %v3902 = vunpack.c.l.b16 %v3728
        %v3903 = vunpack.c.l.b16 %v3729
        %v3904 = vunpack.c.l.b16 %v3730
        %v3905 = vunpack.c.l.b16 %v3731
        %v3906 = vunpack.c.l.b16 %v3732
        %v3907 = vunpack.c.l.b16 %v3733
        %v3908 = vunpack.c.l.b16 %v3734
        %v3909 = vunpack.c.l.b16 %v3735
        %v3910 = vunpack.c.l.b16 %v3736
        %v3911 = vunpack.c.l.b16 %v3737
        %v3912 = vunpack.c.l.b16 %v3738
        %v3913 = vpack.c.b16 %v3842, %v3841
        %v3914 = vpack.c.b16 %v3844, %v3843
        %v3915 = vpack.c.b16 %v3846, %v3845
        %v3916 = vpack.c.b16 %v3848, %v3847
        %v3917 = vpack.c.b16 %v3850, %v3849
        %v3918 = vpack.c.b16 %v3852, %v3851
        %v3919 = vpack.c.b16 %v3854, %v3853
        %v3920 = vpack.c.b16 %v3856, %v3855
        %v3921 = vpack.c.b16 %v3858, %v3857
        %v3922 = vpack.c.b16 %v3860, %v3859
        %v3923 = vpack.c.b16 %v3862, %v3861
        %v3924 = vpack.c.b16 %v3864, %v3863
        %v3925 = vpack.c.b16 %v3866, %v3865
        %v3926 = vpack.c.b16 %v3868, %v3867
        %v3927 = vpack.c.b16 %v3870, %v3869
        %v3928 = vpack.c.b16 %v3872, %v3871
        %v3929 = vpack.c.b16 %v3874, %v3873
        %v3930 = vpack.c.b16 %v3876, %v3875
        %v3931 = vpack.c.b16 %v3878, %v3877
        %v3932 = vpack.c.b16 %v3880, %v3879
        %v3933 = vpack.c.b16 %v3882, %v3881
        %v3934 = vpack.c.b16 %v3884, %v3883
        %v3935 = vpack.c.b16 %v3886, %v3885
        %v3936 = vpack.c.b16 %v3888, %v3887
        %v3937 = vpack.c.b16 %v3890, %v3889
        %v3938 = vpack.c.b16 %v3892, %v3891
        %v3939 = vpack.c.b16 %v3894, %v3893
        %v3940 = vpack.c.b16 %v3896, %v3895
        %v3941 = vpack.c.b16 %v3898, %v3897
        %v3942 = vpack.c.b16 %v3900, %v3899
        %v3943 = vpack.c.b16 %v3902, %v3901
        %v3944 = vpack.c.b16 %v3904, %v3903
        %v3945 = vpack.c.b16 %v3906, %v3905
        %v3946 = vpack.c.b16 %v3908, %v3907
        %v3947 = vpack.c.b16 %v3910, %v3909
        %v3948 = vpack.c.b16 %v3912, %v3911
        %v3986 = vsel %vm3434, %v3765, 0
        %3988 = vmatpush.bf16.msra.mxu0 %v3920
        %3989 = vmatpush.bf16.msra.mxu0 %v3919
        %3990 = vmatpush.bf16.msra.mxu0 %v3918
        %3991 = vmatpush.bf16.msra.mxu0 %v3917
        %3992 = vmatpush.bf16.msra.mxu0 %v3916
        %3993 = vmatpush.bf16.msra.mxu0 %v3915
        %3994 = vmatpush.bf16.msra.mxu0 %v3914
        %3995 = vmatpush.bf16.msra.mxu0 %v3913
        %3996 = vmatmul.bf16.gmra.mxu0 %v3761
        %v3997 = vpop.f32.mrf.mxu0
        %v3998 = vadd.f32 %v3767, %v3997
        %v3999 = vpop.f32.mrf.mxu0
        %4000 = vdwg.mxu0
        %4001 = vmatpush.bf16.msra.mxu0 %v3928
        %4002 = vmatpush.bf16.msra.mxu0 %v3927
        %4003 = vmatpush.bf16.msra.mxu0 %v3926
        %4004 = vmatpush.bf16.msra.mxu0 %v3925
        %4005 = vmatpush.bf16.msra.mxu0 %v3924
        %4006 = vmatpush.bf16.msra.mxu0 %v3923
        %4007 = vmatpush.bf16.msra.mxu0 %v3922
        %4008 = vmatpush.bf16.msra.mxu0 %v3921
        %4009 = vmatmul.bf16.gmra.mxu0 %v3762
        %v4010 = vpop.f32.mrf.mxu0
        %v4011 = vadd.f32 %v3998, %v4010
        %v4012 = vpop.f32.mrf.mxu0
        %4013 = vdwg.mxu0
        %4014 = vmatpush.bf16.msra.mxu0 %v3936
        %4015 = vmatpush.bf16.msra.mxu0 %v3935
        %4016 = vmatpush.bf16.msra.mxu0 %v3934
        %4017 = vmatpush.bf16.msra.mxu0 %v3933
        %4018 = vmatpush.bf16.msra.mxu0 %v3932
        %4019 = vmatpush.bf16.msra.mxu0 %v3931
        %4020 = vmatpush.bf16.msra.mxu0 %v3930
        %4021 = vmatpush.bf16.msra.mxu0 %v3929
        %4022 = vmatmul.bf16.gmra.mxu0 %v3763
        %v4023 = vpop.f32.mrf.mxu0
        %v4024 = vadd.f32 %v4011, %v4023
        %v4025 = vpop.f32.mrf.mxu0
        %4026 = vdwg.mxu0
        %4027 = vmatpush.bf16.msra.mxu0 %v3944
        %4028 = vmatpush.bf16.msra.mxu0 %v3943
        %4029 = vmatpush.bf16.msra.mxu0 %v3942
        %4030 = vmatpush.bf16.msra.mxu0 %v3941
        %4031 = vmatpush.bf16.msra.mxu0 %v3940
        %4032 = vmatpush.bf16.msra.mxu0 %v3939
        %4033 = vmatpush.bf16.msra.mxu0 %v3938
        %4034 = vmatpush.bf16.msra.mxu0 %v3937
        %4035 = vmatmul.bf16.gmra.mxu0 %v3764
        %v4036 = vpop.f32.mrf.mxu0
        %v4037 = vadd.f32 %v4024, %v4036
        %v4038 = vpop.f32.mrf.mxu0
        %4039 = vdwg.mxu0
        %4040 = vmatpush.bf16.msra.mxu0 0
        %4041 = vmatpush.bf16.msra.mxu0 0
        %4042 = vmatpush.bf16.msra.mxu0 0
        %4043 = vmatpush.bf16.msra.mxu0 0
        %4044 = vmatpush.bf16.msra.mxu0 %v3948
        %4045 = vmatpush.bf16.msra.mxu0 %v3947
        %4046 = vmatpush.bf16.msra.mxu0 %v3946
        %4047 = vmatpush.bf16.msra.mxu0 %v3945
        %4048 = vmatmul.bf16.gmra.mxu0 %v3986
        %v4049 = vpop.f32.mrf.mxu0
        %v4050 = vadd.f32 %v4037, %v4049
        %v4051 = vpop.f32.mrf.mxu0
        %4052 = vdwg.mxu0
        %v4053 = vmax.f32 %v4050, 0.0
        %s4054 = scalar_lea.vmem [#allocation11], 20
        %v4055 = vld [vmem:[%s4054] sm:$0xff]
        %v4056 = vld [vmem:[%s4054 + $0x8] sm:$0xff]
        %v4057 = vld [vmem:[%s4054 + $0x10] sm:$0xf]
        %4061 = vst [vmem:[#allocation1] ss:$2 sm:$0xff] %v4055
        %s4062 = scalar_lea.vmem [#allocation1], 16
        %4063 = vst [vmem:[%s4062] ss:$2 sm:$0xff] %v4056
        %s4064 = scalar_lea.vmem [#allocation1], 32
        %4065 = vst [vmem:[%s4064] ss:$2 sm:$0xff] %v4057
        %v4066 = vld.sshfl [vmem:[#allocation1] sm:$0xff pattern:$0x75316420]
        %v4067 = vld.sshfl [vmem:[#allocation1 + $0x8] sm:$0xff pattern:$0x75316420]
        %v4068 = vld.sshfl [vmem:[#allocation1 + $0x10] sm:$0xff pattern:$0x75316420]
        %v4069 = vld.sshfl [vmem:[#allocation1 + $0x18] sm:$0xff pattern:$0x75316420]
        %v4070 = vld.sshfl [vmem:[#allocation1 + $0x20] sm:$0xff pattern:$0x75316420]
        %v4076 = vpack.c.bf16 %v4066, %v4066
        %v4077 = vpack.c.bf16 %v4067, %v4067
        %v4078 = vpack.c.bf16 %v4068, %v4068
        %v4079 = vpack.c.bf16 %v4069, %v4069
        %v4080 = vpack.c.bf16 %v4070, %v4070
        %v4082 = vsel %vm3434, %v4080, 0
        %4084 = vmatpush.bf16.msra.mxu0 %v3920
        %4085 = vmatpush.bf16.msra.mxu0 %v3919
        %4086 = vmatpush.bf16.msra.mxu0 %v3918
        %4087 = vmatpush.bf16.msra.mxu0 %v3917
        %4088 = vmatpush.bf16.msra.mxu0 %v3916
        %4089 = vmatpush.bf16.msra.mxu0 %v3915
        %4090 = vmatpush.bf16.msra.mxu0 %v3914
        %4091 = vmatpush.bf16.msra.mxu0 %v3913
        %4092 = vmatmul.bf16.gmra.mxu0 %v4076
        %v4093 = vpop.f32.mrf.mxu0
        %v4094 = vadd.f32 %v3767, %v4093
        %v4095 = vpop.f32.mrf.mxu0
        %4096 = vdwg.mxu0
        %4097 = vmatpush.bf16.msra.mxu0 %v3928
        %4098 = vmatpush.bf16.msra.mxu0 %v3927
        %4099 = vmatpush.bf16.msra.mxu0 %v3926
        %4100 = vmatpush.bf16.msra.mxu0 %v3925
        %4101 = vmatpush.bf16.msra.mxu0 %v3924
        %4102 = vmatpush.bf16.msra.mxu0 %v3923
        %4103 = vmatpush.bf16.msra.mxu0 %v3922
        %4104 = vmatpush.bf16.msra.mxu0 %v3921
        %4105 = vmatmul.bf16.gmra.mxu0 %v4077
        %v4106 = vpop.f32.mrf.mxu0
        %v4107 = vadd.f32 %v4094, %v4106
        %v4108 = vpop.f32.mrf.mxu0
        %4109 = vdwg.mxu0
        %4110 = vmatpush.bf16.msra.mxu0 %v3936
        %4111 = vmatpush.bf16.msra.mxu0 %v3935
        %4112 = vmatpush.bf16.msra.mxu0 %v3934
        %4113 = vmatpush.bf16.msra.mxu0 %v3933
        %4114 = vmatpush.bf16.msra.mxu0 %v3932
        %4115 = vmatpush.bf16.msra.mxu0 %v3931
        %4116 = vmatpush.bf16.msra.mxu0 %v3930
        %4117 = vmatpush.bf16.msra.mxu0 %v3929
        %4118 = vmatmul.bf16.gmra.mxu0 %v4078
        %v4119 = vpop.f32.mrf.mxu0
        %v4120 = vadd.f32 %v4107, %v4119
        %v4121 = vpop.f32.mrf.mxu0
        %4122 = vdwg.mxu0
        %4123 = vmatpush.bf16.msra.mxu0 %v3944
        %4124 = vmatpush.bf16.msra.mxu0 %v3943
        %4125 = vmatpush.bf16.msra.mxu0 %v3942
        %4126 = vmatpush.bf16.msra.mxu0 %v3941
        %4127 = vmatpush.bf16.msra.mxu0 %v3940
        %4128 = vmatpush.bf16.msra.mxu0 %v3939
        %4129 = vmatpush.bf16.msra.mxu0 %v3938
        %4130 = vmatpush.bf16.msra.mxu0 %v3937
        %4131 = vmatmul.bf16.gmra.mxu0 %v4079
        %v4132 = vpop.f32.mrf.mxu0
        %v4133 = vadd.f32 %v4120, %v4132
        %v4134 = vpop.f32.mrf.mxu0
        %4135 = vdwg.mxu0
        %4136 = vmatpush.bf16.msra.mxu0 0
        %4137 = vmatpush.bf16.msra.mxu0 0
        %4138 = vmatpush.bf16.msra.mxu0 0
        %4139 = vmatpush.bf16.msra.mxu0 0
        %4140 = vmatpush.bf16.msra.mxu0 %v3948
        %4141 = vmatpush.bf16.msra.mxu0 %v3947
        %4142 = vmatpush.bf16.msra.mxu0 %v3946
        %4143 = vmatpush.bf16.msra.mxu0 %v3945
        %4144 = vmatmul.bf16.gmra.mxu0 %v4082
        %v4145 = vpop.f32.mrf.mxu0
        %v4146 = vadd.f32 %v4133, %v4145
        %v4147 = vpop.f32.mrf.mxu0
        %4148 = vdwg.mxu0
        %v4149 = vmax.f32 %v4146, 0.0
        %s4150 = scalar_lea.vmem [#allocation11], 40
        %v4151 = vld [vmem:[%s4150] sm:$0xff]
        %v4152 = vld [vmem:[%s4150 + $0x8] sm:$0xff]
        %v4153 = vld [vmem:[%s4150 + $0x10] sm:$0xf]
        %4157 = vst [vmem:[#allocation1] ss:$2 sm:$0xff] %v4151
        %s4158 = scalar_lea.vmem [#allocation1], 16
        %4159 = vst [vmem:[%s4158] ss:$2 sm:$0xff] %v4152
        %s4160 = scalar_lea.vmem [#allocation1], 32
        %4161 = vst [vmem:[%s4160] ss:$2 sm:$0xff] %v4153
        %v4162 = vld.sshfl [vmem:[#allocation1] sm:$0xff pattern:$0x75316420]
        %v4163 = vld.sshfl [vmem:[#allocation1 + $0x8] sm:$0xff pattern:$0x75316420]
        %v4164 = vld.sshfl [vmem:[#allocation1 + $0x10] sm:$0xff pattern:$0x75316420]
        %v4165 = vld.sshfl [vmem:[#allocation1 + $0x18] sm:$0xff pattern:$0x75316420]
        %v4166 = vld.sshfl [vmem:[#allocation1 + $0x20] sm:$0xff pattern:$0x75316420]
        %v4172 = vpack.c.bf16 %v4162, %v4162
        %v4173 = vpack.c.bf16 %v4163, %v4163
        %v4174 = vpack.c.bf16 %v4164, %v4164
        %v4175 = vpack.c.bf16 %v4165, %v4165
        %v4176 = vpack.c.bf16 %v4166, %v4166
        %v4178 = vsel %vm3434, %v4176, 0
        %4180 = vmatpush.bf16.msra.mxu0 %v3920
        %4181 = vmatpush.bf16.msra.mxu0 %v3919
        %4182 = vmatpush.bf16.msra.mxu0 %v3918
        %4183 = vmatpush.bf16.msra.mxu0 %v3917
        %4184 = vmatpush.bf16.msra.mxu0 %v3916
        %4185 = vmatpush.bf16.msra.mxu0 %v3915
        %4186 = vmatpush.bf16.msra.mxu0 %v3914
        %4187 = vmatpush.bf16.msra.mxu0 %v3913
        %4188 = vmatmul.bf16.gmra.mxu0 %v4172
        %v4189 = vpop.f32.mrf.mxu0
        %v4190 = vadd.f32 %v3767, %v4189
        %v4191 = vpop.f32.mrf.mxu0
        %4192 = vdwg.mxu0
        %4193 = vmatpush.bf16.msra.mxu0 %v3928
        %4194 = vmatpush.bf16.msra.mxu0 %v3927
        %4195 = vmatpush.bf16.msra.mxu0 %v3926
        %4196 = vmatpush.bf16.msra.mxu0 %v3925
        %4197 = vmatpush.bf16.msra.mxu0 %v3924
        %4198 = vmatpush.bf16.msra.mxu0 %v3923
        %4199 = vmatpush.bf16.msra.mxu0 %v3922
        %4200 = vmatpush.bf16.msra.mxu0 %v3921
        %4201 = vmatmul.bf16.gmra.mxu0 %v4173
        %v4202 = vpop.f32.mrf.mxu0
        %v4203 = vadd.f32 %v4190, %v4202
        %v4204 = vpop.f32.mrf.mxu0
        %4205 = vdwg.mxu0
        %4206 = vmatpush.bf16.msra.mxu0 %v3936
        %4207 = vmatpush.bf16.msra.mxu0 %v3935
        %4208 = vmatpush.bf16.msra.mxu0 %v3934
        %4209 = vmatpush.bf16.msra.mxu0 %v3933
        %4210 = vmatpush.bf16.msra.mxu0 %v3932
        %4211 = vmatpush.bf16.msra.mxu0 %v3931
        %4212 = vmatpush.bf16.msra.mxu0 %v3930
        %4213 = vmatpush.bf16.msra.mxu0 %v3929
        %4214 = vmatmul.bf16.gmra.mxu0 %v4174
        %v4215 = vpop.f32.mrf.mxu0
        %v4216 = vadd.f32 %v4203, %v4215
        %v4217 = vpop.f32.mrf.mxu0
        %4218 = vdwg.mxu0
        %4219 = vmatpush.bf16.msra.mxu0 %v3944
        %4220 = vmatpush.bf16.msra.mxu0 %v3943
        %4221 = vmatpush.bf16.msra.mxu0 %v3942
        %4222 = vmatpush.bf16.msra.mxu0 %v3941
        %4223 = vmatpush.bf16.msra.mxu0 %v3940
        %4224 = vmatpush.bf16.msra.mxu0 %v3939
        %4225 = vmatpush.bf16.msra.mxu0 %v3938
        %4226 = vmatpush.bf16.msra.mxu0 %v3937
        %4227 = vmatmul.bf16.gmra.mxu0 %v4175
        %v4228 = vpop.f32.mrf.mxu0
        %v4229 = vadd.f32 %v4216, %v4228
        %v4230 = vpop.f32.mrf.mxu0
        %4231 = vdwg.mxu0
        %4232 = vmatpush.bf16.msra.mxu0 0
        %4233 = vmatpush.bf16.msra.mxu0 0
        %4234 = vmatpush.bf16.msra.mxu0 0
        %4235 = vmatpush.bf16.msra.mxu0 0
        %4236 = vmatpush.bf16.msra.mxu0 %v3948
        %4237 = vmatpush.bf16.msra.mxu0 %v3947
        %4238 = vmatpush.bf16.msra.mxu0 %v3946
        %4239 = vmatpush.bf16.msra.mxu0 %v3945
        %4240 = vmatmul.bf16.gmra.mxu0 %v4178
        %v4241 = vpop.f32.mrf.mxu0
        %v4242 = vadd.f32 %v4229, %v4241
        %v4243 = vpop.f32.mrf.mxu0
        %4244 = vdwg.mxu0
        %v4245 = vmax.f32 %v4242, 0.0
        %s4246 = scalar_lea.vmem [#allocation11], 60
        %v4247 = vld [vmem:[%s4246] sm:$0xff]
        %v4248 = vld [vmem:[%s4246 + $0x8] sm:$0xff]
        %v4249 = vld [vmem:[%s4246 + $0x10] sm:$0xf]
        %4253 = vst [vmem:[#allocation1] ss:$2 sm:$0xff] %v4247
        %s4254 = scalar_lea.vmem [#allocation1], 16
        %4255 = vst [vmem:[%s4254] ss:$2 sm:$0xff] %v4248
        %s4256 = scalar_lea.vmem [#allocation1], 32
        %4257 = vst [vmem:[%s4256] ss:$2 sm:$0xff] %v4249
        %v4258 = vld.sshfl [vmem:[#allocation1] sm:$0xff pattern:$0x75316420]
        %v4259 = vld.sshfl [vmem:[#allocation1 + $0x8] sm:$0xff pattern:$0x75316420]
        %v4260 = vld.sshfl [vmem:[#allocation1 + $0x10] sm:$0xff pattern:$0x75316420]
        %v4261 = vld.sshfl [vmem:[#allocation1 + $0x18] sm:$0xff pattern:$0x75316420]
        %v4262 = vld.sshfl [vmem:[#allocation1 + $0x20] sm:$0xff pattern:$0x75316420]
        %v4268 = vpack.c.bf16 %v4258, %v4258
        %v4269 = vpack.c.bf16 %v4259, %v4259
        %v4270 = vpack.c.bf16 %v4260, %v4260
        %v4271 = vpack.c.bf16 %v4261, %v4261
        %v4272 = vpack.c.bf16 %v4262, %v4262
        %v4274 = vsel %vm3434, %v4272, 0
        %4276 = vmatpush.bf16.msra.mxu0 %v3920
        %4277 = vmatpush.bf16.msra.mxu0 %v3919
        %4278 = vmatpush.bf16.msra.mxu0 %v3918
        %4279 = vmatpush.bf16.msra.mxu0 %v3917
        %4280 = vmatpush.bf16.msra.mxu0 %v3916
        %4281 = vmatpush.bf16.msra.mxu0 %v3915
        %4282 = vmatpush.bf16.msra.mxu0 %v3914
        %4283 = vmatpush.bf16.msra.mxu0 %v3913
        %4284 = vmatmul.bf16.gmra.mxu0 %v4268
        %v4285 = vpop.f32.mrf.mxu0
        %v4286 = vadd.f32 %v3767, %v4285
        %v4287 = vpop.f32.mrf.mxu0
        %4288 = vdwg.mxu0
        %4289 = vmatpush.bf16.msra.mxu0 %v3928
        %4290 = vmatpush.bf16.msra.mxu0 %v3927
        %4291 = vmatpush.bf16.msra.mxu0 %v3926
        %4292 = vmatpush.bf16.msra.mxu0 %v3925
        %4293 = vmatpush.bf16.msra.mxu0 %v3924
        %4294 = vmatpush.bf16.msra.mxu0 %v3923
        %4295 = vmatpush.bf16.msra.mxu0 %v3922
        %4296 = vmatpush.bf16.msra.mxu0 %v3921
        %4297 = vmatmul.bf16.gmra.mxu0 %v4269
        %v4298 = vpop.f32.mrf.mxu0
        %v4299 = vadd.f32 %v4286, %v4298
        %v4300 = vpop.f32.mrf.mxu0
        %4301 = vdwg.mxu0
        %4302 = vmatpush.bf16.msra.mxu0 %v3936
        %4303 = vmatpush.bf16.msra.mxu0 %v3935
        %4304 = vmatpush.bf16.msra.mxu0 %v3934
        %4305 = vmatpush.bf16.msra.mxu0 %v3933
        %4306 = vmatpush.bf16.msra.mxu0 %v3932
        %4307 = vmatpush.bf16.msra.mxu0 %v3931
        %4308 = vmatpush.bf16.msra.mxu0 %v3930
        %4309 = vmatpush.bf16.msra.mxu0 %v3929
        %4310 = vmatmul.bf16.gmra.mxu0 %v4270
        %v4311 = vpop.f32.mrf.mxu0
        %v4312 = vadd.f32 %v4299, %v4311
        %v4313 = vpop.f32.mrf.mxu0
        %4314 = vdwg.mxu0
        %4315 = vmatpush.bf16.msra.mxu0 %v3944
        %4316 = vmatpush.bf16.msra.mxu0 %v3943
        %4317 = vmatpush.bf16.msra.mxu0 %v3942
        %4318 = vmatpush.bf16.msra.mxu0 %v3941
        %4319 = vmatpush.bf16.msra.mxu0 %v3940
        %4320 = vmatpush.bf16.msra.mxu0 %v3939
        %4321 = vmatpush.bf16.msra.mxu0 %v3938
        %4322 = vmatpush.bf16.msra.mxu0 %v3937
        %4323 = vmatmul.bf16.gmra.mxu0 %v4271
        %v4324 = vpop.f32.mrf.mxu0
        %v4325 = vadd.f32 %v4312, %v4324
        %v4326 = vpop.f32.mrf.mxu0
        %4327 = vdwg.mxu0
        %4328 = vmatpush.bf16.msra.mxu0 0
        %4329 = vmatpush.bf16.msra.mxu0 0
        %4330 = vmatpush.bf16.msra.mxu0 0
        %4331 = vmatpush.bf16.msra.mxu0 0
        %4332 = vmatpush.bf16.msra.mxu0 %v3948
        %4333 = vmatpush.bf16.msra.mxu0 %v3947
        %4334 = vmatpush.bf16.msra.mxu0 %v3946
        %4335 = vmatpush.bf16.msra.mxu0 %v3945
        %4336 = vmatmul.bf16.gmra.mxu0 %v4274
        %v4337 = vpop.f32.mrf.mxu0
        %v4338 = vadd.f32 %v4325, %v4337
        %v4339 = vpop.f32.mrf.mxu0
        %4340 = vdwg.mxu0
        %v4341 = vmax.f32 %v4338, 0.0
        %v4342 = vmax.f32 %v4053, %v4149
        %v4344 = vrot.slane %v4342, 1
        %v4346 = vmax.f32 %v4342, %v4344
        %v4347 = vmax.f32 %v4245, %v4341
        %v4349 = vrot.slane %v4347, 1
        %v4351 = vmax.f32 %v4347, %v4349
        %v4352 = vld [vmem:[%s8] sm:$0x1]
        %v4353 = vpack.c.bf16 %v4346, %v4346
        %v4354 = vld [vmem:[%s7] sm:$0xf]
        %v4355 = vld [vmem:[%s7 + $0x4] sm:$0xf]
        %v4356 = vld [vmem:[%s7 + $0x8] sm:$0xf]
        %v4357 = vld [vmem:[%s7 + $0xc] sm:$0xf]
        %v4358 = vld [vmem:[%s7 + $0x10] sm:$0xf]
        %v4359 = vld [vmem:[%s7 + $0x14] sm:$0xf]
        %v4360 = vld [vmem:[%s7 + $0x18] sm:$0xf]
        %v4361 = vld [vmem:[%s7 + $0x1c] sm:$0xf]
        %v4362 = vld [vmem:[%s7 + $0x20] sm:$0xf]
        %v4363 = vld [vmem:[%s7 + $0x24] sm:$0xf]
        %v4364 = vld [vmem:[%s7 + $0x28] sm:$0xf]
        %v4365 = vld [vmem:[%s7 + $0x2c] sm:$0xf]
        %v4366 = vld [vmem:[%s7 + $0x30] sm:$0xf]
        %v4367 = vld [vmem:[%s7 + $0x34] sm:$0xf]
        %v4368 = vld [vmem:[%s7 + $0x38] sm:$0xf]
        %v4369 = vld [vmem:[%s7 + $0x3c] sm:$0xf]
        %v4386 = vunpack.c.l.b16 %v4354
        %v4387 = vunpack.c.l.b16 %v4355
        %v4388 = vunpack.c.l.b16 %v4356
        %v4389 = vunpack.c.l.b16 %v4357
        %v4390 = vunpack.c.l.b16 %v4358
        %v4391 = vunpack.c.l.b16 %v4359
        %v4392 = vunpack.c.l.b16 %v4360
        %v4393 = vunpack.c.l.b16 %v4361
        %v4394 = vunpack.c.l.b16 %v4362
        %v4395 = vunpack.c.l.b16 %v4363
        %v4396 = vunpack.c.l.b16 %v4364
        %v4397 = vunpack.c.l.b16 %v4365
        %v4398 = vunpack.c.l.b16 %v4366
        %v4399 = vunpack.c.l.b16 %v4367
        %v4400 = vunpack.c.l.b16 %v4368
        %v4401 = vunpack.c.l.b16 %v4369
        %v4402 = vpack.c.b16 %v4387, %v4386
        %v4403 = vpack.c.b16 %v4389, %v4388
        %v4404 = vpack.c.b16 %v4391, %v4390
        %v4405 = vpack.c.b16 %v4393, %v4392
        %v4406 = vpack.c.b16 %v4395, %v4394
        %v4407 = vpack.c.b16 %v4397, %v4396
        %v4408 = vpack.c.b16 %v4399, %v4398
        %v4409 = vpack.c.b16 %v4401, %v4400
        %4418 = vmatpush.bf16.msra.mxu0 %v4409
        %4419 = vmatpush.bf16.msra.mxu0 %v4408
        %4420 = vmatpush.bf16.msra.mxu0 %v4407
        %4421 = vmatpush.bf16.msra.mxu0 %v4406
        %4422 = vmatpush.bf16.msra.mxu0 %v4405
        %4423 = vmatpush.bf16.msra.mxu0 %v4404
        %4424 = vmatpush.bf16.msra.mxu0 %v4403
        %4425 = vmatpush.bf16.msra.mxu0 %v4402
        %4426 = vmatmul.bf16.gmra.mxu0 %v4353
        %v4427 = vpop.f32.mrf.mxu0
        %v4428 = vadd.f32 0.0, %v4427
        %v4429 = vpop.f32.mrf.mxu0
        %4430 = vdwg.mxu0
        %v4431 = vadd.f32 %v4352, %v4428
        %s4432 = scalar_lea.vmem %s7, 64
        %v4433 = vld [vmem:[%s4432] sm:$0xf]
        %v4434 = vld [vmem:[%s4432 + $0x4] sm:$0xf]
        %v4435 = vld [vmem:[%s4432 + $0x8] sm:$0xf]
        %v4436 = vld [vmem:[%s4432 + $0xc] sm:$0xf]
        %v4437 = vld [vmem:[%s4432 + $0x10] sm:$0xf]
        %v4438 = vld [vmem:[%s4432 + $0x14] sm:$0xf]
        %v4439 = vld [vmem:[%s4432 + $0x18] sm:$0xf]
        %v4440 = vld [vmem:[%s4432 + $0x1c] sm:$0xf]
        %v4441 = vld [vmem:[%s4432 + $0x20] sm:$0xf]
        %v4442 = vld [vmem:[%s4432 + $0x24] sm:$0xf]
        %v4443 = vld [vmem:[%s4432 + $0x28] sm:$0xf]
        %v4444 = vld [vmem:[%s4432 + $0x2c] sm:$0xf]
        %v4445 = vld [vmem:[%s4432 + $0x30] sm:$0xf]
        %v4446 = vld [vmem:[%s4432 + $0x34] sm:$0xf]
        %v4447 = vld [vmem:[%s4432 + $0x38] sm:$0xf]
        %v4448 = vld [vmem:[%s4432 + $0x3c] sm:$0xf]
        %v4450 = vrot.slane %v4353, 1
        %v4468 = vunpack.c.l.b16 %v4433
        %v4469 = vunpack.c.l.b16 %v4434
        %v4470 = vunpack.c.l.b16 %v4435
        %v4471 = vunpack.c.l.b16 %v4436
        %v4472 = vunpack.c.l.b16 %v4437
        %v4473 = vunpack.c.l.b16 %v4438
        %v4474 = vunpack.c.l.b16 %v4439
        %v4475 = vunpack.c.l.b16 %v4440
        %v4476 = vunpack.c.l.b16 %v4441
        %v4477 = vunpack.c.l.b16 %v4442
        %v4478 = vunpack.c.l.b16 %v4443
        %v4479 = vunpack.c.l.b16 %v4444
        %v4480 = vunpack.c.l.b16 %v4445
        %v4481 = vunpack.c.l.b16 %v4446
        %v4482 = vunpack.c.l.b16 %v4447
        %v4483 = vunpack.c.l.b16 %v4448
        %v4484 = vpack.c.b16 %v4469, %v4468
        %v4485 = vpack.c.b16 %v4471, %v4470
        %v4486 = vpack.c.b16 %v4473, %v4472
        %v4487 = vpack.c.b16 %v4475, %v4474
        %v4488 = vpack.c.b16 %v4477, %v4476
        %v4489 = vpack.c.b16 %v4479, %v4478
        %v4490 = vpack.c.b16 %v4481, %v4480
        %v4491 = vpack.c.b16 %v4483, %v4482
        %4500 = vmatpush.bf16.msra.mxu0 %v4491
        %4501 = vmatpush.bf16.msra.mxu0 %v4490
        %4502 = vmatpush.bf16.msra.mxu0 %v4489
        %4503 = vmatpush.bf16.msra.mxu0 %v4488
        %4504 = vmatpush.bf16.msra.mxu0 %v4487
        %4505 = vmatpush.bf16.msra.mxu0 %v4486
        %4506 = vmatpush.bf16.msra.mxu0 %v4485
        %4507 = vmatpush.bf16.msra.mxu0 %v4484
        %4508 = vmatmul.bf16.gmra.mxu0 %v4450
        %v4509 = vpop.f32.mrf.mxu0
        %v4510 = vadd.f32 0.0, %v4509
        %v4511 = vpop.f32.mrf.mxu0
        %4512 = vdwg.mxu0
        %v4513 = vadd.f32 %v4431, %v4510
        %v4514 = vpack.c.bf16 %v4351, %v4351
        %s4515 = scalar_lea.vmem %s7, 128
        %v4516 = vld [vmem:[%s4515] sm:$0xf]
        %v4517 = vld [vmem:[%s4515 + $0x4] sm:$0xf]
        %v4518 = vld [vmem:[%s4515 + $0x8] sm:$0xf]
        %v4519 = vld [vmem:[%s4515 + $0xc] sm:$0xf]
        %v4520 = vld [vmem:[%s4515 + $0x10] sm:$0xf]
        %v4521 = vld [vmem:[%s4515 + $0x14] sm:$0xf]
        %v4522 = vld [vmem:[%s4515 + $0x18] sm:$0xf]
        %v4523 = vld [vmem:[%s4515 + $0x1c] sm:$0xf]
        %v4524 = vld [vmem:[%s4515 + $0x20] sm:$0xf]
        %v4525 = vld [vmem:[%s4515 + $0x24] sm:$0xf]
        %v4526 = vld [vmem:[%s4515 + $0x28] sm:$0xf]
        %v4527 = vld [vmem:[%s4515 + $0x2c] sm:$0xf]
        %v4528 = vld [vmem:[%s4515 + $0x30] sm:$0xf]
        %v4529 = vld [vmem:[%s4515 + $0x34] sm:$0xf]
        %v4530 = vld [vmem:[%s4515 + $0x38] sm:$0xf]
        %v4531 = vld [vmem:[%s4515 + $0x3c] sm:$0xf]
        %v4548 = vunpack.c.l.b16 %v4516
        %v4549 = vunpack.c.l.b16 %v4517
        %v4550 = vunpack.c.l.b16 %v4518
        %v4551 = vunpack.c.l.b16 %v4519
        %v4552 = vunpack.c.l.b16 %v4520
        %v4553 = vunpack.c.l.b16 %v4521
        %v4554 = vunpack.c.l.b16 %v4522
        %v4555 = vunpack.c.l.b16 %v4523
        %v4556 = vunpack.c.l.b16 %v4524
        %v4557 = vunpack.c.l.b16 %v4525
        %v4558 = vunpack.c.l.b16 %v4526
        %v4559 = vunpack.c.l.b16 %v4527
        %v4560 = vunpack.c.l.b16 %v4528
        %v4561 = vunpack.c.l.b16 %v4529
        %v4562 = vunpack.c.l.b16 %v4530
        %v4563 = vunpack.c.l.b16 %v4531
        %v4564 = vpack.c.b16 %v4549, %v4548
        %v4565 = vpack.c.b16 %v4551, %v4550
        %v4566 = vpack.c.b16 %v4553, %v4552
        %v4567 = vpack.c.b16 %v4555, %v4554
        %v4568 = vpack.c.b16 %v4557, %v4556
        %v4569 = vpack.c.b16 %v4559, %v4558
        %v4570 = vpack.c.b16 %v4561, %v4560
        %v4571 = vpack.c.b16 %v4563, %v4562
        %4580 = vmatpush.bf16.msra.mxu0 %v4571
        %4581 = vmatpush.bf16.msra.mxu0 %v4570
        %4582 = vmatpush.bf16.msra.mxu0 %v4569
        %4583 = vmatpush.bf16.msra.mxu0 %v4568
        %4584 = vmatpush.bf16.msra.mxu0 %v4567
        %4585 = vmatpush.bf16.msra.mxu0 %v4566
        %4586 = vmatpush.bf16.msra.mxu0 %v4565
        %4587 = vmatpush.bf16.msra.mxu0 %v4564
        %4588 = vmatmul.bf16.gmra.mxu0 %v4514
        %v4589 = vpop.f32.mrf.mxu0
        %v4590 = vadd.f32 0.0, %v4589
        %v4591 = vpop.f32.mrf.mxu0
        %4592 = vdwg.mxu0
        %v4593 = vadd.f32 %v4513, %v4590
        %s4594 = scalar_lea.vmem %s7, 192
        %v4595 = vld [vmem:[%s4594] sm:$0xf]
        %v4596 = vld [vmem:[%s4594 + $0x4] sm:$0xf]
        %v4597 = vld [vmem:[%s4594 + $0x8] sm:$0xf]
        %v4598 = vld [vmem:[%s4594 + $0xc] sm:$0xf]
        %v4599 = vld [vmem:[%s4594 + $0x10] sm:$0xf]
        %v4600 = vld [vmem:[%s4594 + $0x14] sm:$0xf]
        %v4601 = vld [vmem:[%s4594 + $0x18] sm:$0xf]
        %v4602 = vld [vmem:[%s4594 + $0x1c] sm:$0xf]
        %v4603 = vld [vmem:[%s4594 + $0x20] sm:$0xf]
        %v4604 = vld [vmem:[%s4594 + $0x24] sm:$0xf]
        %v4605 = vld [vmem:[%s4594 + $0x28] sm:$0xf]
        %v4606 = vld [vmem:[%s4594 + $0x2c] sm:$0xf]
        %v4607 = vld [vmem:[%s4594 + $0x30] sm:$0xf]
        %v4608 = vld [vmem:[%s4594 + $0x34] sm:$0xf]
        %v4609 = vld [vmem:[%s4594 + $0x38] sm:$0xf]
        %v4610 = vld [vmem:[%s4594 + $0x3c] sm:$0xf]
        %v4612 = vrot.slane %v4514, 1
        %v4630 = vunpack.c.l.b16 %v4595
        %v4631 = vunpack.c.l.b16 %v4596
        %v4632 = vunpack.c.l.b16 %v4597
        %v4633 = vunpack.c.l.b16 %v4598
        %v4634 = vunpack.c.l.b16 %v4599
        %v4635 = vunpack.c.l.b16 %v4600
        %v4636 = vunpack.c.l.b16 %v4601
        %v4637 = vunpack.c.l.b16 %v4602
        %v4638 = vunpack.c.l.b16 %v4603
        %v4639 = vunpack.c.l.b16 %v4604
        %v4640 = vunpack.c.l.b16 %v4605
        %v4641 = vunpack.c.l.b16 %v4606
        %v4642 = vunpack.c.l.b16 %v4607
        %v4643 = vunpack.c.l.b16 %v4608
        %v4644 = vunpack.c.l.b16 %v4609
        %v4645 = vunpack.c.l.b16 %v4610
        %v4646 = vpack.c.b16 %v4631, %v4630
        %v4647 = vpack.c.b16 %v4633, %v4632
        %v4648 = vpack.c.b16 %v4635, %v4634
        %v4649 = vpack.c.b16 %v4637, %v4636
        %v4650 = vpack.c.b16 %v4639, %v4638
        %v4651 = vpack.c.b16 %v4641, %v4640
        %v4652 = vpack.c.b16 %v4643, %v4642
        %v4653 = vpack.c.b16 %v4645, %v4644
        %4662 = vmatpush.bf16.msra.mxu0 %v4653
        %4663 = vmatpush.bf16.msra.mxu0 %v4652
        %4664 = vmatpush.bf16.msra.mxu0 %v4651
        %4665 = vmatpush.bf16.msra.mxu0 %v4650
        %4666 = vmatpush.bf16.msra.mxu0 %v4649
        %4667 = vmatpush.bf16.msra.mxu0 %v4648
        %4668 = vmatpush.bf16.msra.mxu0 %v4647
        %4669 = vmatpush.bf16.msra.mxu0 %v4646
        %4670 = vmatmul.bf16.gmra.mxu0 %v4612
        %v4671 = vpop.f32.mrf.mxu0
        %v4672 = vadd.f32 0.0, %v4671
        %v4673 = vpop.f32.mrf.mxu0
        %4674 = vdwg.mxu0
        %v4675 = vadd.f32 %v4593, %v4672
        %v4676 = vmax.f32 %v4675, 0.0
        %v4677 = vpack.c.bf16 %v4676, %v4676
        %v4678 = vld [vmem:[%s9] sm:$0xf]
        %v4679 = vld [vmem:[%s9 + $0x4] sm:$0xf]
        %v4680 = vld [vmem:[%s9 + $0x8] sm:$0xf]
        %v4681 = vld [vmem:[%s9 + $0xc] sm:$0xf]
        %v4682 = vld [vmem:[%s9 + $0x10] sm:$0xf]
        %v4683 = vld [vmem:[%s9 + $0x14] sm:$0xf]
        %v4684 = vld [vmem:[%s9 + $0x18] sm:$0xf]
        %v4685 = vld [vmem:[%s9 + $0x1c] sm:$0xf]
        %v4686 = vld [vmem:[%s9 + $0x20] sm:$0xf]
        %v4687 = vld [vmem:[%s9 + $0x24] sm:$0xf]
        %v4688 = vld [vmem:[%s9 + $0x28] sm:$0xf]
        %v4689 = vld [vmem:[%s9 + $0x2c] sm:$0xf]
        %v4690 = vld [vmem:[%s9 + $0x30] sm:$0xf]
        %v4691 = vld [vmem:[%s9 + $0x34] sm:$0xf]
        %v4692 = vld [vmem:[%s9 + $0x38] sm:$0xf]
        %v4693 = vld [vmem:[%s9 + $0x3c] sm:$0xf]
        %v4694 = vld [vmem:[%s10] sm:$0x1]
        %v4711 = vunpack.c.l.b16 %v4678
        %v4712 = vunpack.c.l.b16 %v4679
        %v4713 = vunpack.c.l.b16 %v4680
        %v4714 = vunpack.c.l.b16 %v4681
        %v4715 = vunpack.c.l.b16 %v4682
        %v4716 = vunpack.c.l.b16 %v4683
        %v4717 = vunpack.c.l.b16 %v4684
        %v4718 = vunpack.c.l.b16 %v4685
        %v4719 = vunpack.c.l.b16 %v4686
        %v4720 = vunpack.c.l.b16 %v4687
        %v4721 = vunpack.c.l.b16 %v4688
        %v4722 = vunpack.c.l.b16 %v4689
        %v4723 = vunpack.c.l.b16 %v4690
        %v4724 = vunpack.c.l.b16 %v4691
        %v4725 = vunpack.c.l.b16 %v4692
        %v4726 = vunpack.c.l.b16 %v4693
        %v4727 = vpack.c.b16 %v4712, %v4711
        %v4728 = vpack.c.b16 %v4714, %v4713
        %v4729 = vpack.c.b16 %v4716, %v4715
        %v4730 = vpack.c.b16 %v4718, %v4717
        %v4731 = vpack.c.b16 %v4720, %v4719
        %v4732 = vpack.c.b16 %v4722, %v4721
        %v4733 = vpack.c.b16 %v4724, %v4723
        %v4734 = vpack.c.b16 %v4726, %v4725
        %4743 = vmatpush.bf16.msra.mxu0 %v4734
        %4744 = vmatpush.bf16.msra.mxu0 %v4733
        %4745 = vmatpush.bf16.msra.mxu0 %v4732
        %4746 = vmatpush.bf16.msra.mxu0 %v4731
        %4747 = vmatpush.bf16.msra.mxu0 %v4730
        %4748 = vmatpush.bf16.msra.mxu0 %v4729
        %4749 = vmatpush.bf16.msra.mxu0 %v4728
        %4750 = vmatpush.bf16.msra.mxu0 %v4727
        %4751 = vmatmul.bf16.gmra.mxu0 %v4677
        %v4752 = vpop.f32.mrf.mxu0
        %v4753 = vadd.f32 %v4694, %v4752
        %v4754 = vpop.f32.mrf.mxu0
        %4755 = vdwg.mxu0
        %v4756 = vmax.f32 %v4753, 0.0
        %v4757 = vpack.c.bf16 %v4756, %v4756
        %v4758 = vld [vmem:[%s11] sm:$0xf]
        %v4759 = vld [vmem:[%s11 + $0x4] sm:$0xf]
        %v4760 = vld [vmem:[%s11 + $0x8] sm:$0xf]
        %v4761 = vld [vmem:[%s11 + $0xc] sm:$0xf]
        %v4762 = vld [vmem:[%s11 + $0x10] sm:$0xf]
        %v4763 = vld [vmem:[%s11 + $0x14] sm:$0xf]
        %v4764 = vld [vmem:[%s11 + $0x18] sm:$0xf]
        %v4765 = vld [vmem:[%s11 + $0x1c] sm:$0xf]
        %v4766 = vld [vmem:[%s11 + $0x20] sm:$0xf]
        %v4767 = vld [vmem:[%s11 + $0x24] sm:$0xf]
        %v4768 = vld [vmem:[%s11 + $0x28] sm:$0xf]
        %v4769 = vld [vmem:[%s11 + $0x2c] sm:$0xf]
        %v4770 = vld [vmem:[%s11 + $0x30] sm:$0xf]
        %v4771 = vld [vmem:[%s11 + $0x34] sm:$0xf]
        %v4772 = vld [vmem:[%s11 + $0x38] sm:$0xf]
        %v4773 = vld [vmem:[%s11 + $0x3c] sm:$0xf]
        %v4774 = vld [vmem:[%s12] sm:$0x1]
        %v4791 = vunpack.c.l.b16 %v4758
        %v4792 = vunpack.c.l.b16 %v4759
        %v4793 = vunpack.c.l.b16 %v4760
        %v4794 = vunpack.c.l.b16 %v4761
        %v4795 = vunpack.c.l.b16 %v4762
        %v4796 = vunpack.c.l.b16 %v4763
        %v4797 = vunpack.c.l.b16 %v4764
        %v4798 = vunpack.c.l.b16 %v4765
        %v4799 = vunpack.c.l.b16 %v4766
        %v4800 = vunpack.c.l.b16 %v4767
        %v4801 = vunpack.c.l.b16 %v4768
        %v4802 = vunpack.c.l.b16 %v4769
        %v4803 = vunpack.c.l.b16 %v4770
        %v4804 = vunpack.c.l.b16 %v4771
        %v4805 = vunpack.c.l.b16 %v4772
        %v4806 = vunpack.c.l.b16 %v4773
        %v4807 = vpack.c.b16 %v4792, %v4791
        %v4808 = vpack.c.b16 %v4794, %v4793
        %v4809 = vpack.c.b16 %v4796, %v4795
        %v4810 = vpack.c.b16 %v4798, %v4797
        %v4811 = vpack.c.b16 %v4800, %v4799
        %v4812 = vpack.c.b16 %v4802, %v4801
        %v4813 = vpack.c.b16 %v4804, %v4803
        %v4814 = vpack.c.b16 %v4806, %v4805
        %4823 = vmatpush.bf16.msra.mxu0 %v4814
        %4824 = vmatpush.bf16.msra.mxu0 %v4813
        %4825 = vmatpush.bf16.msra.mxu0 %v4812
        %4826 = vmatpush.bf16.msra.mxu0 %v4811
        %4827 = vmatpush.bf16.msra.mxu0 %v4810
        %4828 = vmatpush.bf16.msra.mxu0 %v4809
        %4829 = vmatpush.bf16.msra.mxu0 %v4808
        %4830 = vmatpush.bf16.msra.mxu0 %v4807
        %4831 = vmatmul.bf16.gmra.mxu0 %v4757
        %v4832 = vpop.f32.mrf.mxu0
        %v4833 = vadd.f32 %v4774, %v4832
        %v4834 = vpop.f32.mrf.mxu0
        %4835 = vdwg.mxu0
        %v4836 = vlaneseq
        %v4837 = vand.u32 %v4836, 127
        %vm4838 = vcmp.lt.s32.totalorder %v4837, 4
        %v4839 = vsel %vm4838, %v4833, -1e+30
        %vm4840 = vcmask 1040384
        %v4841 = vsel %vm4840, %v4839, -inf
        %4842 = vmax.xlane.f32.xlu0 %v4841
        %v4843 = vpop.xlane.xlu0 %4842
        %v4844 = vsub.f32 %v4839, %v4843
        %v4845 = vmul.f32 %v4844, 1.442695
        %v4846 = vpow.pop %v4845
        %v4847 = vsel %vm4840, %v4846, 0.0
        %4848 = vadd.xlane.f32.xlu0 %v4847
        %v4849 = vpop.xlane.xlu0 %4848
        %v4850 = vrcp.pop %v4849
        %v4851 = vmul.f32 %v4849, %v4850
        %v4852 = vsub.f32 2.0, %v4851
        %v4853 = vmul.f32 %v4850, %v4852
        %v4854 = vmul.f32 %v4846, %v4853
        %4855 = vst [vmem:[%s432] sm:$0x1] %v4854
        %s4856 = sand.u32 %s313, 1
        %s4857 = scalar_lea.sflag [#allocation13], %s4856
        %s4858 = sand.u32 %s313, 1
        %s4859 = scalar_lea.vmem [#allocation12], %s4858
        // Predicated region
        $region73: #{forward.1} parent=71 // pred_check
          %p4860 = pneg %p323
        $region74: #{forward.1} parent=71 // pred_check_branch
          %4862 = sbr.rel (%p4860) target = $region76
        $region75: #{forward.1} parent=71 // pred_region
          %4864 = vsyncadd %s4857, 0
          %s4865 = scalar_lea.hbm %s13, %s27
          %s4867 = sshll.u32 %s4859, 4
          %s4868 = int_to_ptr.vmem [resolvable:$true] %s4867
          %s4869 = sshll.u32 %s4865, 4
          %s4870 = int_to_ptr.hbm [resolvable:$true] %s4869
          %4872 = dma.vmem_to_hbm [thread:$0]  %s4868, 16, %s4870, %s4857
        $region76: #{forward.1} parent=71 // pred_fallthru
          _
      $region72: #{forward.1} parent=5 // pred_fallthru
        _
      %p4873 = scmp.le.s32.totalorder 2, %s22
      // Predicated region
      $region77: #{forward.1} parent=5 // pred_check
        %p4874 = pneg %p4873
      $region78: #{forward.1} parent=5 // pred_check_branch
        %4876 = sbr.rel (%p4874) target = $region80
      $region79: #{forward.1} parent=5 // pred_region
        %s4877 = ssub.s32 %s22, 2
        // Predicated region
        $region81: #{forward.1} parent=79 // pred_check
          %p4878 = pneg %p329
        $region82: #{forward.1} parent=79 // pred_check_branch
          %4880 = sbr.rel (%p4878) target = $region84
        $region83: #{forward.1} parent=79 // pred_region
          %s4881 = sand.u32 %s314, 1
          %s4882 = scalar_lea.sflag [#allocation13], %s4881
          %s4883 = sand.u32 %s314, 1
          %s4884 = scalar_lea.vmem [#allocation12], %s4883
          %4886 = dma.done %s4882, 16
        $region84: #{forward.1} parent=79 // pred_fallthru
          _
      $region80: #{forward.1} parent=5 // pred_fallthru
        _
    $region6: #{forward.1} parent=1 // loop_footer
      %s26 = sadd.s32 1, %s22
    $region7: #{forward.1} parent=1 // loop_footer_branch
      %21 = sbr.rel target = $region3
    $region8: #{forward.1} parent=1 // loop_exit
      _
    %4887 = vsyncpa [#allocation13], 1
    %s4888 = scalar_lea.sflag [#allocation13], 1
    %4889 = vsyncpa %s4888, 1

</llo_original>
